<compile_context>
chip_gen: v7x
topology: tpu7x:2x2x1
jax: 0.10.0
libtpu: 0.0.40
codegen_flags: <defaults>
</compile_context>

<pallas_src>
import functools

import jax
import jax.numpy as jnp
import numpy as np
from jax import lax
from jax.experimental import pallas as pl
from jax.experimental.pallas import tpu as pltpu


def _round_up(x, m):
    return (x + m - 1) // m * m


def _textrcnn_attn_kernel(
    tok_ref,                       # (nbt*S*BT,) int32, SMEM (scalar prefetch)
    emb_hbm,                       # (V, E) f32, HBM (pl.ANY) - row-gathered via DMA
    w_in_ref, b_in_ref,            # (E, 2*GP), (1, 2*GP)   fwd gates @ lanes [0:3H1],
                                   #                        bwd gates @ lanes [GP:GP+3H1]
    whh_f_ref, whh_b_ref,          # (H1, 3H1) each, gate cols [r|z|n]
    bhn_f_ref, bhn_b_ref,          # (1, H1) each
    wa_f_ref, wa_b_ref,            # (1, H1) each (attention weight, split fwd/bwd)
    w1_ref, b1_ref,                # (E+2H1, H2), (1, H2)
    w2_ref, b2_ref,                # (H2, Cp), (1, Cp)  (classes zero-padded to Cp)
    out_ref,                       # (BT, Cp) f32 output block (lane-dense)
    embed_vmem,                    # scratch (S*BT, E) f32
    gi_ref,                        # scratch (S*BT, 2*GP) f32
    h_ref,                         # scratch (2, S*BT, H1) f32
    gather_sem,                    # scratch DMA semaphores (NSEM,)
    *, S, BT, H1, GP, NSEM,
):
    f32 = jnp.float32
    SBT = S * BT
    E = embed_vmem.shape[1]
    base = pl.program_id(0) * SBT

    # ---- 1. HBM row-gather of the needed embedding rows (manual DMA, NSEM in flight) --
    def start_copy(i):
        row = tok_ref[base + i]
        pltpu.make_async_copy(
            emb_hbm.at[pl.ds(row, 1)],
            embed_vmem.at[pl.ds(i, 1)],
            gather_sem.at[i % NSEM],
        ).start()

    def wait_copy(i):
        row = tok_ref[base + i]
        pltpu.make_async_copy(
            emb_hbm.at[pl.ds(row, 1)],
            embed_vmem.at[pl.ds(i, 1)],
            gather_sem.at[i % NSEM],
        ).wait()

    def _prologue(i, c):
        start_copy(i)
        return c

    lax.fori_loop(0, NSEM, _prologue, 0)

    def _steady(i, c):
        wait_copy(i)

        @pl.when(i + NSEM < SBT)
        def _():
            start_copy(i + NSEM)

        return c

    lax.fori_loop(0, SBT, _steady, 0)

    # ---- 2. Hoisted input projections: all steps / directions / gates in ONE matmul ---
    gi_ref[...] = (
        jnp.dot(embed_vmem[...], w_in_ref[...], preferred_element_type=f32)
        + b_in_ref[...]
    )

    # ---- 3. Recurrences, fully unrolled; one fused hidden matmul per step & direction -
    whh_f = whh_f_ref[...]
    whh_b = whh_b_ref[...]
    bhn_f = bhn_f_ref[...]
    bhn_b = bhn_b_ref[...]

    def gru_step(h, g, whh, bhn):
        # PyTorch gate order (r, z, n); bih (+ bhh for r/z) already folded into g.
        gh = jnp.dot(h, whh, preferred_element_type=f32)            # (BT, 3H1)
        rz = jax.nn.sigmoid(g[:, : 2 * H1] + gh[:, : 2 * H1])
        r = rz[:, :H1]
        z = rz[:, H1:]
        n = jnp.tanh(g[:, 2 * H1:] + r * (gh[:, 2 * H1:] + bhn))
        return (1.0 - z) * n + z * h

    h = jnp.zeros((BT, H1), f32)
    for t in range(S):                                   # forward direction
        g = gi_ref[t * BT:(t + 1) * BT, 0:3 * H1]
        h = gru_step(h, g, whh_f, bhn_f)
        h_ref[0, t * BT:(t + 1) * BT, :] = h

    h = jnp.zeros((BT, H1), f32)
    for t in range(S - 1, -1, -1):                       # backward direction
        g = gi_ref[t * BT:(t + 1) * BT, GP:GP + 3 * H1]
        h = gru_step(h, g, whh_b, bhn_b)
        h_ref[1, t * BT:(t + 1) * BT, :] = h

    # ---- 4. Attention scores: VPU multiply + XLU lane-reduce (no 1-lane MXU output) ---
    hf_all = h_ref[0]                                               # (SBT, H1)
    hb_all = h_ref[1]
    score = (
        jnp.sum(jnp.tanh(hf_all) * wa_f_ref[...], axis=-1, keepdims=True)
        + jnp.sum(jnp.tanh(hb_all) * wa_b_ref[...], axis=-1, keepdims=True)
    )                                                               # (SBT, 1)
    score = score.reshape(S, BT, 1)
    s_max = jnp.max(score, axis=0, keepdims=True)
    e_s = jnp.exp(score - s_max)
    alpha = e_s / jnp.sum(e_s, axis=0, keepdims=True)               # softmax over seq

    # ---- 5. relu + max-pool over the sequence axis ----
    emb3 = embed_vmem[...].reshape(S, BT, E)
    pooled_e = jnp.max(jnp.maximum(emb3, 0.0), axis=0)              # (BT, E)
    pooled_hf = jnp.max(jnp.maximum(hf_all.reshape(S, BT, H1) * alpha, 0.0), axis=0)
    pooled_hb = jnp.max(jnp.maximum(hb_all.reshape(S, BT, H1) * alpha, 0.0), axis=0)

    # ---- 6. fc1 (single fused dot over concatenated features) + fc2 ----
    feats = jnp.concatenate([pooled_e, pooled_hf, pooled_hb], axis=-1)   # (BT, E+2H1)
    fc1 = jnp.dot(feats, w1_ref[...], preferred_element_type=f32) + b1_ref[...]
    logits = jnp.dot(fc1, w2_ref[...], preferred_element_type=f32) + b2_ref[...]
    out_ref[...] = logits.astype(out_ref.dtype)                     # (BT, Cp) lane-dense


def pack_params(params, *, lane_pad=128):
    """One-time repack of PyTorch-layout weights into kernel-friendly layout."""
    f32 = jnp.float32
    emb = jnp.asarray(params["embedding"], f32)                     # stays in HBM
    V, E = emb.shape
    H1 = params["whh_f"].shape[1]
    H2 = params["b1"].shape[0]
    ncls = params["b2"].shape[0]

    Cp = _round_up(ncls, lane_pad)
    GP = _round_up(3 * H1, lane_pad)        # each direction's gates get own lane tile(s)

    # Input projections, gates [r|z|n] per direction, directions tile-aligned.
    wih_f_t = jnp.asarray(params["wih_f"], f32).T                   # (E, 3H1)
    wih_b_t = jnp.asarray(params["wih_b"], f32).T
    w_in = jnp.zeros((E, 2 * GP), f32)
    w_in = w_in.at[:, 0:3 * H1].set(wih_f_t).at[:, GP:GP + 3 * H1].set(wih_b_t)

    def in_bias(bih, bhh):                  # fold bhh into r/z; n keeps bih only
        bih = jnp.asarray(bih, f32)
        bhh = jnp.asarray(bhh, f32)
        return jnp.concatenate([bih[:2 * H1] + bhh[:2 * H1], bih[2 * H1:]], axis=0)

    b_in = jnp.zeros((1, 2 * GP), f32)
    b_in = b_in.at[0, 0:3 * H1].set(in_bias(params["bih_f"], params["bhh_f"]))
    b_in = b_in.at[0, GP:GP + 3 * H1].set(in_bias(params["bih_b"], params["bhh_b"]))

    packed = {
        "emb": emb,
        "w_in": w_in,
        "b_in": b_in,
        "whh_f": jnp.asarray(params["whh_f"], f32).T,               # (H1, 3H1)
        "whh_b": jnp.asarray(params["whh_b"], f32).T,
        "bhn_f": jnp.asarray(params["bhh_f"], f32)[2 * H1:].reshape(1, H1),
        "bhn_b": jnp.asarray(params["bhh_b"], f32)[2 * H1:].reshape(1, H1),
        "wa_f": jnp.asarray(params["w_attn"], f32)[:H1].reshape(1, H1),
        "wa_b": jnp.asarray(params["w_attn"], f32)[H1:].reshape(1, H1),
        "w1": jnp.asarray(params["w1"], f32).T,                     # (E+2H1, H2)
        "b1": jnp.asarray(params["b1"], f32).reshape(1, H2),
        "w2": jnp.zeros((H2, Cp), f32).at[:, :ncls].set(jnp.asarray(params["w2"], f32).T),
        "b2": jnp.zeros((1, Cp), f32).at[0, :ncls].set(jnp.asarray(params["b2"], f32)),
    }
    return packed


@functools.partial(jax.jit, static_argnames=("n_classes",))
def textrcnn_attn_forward(tokens, packed, n_classes=17):
    """tokens: (B, S) int32 -> logits (B, n_classes)."""
    B, S = tokens.shape
    V, E = packed["emb"].shape
    H1 = packed["whh_f"].shape[0]
    H2 = packed["b1"].shape[1]
    Cp = packed["b2"].shape[1]
    GP = packed["w_in"].shape[1] // 2

    # Batch tiling: full sublane tiles, up to 128 rows per tile to fill MXU rows.
    BT = min(128, _round_up(B, 8))
    Bp = _round_up(_round_up(B, 8), BT)
    nbt = Bp // BT
    SBT = S * BT
    NSEM = min(8, SBT)

    # Tokens: pad batch (pad rows are discarded), clip to valid rows (DMA safety),
    # arrange per batch-tile in time-major order: idx = g*S*BT + t*BT + b_local.
    tok_p = jnp.pad(tokens.astype(jnp.int32), ((0, Bp - B), (0, 0)), constant_values=0)
    tok_p = jnp.clip(tok_p, 0, V - 1)
    tok_arranged = jnp.transpose(tok_p.reshape(nbt, BT, S), (0, 2, 1)).reshape(-1)

    kernel = functools.partial(_textrcnn_attn_kernel,
                               S=S, BT=BT, H1=H1, GP=GP, NSEM=NSEM)

    def resident(arr):   # whole-array VMEM block, constant index_map -> stays resident
        return pl.BlockSpec(arr.shape, lambda g, tok, _nd=arr.ndim: (0,) * _nd)

    vmem_inputs = (
        packed["w_in"], packed["b_in"],
        packed["whh_f"], packed["whh_b"],
        packed["bhn_f"], packed["bhn_b"],
        packed["wa_f"], packed["wa_b"],
        packed["w1"], packed["b1"], packed["w2"], packed["b2"],
    )

    in_specs = [pl.BlockSpec(memory_space=pl.ANY)]          # embedding table in HBM
    in_specs += [resident(a) for a in vmem_inputs]

    grid_spec = pltpu.PrefetchScalarGridSpec(
        num_scalar_prefetch=1,
        grid=(nbt,),
        in_specs=in_specs,
        out_specs=pl.BlockSpec((BT, Cp), lambda g, tok: (g, 0)),
        scratch_shapes=[
            pltpu.VMEM((SBT, E), jnp.float32),              # gathered embeddings
            pltpu.VMEM((SBT, 2 * GP), jnp.float32),         # input projections gi
            pltpu.VMEM((2, SBT, H1), jnp.float32),          # fwd / bwd hidden states
            pltpu.SemaphoreType.DMA((NSEM,)),               # gather DMA semaphores
        ],
    )

    # VMEM budget sized from the actual buffers (portable to v7x's smaller VMEM).
    weight_bytes = sum(int(a.size) * a.dtype.itemsize for a in vmem_inputs)
    scratch_bytes = 4 * (SBT * E + SBT * 2 * GP + 2 * SBT * H1)
    out_bytes = BT * Cp * 4
    vmem_limit = int(2 * (weight_bytes + out_bytes) + scratch_bytes + (8 << 20))
    vmem_limit = min(vmem_limit, 100 << 20)

    flops = nbt * (
        2 * SBT * E * (2 * GP)                      # gi matmul
        + S * 2 * (2 * BT * H1 * 3 * H1)            # recurrences
        + 2 * BT * (E + 2 * H1) * H2                # fc1
        + 2 * BT * H2 * Cp                          # fc2
    )
    transcendentals = nbt * (S * 2 * BT * 3 * H1 + 2 * SBT * H1 + SBT)
    bytes_accessed = (int(tok_arranged.size) * 4 + nbt * SBT * E * 4
                      + weight_bytes + Bp * Cp * 4)

    out = pl.pallas_call(
        kernel,
        out_shape=jax.ShapeDtypeStruct((Bp, Cp), jnp.float32),
        grid_spec=grid_spec,
        compiler_params=pltpu.CompilerParams(
            dimension_semantics=("parallel",),
            vmem_limit_bytes=vmem_limit,
        ),
        cost_estimate=pl.CostEstimate(
            flops=int(flops),
            transcendentals=int(transcendentals),
            bytes_accessed=int(bytes_accessed),
        ),
    )(tok_arranged, packed["emb"], *vmem_inputs)
    return out[:B, :n_classes]


def reference_forward(tokens, params):
    """Pure-JAX mirror of the PyTorch forward (dropout = identity / eval mode)."""
    emb = params["embedding"][tokens]                                # (B, S, E)
    B, S, _ = emb.shape
    H1 = params["whh_f"].shape[1]

    def cell(x_t, h, wih, whh, bih, bhh):
        gi = x_t @ wih.T + bih
        gh = h @ whh.T + bhh
        r = jax.nn.sigmoid(gi[:, :H1] + gh[:, :H1])
        z = jax.nn.sigmoid(gi[:, H1:2 * H1] + gh[:, H1:2 * H1])
        n = jnp.tanh(gi[:, 2 * H1:] + r * gh[:, 2 * H1:])
        return (1.0 - z) * n + z * h

    h = jnp.zeros((B, H1), jnp.float32)
    hf = []
    for t in range(S):
        h = cell(emb[:, t], h, params["wih_f"], params["whh_f"],
                 params["bih_f"], params["bhh_f"])
        hf.append(h)
    hf = jnp.stack(hf, axis=1)

    h = jnp.zeros((B, H1), jnp.float32)
    hb = [None] * S
    for t in range(S - 1, -1, -1):
        h = cell(emb[:, t], h, params["wih_b"], params["whh_b"],
                 params["bih_b"], params["bhh_b"])
        hb[t] = h
    hb = jnp.stack(hb, axis=1)

    H = jnp.concatenate([hf, hb], axis=-1)                           # (B, S, 2H1)
    M = jnp.tanh(H)
    alpha = jax.nn.softmax(M @ params["w_attn"], axis=1)[..., None]
    out = H * alpha
    out = jnp.concatenate([emb, out], axis=2)
    out = jax.nn.relu(out)
    out = jnp.max(out, axis=1)                                       # MaxPool1d over seq
    out = out @ params["w1"].T + params["b1"]
    out = out @ params["w2"].T + params["b2"]
    return out


if __name__ == "__main__":
    B, S, V, E, H1, H2, NCLS = 2, 8, 1000, 128, 32, 64, 17

    key = jax.random.PRNGKey(0)
    keys = jax.random.split(key, 16)

    def nrm(k, shape, scale=0.1):
        return scale * jax.random.normal(k, shape, jnp.float32)

    params = {
        "embedding": jax.random.normal(keys[0], (V, E), jnp.float32) * 0.5,
        "wih_f": nrm(keys[1], (3 * H1, E)),
        "whh_f": nrm(keys[2], (3 * H1, H1)),
        "bih_f": nrm(keys[3], (3 * H1,)),
        "bhh_f": nrm(keys[4], (3 * H1,)),
        "wih_b": nrm(keys[5], (3 * H1, E)),
        "whh_b": nrm(keys[6], (3 * H1, H1)),
        "bih_b": nrm(keys[7], (3 * H1,)),
        "bhh_b": nrm(keys[8], (3 * H1,)),
        "w_attn": nrm(keys[9], (2 * H1,), scale=0.5),
        "w1": nrm(keys[10], (H2, E + 2 * H1)),
        "b1": nrm(keys[11], (H2,)),
        "w2": nrm(keys[12], (NCLS, H2)),
        "b2": nrm(keys[13], (NCLS,)),
    }
    tokens = jax.random.randint(keys[14], (B, S), 0, V, dtype=jnp.int32)

    packed = pack_params(params)                 # one-time weight repacking

    out = jax.block_until_ready(textrcnn_attn_forward(tokens, packed, n_classes=NCLS))
    ref = jax.block_until_ready(reference_forward(tokens, params))

    assert out.shape == (B, NCLS)
    np.testing.assert_allclose(np.asarray(out), np.asarray(ref), rtol=2e-2, atol=2e-2)
    print("KERNEL_OK")
</pallas_src>

<mosaic_0001>
module attributes {stable_mosaic.version = 11 : i64} {
  func.func @_textrcnn_attn_kernel(%arg0: i32, %arg1: memref<64xi32, #tpu.memory_space<smem>>, %arg2: memref<1000x128xf32, #tpu.memory_space<any>>, %arg3: memref<128x256xf32, #tpu.memory_space<vmem>>, %arg4: memref<1x256xf32, #tpu.memory_space<vmem>>, %arg5: memref<32x96xf32, #tpu.memory_space<vmem>>, %arg6: memref<32x96xf32, #tpu.memory_space<vmem>>, %arg7: memref<1x32xf32, #tpu.memory_space<vmem>>, %arg8: memref<1x32xf32, #tpu.memory_space<vmem>>, %arg9: memref<1x32xf32, #tpu.memory_space<vmem>>, %arg10: memref<1x32xf32, #tpu.memory_space<vmem>>, %arg11: memref<192x64xf32, #tpu.memory_space<vmem>>, %arg12: memref<1x64xf32, #tpu.memory_space<vmem>>, %arg13: memref<64x128xf32, #tpu.memory_space<vmem>>, %arg14: memref<1x128xf32, #tpu.memory_space<vmem>>, %arg15: memref<8x128xf32, #tpu.memory_space<vmem>>, %arg16: memref<64x128xf32, #tpu.memory_space<vmem>>, %arg17: memref<64x256xf32, #tpu.memory_space<vmem>>, %arg18: memref<2x64x32xf32, #tpu.memory_space<vmem>>, %arg19: memref<8x!tpu.dma_semaphore, #tpu.memory_space<semaphore_mem>>) attributes {dimension_semantics = [#tpu.dimension_semantics<parallel>], iteration_bounds = array<i64: 1>, scalar_prefetch = 1 : i64, scratch_operands = 4 : i64, tpu.core_type = #tpu.core_type<tc>, window_params = [{}, {pipeline_mode = #tpu.pipeline_mode<synchronous>, transform_indices = @transform_1, window_bounds = array<i64: 128, 256>}, {pipeline_mode = #tpu.pipeline_mode<synchronous>, transform_indices = @transform_2, window_bounds = array<i64: 1, 256>}, {pipeline_mode = #tpu.pipeline_mode<synchronous>, transform_indices = @transform_3, window_bounds = array<i64: 32, 96>}, {pipeline_mode = #tpu.pipeline_mode<synchronous>, transform_indices = @transform_4, window_bounds = array<i64: 32, 96>}, {pipeline_mode = #tpu.pipeline_mode<synchronous>, transform_indices = @transform_5, window_bounds = array<i64: 1, 32>}, {pipeline_mode = #tpu.pipeline_mode<synchronous>, transform_indices = @transform_6, window_bounds = array<i64: 1, 32>}, {pipeline_mode = #tpu.pipeline_mode<synchronous>, transform_indices = @transform_7, window_bounds = array<i64: 1, 32>}, {pipeline_mode = #tpu.pipeline_mode<synchronous>, transform_indices = @transform_8, window_bounds = array<i64: 1, 32>}, {pipeline_mode = #tpu.pipeline_mode<synchronous>, transform_indices = @transform_9, window_bounds = array<i64: 192, 64>}, {pipeline_mode = #tpu.pipeline_mode<synchronous>, transform_indices = @transform_10, window_bounds = array<i64: 1, 64>}, {pipeline_mode = #tpu.pipeline_mode<synchronous>, transform_indices = @transform_11, window_bounds = array<i64: 64, 128>}, {pipeline_mode = #tpu.pipeline_mode<synchronous>, transform_indices = @transform_12, window_bounds = array<i64: 1, 128>}, {transform_indices = @transform_13, window_bounds = array<i64: 8, 128>}]} {
    %c64_i32 = arith.constant 64 : i32
    %0 = arith.muli %arg0, %c64_i32 : i32
    %c0_i32 = arith.constant 0 : i32
    %c8_i32 = arith.constant 8 : i32
    %1 = arith.addi %c0_i32, %c8_i32 : i32
    %c1_i32 = arith.constant 1 : i32
    scf.for %arg20 = %c0_i32 to %1 step %c1_i32  : i32 {
      %504 = arith.addi %0, %arg20 : i32
      %505 = arith.index_cast %504 : i32 to index
      %506 = memref.load %arg1[%505] : memref<64xi32, #tpu.memory_space<smem>>
      %c8_i32_175 = arith.constant 8 : i32
      %c0_i32_176 = arith.constant 0 : i32
      %507 = arith.cmpi eq, %c8_i32_175, %c0_i32_176 : i32
      %c1_i32_177 = arith.constant 1 : i32
      %508 = arith.select %507, %c1_i32_177, %c8_i32_175 : i32
      %509 = arith.remsi %arg20, %508 : i32
      %c0_i32_178 = arith.constant 0 : i32
      %510 = arith.cmpi ne, %509, %c0_i32_178 : i32
      %c0_i32_179 = arith.constant 0 : i32
      %511 = arith.cmpi slt, %509, %c0_i32_179 : i32
      %c0_i32_180 = arith.constant 0 : i32
      %512 = arith.cmpi slt, %508, %c0_i32_180 : i32
      %513 = arith.xori %511, %512 : i1
      %514 = arith.andi %513, %510 : i1
      %515 = arith.addi %509, %508 : i32
      %516 = arith.select %514, %515, %509 : i32
      %c0_i32_181 = arith.constant 0 : i32
      %517 = tpu.memref_slice %arg2[%506, %c0_i32_181] : memref<1000x128xf32, #tpu.memory_space<any>> -> memref<1x128xf32, #tpu.memory_space<any>>
      %c0_i32_182 = arith.constant 0 : i32
      %518 = tpu.memref_slice %arg16[%arg20, %c0_i32_182] : memref<64x128xf32, #tpu.memory_space<vmem>> -> memref<1x128xf32, #tpu.memory_space<vmem>>
      %519 = tpu.memref_slice %arg19[%516] : memref<8x!tpu.dma_semaphore, #tpu.memory_space<semaphore_mem>> -> memref<1x!tpu.dma_semaphore, #tpu.memory_space<semaphore_mem>>
      %520 = tpu.memref_squeeze %519 : memref<1x!tpu.dma_semaphore, #tpu.memory_space<semaphore_mem>> -> memref<!tpu.dma_semaphore, #tpu.memory_space<semaphore_mem>>
      tpu.enqueue_dma source(%517 : memref<1x128xf32, #tpu.memory_space<any>>) target(%518 : memref<1x128xf32, #tpu.memory_space<vmem>>) target_semaphore(%520 : memref<!tpu.dma_semaphore, #tpu.memory_space<semaphore_mem>>)
    }
    %c8_i32_0 = arith.constant 8 : i32
    %c0_i32_1 = arith.constant 0 : i32
    %c64_i32_2 = arith.constant 64 : i32
    %2 = arith.addi %c0_i32_1, %c64_i32_2 : i32
    %c1_i32_3 = arith.constant 1 : i32
    scf.for %arg20 = %c0_i32_1 to %2 step %c1_i32_3  : i32 {
      %504 = arith.addi %0, %arg20 : i32
      %505 = arith.index_cast %504 : i32 to index
      %506 = memref.load %arg1[%505] : memref<64xi32, #tpu.memory_space<smem>>
      %c8_i32_175 = arith.constant 8 : i32
      %c0_i32_176 = arith.constant 0 : i32
      %507 = arith.cmpi eq, %c8_i32_175, %c0_i32_176 : i32
      %c1_i32_177 = arith.constant 1 : i32
      %508 = arith.select %507, %c1_i32_177, %c8_i32_175 : i32
      %509 = arith.remsi %arg20, %508 : i32
      %c0_i32_178 = arith.constant 0 : i32
      %510 = arith.cmpi ne, %509, %c0_i32_178 : i32
      %c0_i32_179 = arith.constant 0 : i32
      %511 = arith.cmpi slt, %509, %c0_i32_179 : i32
      %c0_i32_180 = arith.constant 0 : i32
      %512 = arith.cmpi slt, %508, %c0_i32_180 : i32
      %513 = arith.xori %511, %512 : i1
      %514 = arith.andi %513, %510 : i1
      %515 = arith.addi %509, %508 : i32
      %516 = arith.select %514, %515, %509 : i32
      %c0_i32_181 = arith.constant 0 : i32
      %517 = tpu.memref_slice %arg2[%506, %c0_i32_181] : memref<1000x128xf32, #tpu.memory_space<any>> -> memref<1x128xf32, #tpu.memory_space<any>>
      %c0_i32_182 = arith.constant 0 : i32
      %518 = tpu.memref_slice %arg16[%arg20, %c0_i32_182] : memref<64x128xf32, #tpu.memory_space<vmem>> -> memref<1x128xf32, #tpu.memory_space<vmem>>
      %519 = tpu.memref_slice %arg19[%516] : memref<8x!tpu.dma_semaphore, #tpu.memory_space<semaphore_mem>> -> memref<1x!tpu.dma_semaphore, #tpu.memory_space<semaphore_mem>>
      %520 = tpu.memref_squeeze %519 : memref<1x!tpu.dma_semaphore, #tpu.memory_space<semaphore_mem>> -> memref<!tpu.dma_semaphore, #tpu.memory_space<semaphore_mem>>
      tpu.wait_dma2 semaphore(%520 : memref<!tpu.dma_semaphore, #tpu.memory_space<semaphore_mem>>) src(%517 : memref<1x128xf32, #tpu.memory_space<any>>) dst(%518 : memref<1x128xf32, #tpu.memory_space<vmem>>)
      %c8_i32_183 = arith.constant 8 : i32
      %521 = arith.addi %arg20, %c8_i32_183 : i32
      %c64_i32_184 = arith.constant 64 : i32
      %522 = arith.cmpi slt, %521, %c64_i32_184 : i32
      %523 = arith.extui %522 : i1 to i32
      %c0_i32_185 = arith.constant 0 : i32
      %524 = arith.cmpi ne, %523, %c0_i32_185 : i32
      scf.if %524 {
        %c8_i32_186 = arith.constant 8 : i32
        %525 = arith.addi %arg20, %c8_i32_186 : i32
        %526 = arith.addi %0, %525 : i32
        %527 = arith.index_cast %526 : i32 to index
        %528 = memref.load %arg1[%527] : memref<64xi32, #tpu.memory_space<smem>>
        %c8_i32_187 = arith.constant 8 : i32
        %c0_i32_188 = arith.constant 0 : i32
        %529 = arith.cmpi eq, %c8_i32_187, %c0_i32_188 : i32
        %c1_i32_189 = arith.constant 1 : i32
        %530 = arith.select %529, %c1_i32_189, %c8_i32_187 : i32
        %531 = arith.remsi %525, %530 : i32
        %c0_i32_190 = arith.constant 0 : i32
        %532 = arith.cmpi ne, %531, %c0_i32_190 : i32
        %c0_i32_191 = arith.constant 0 : i32
        %533 = arith.cmpi slt, %531, %c0_i32_191 : i32
        %c0_i32_192 = arith.constant 0 : i32
        %534 = arith.cmpi slt, %530, %c0_i32_192 : i32
        %535 = arith.xori %533, %534 : i1
        %536 = arith.andi %535, %532 : i1
        %537 = arith.addi %531, %530 : i32
        %538 = arith.select %536, %537, %531 : i32
        %c0_i32_193 = arith.constant 0 : i32
        %539 = tpu.memref_slice %arg2[%528, %c0_i32_193] : memref<1000x128xf32, #tpu.memory_space<any>> -> memref<1x128xf32, #tpu.memory_space<any>>
        %c0_i32_194 = arith.constant 0 : i32
        %540 = tpu.memref_slice %arg16[%525, %c0_i32_194] : memref<64x128xf32, #tpu.memory_space<vmem>> -> memref<1x128xf32, #tpu.memory_space<vmem>>
        %541 = tpu.memref_slice %arg19[%538] : memref<8x!tpu.dma_semaphore, #tpu.memory_space<semaphore_mem>> -> memref<1x!tpu.dma_semaphore, #tpu.memory_space<semaphore_mem>>
        %542 = tpu.memref_squeeze %541 : memref<1x!tpu.dma_semaphore, #tpu.memory_space<semaphore_mem>> -> memref<!tpu.dma_semaphore, #tpu.memory_space<semaphore_mem>>
        tpu.enqueue_dma source(%539 : memref<1x128xf32, #tpu.memory_space<any>>) target(%540 : memref<1x128xf32, #tpu.memory_space<vmem>>) target_semaphore(%542 : memref<!tpu.dma_semaphore, #tpu.memory_space<semaphore_mem>>)
      } else {
      }
    }
    %c64_i32_4 = arith.constant 64 : i32
    %c0 = arith.constant 0 : index
    %c0_5 = arith.constant 0 : index
    %3 = vector.load %arg16[%c0, %c0_5] : memref<64x128xf32, #tpu.memory_space<vmem>>, vector<64x128xf32>
    %c0_6 = arith.constant 0 : index
    %c0_7 = arith.constant 0 : index
    %4 = vector.load %arg3[%c0_6, %c0_7] : memref<128x256xf32, #tpu.memory_space<vmem>>, vector<128x256xf32>
    %cst = arith.constant dense<0.000000e+00> : vector<64x256xf32>
    %5 = tpu.matmul %3, %4, %cst {dimension_numbers = #tpu.dot_dimension_numbers<[1], [0], [0], [1], [0, 0, 1, 1], [], []>} : vector<64x128xf32>, vector<128x256xf32>, vector<64x256xf32> -> vector<64x256xf32>
    %c0_8 = arith.constant 0 : index
    %c0_9 = arith.constant 0 : index
    %6 = vector.load %arg4[%c0_8, %c0_9] : memref<1x256xf32, #tpu.memory_space<vmem>>, vector<1x256xf32>
    %7 = vector.broadcast %6 : vector<1x256xf32> to vector<64x256xf32>
    %8 = arith.addf %5, %7 : vector<64x256xf32>
    %c0_10 = arith.constant 0 : index
    %c0_11 = arith.constant 0 : index
    %9 = vector.load %arg17[%c0_10, %c0_11] : memref<64x256xf32, #tpu.memory_space<vmem>>, vector<64x256xf32>
    tpu.vector_store %arg17[%c0_10, %c0_11], %8 {strides = array<i32>} : memref<64x256xf32, #tpu.memory_space<vmem>>, vector<64x256xf32>,
    %c0_12 = arith.constant 0 : index
    %c0_13 = arith.constant 0 : index
    %10 = vector.load %arg5[%c0_12, %c0_13] : memref<32x96xf32, #tpu.memory_space<vmem>>, vector<32x96xf32>
    %c0_14 = arith.constant 0 : index
    %c0_15 = arith.constant 0 : index
    %11 = vector.load %arg6[%c0_14, %c0_15] : memref<32x96xf32, #tpu.memory_space<vmem>>, vector<32x96xf32>
    %c0_16 = arith.constant 0 : index
    %c0_17 = arith.constant 0 : index
    %12 = vector.load %arg7[%c0_16, %c0_17] : memref<1x32xf32, #tpu.memory_space<vmem>>, vector<1x32xf32>
    %c0_18 = arith.constant 0 : index
    %c0_19 = arith.constant 0 : index
    %13 = vector.load %arg8[%c0_18, %c0_19] : memref<1x32xf32, #tpu.memory_space<vmem>>, vector<1x32xf32>
    %cst_20 = arith.constant 0.000000e+00 : f32
    %14 = vector.broadcast %cst_20 : f32 to vector<8x32xf32>
    %c0_21 = arith.constant 0 : index
    %c0_22 = arith.constant 0 : index
    %15 = vector.load %arg17[%c0_21, %c0_22] : memref<64x256xf32, #tpu.memory_space<vmem>>, vector<8x96xf32>
    %cst_23 = arith.constant dense<0.000000e+00> : vector<8x96xf32>
    %16 = tpu.matmul %14, %10, %cst_23 {dimension_numbers = #tpu.dot_dimension_numbers<[1], [0], [0], [1], [0, 0, 1, 1], [], []>} : vector<8x32xf32>, vector<32x96xf32>, vector<8x96xf32> -> vector<8x96xf32>
    %17 = vector.extract_strided_slice %15 {offsets = [0, 0], sizes = [8, 64], strides = [1, 1]} : vector<8x96xf32> to vector<8x64xf32>
    %18 = vector.extract_strided_slice %16 {offsets = [0, 0], sizes = [8, 64], strides = [1, 1]} : vector<8x96xf32> to vector<8x64xf32>
    %19 = arith.addf %17, %18 : vector<8x64xf32>
    %20 = arith.negf %19 : vector<8x64xf32>
    %21 = math.exp %20 : vector<8x64xf32>
    %cst_24 = arith.constant 1.000000e+00 : f32
    %22 = vector.broadcast %cst_24 : f32 to vector<8x64xf32>
    %23 = arith.addf %22, %21 : vector<8x64xf32>
    %24 = arith.divf %22, %23 : vector<8x64xf32>
    %25 = vector.extract_strided_slice %24 {offsets = [0, 0], sizes = [8, 32], strides = [1, 1]} : vector<8x64xf32> to vector<8x32xf32>
    %26 = vector.extract_strided_slice %24 {offsets = [0, 32], sizes = [8, 32], strides = [1, 1]} : vector<8x64xf32> to vector<8x32xf32>
    %27 = vector.extract_strided_slice %15 {offsets = [0, 64], sizes = [8, 32], strides = [1, 1]} : vector<8x96xf32> to vector<8x32xf32>
    %28 = vector.extract_strided_slice %16 {offsets = [0, 64], sizes = [8, 32], strides = [1, 1]} : vector<8x96xf32> to vector<8x32xf32>
    %29 = vector.broadcast %12 : vector<1x32xf32> to vector<8x32xf32>
    %30 = arith.addf %28, %29 : vector<8x32xf32>
    %31 = arith.mulf %25, %30 : vector<8x32xf32>
    %32 = arith.addf %27, %31 : vector<8x32xf32>
    %33 = math.tanh %32 : vector<8x32xf32>
    %cst_25 = arith.constant 1.000000e+00 : f32
    %34 = vector.broadcast %cst_25 : f32 to vector<8x32xf32>
    %35 = arith.subf %34, %26 : vector<8x32xf32>
    %36 = arith.mulf %35, %33 : vector<8x32xf32>
    %37 = arith.mulf %26, %14 : vector<8x32xf32>
    %38 = arith.addf %36, %37 : vector<8x32xf32>
    %c0_26 = arith.constant 0 : index
    %c0_27 = arith.constant 0 : index
    %c0_28 = arith.constant 0 : index
    %39 = vector.load %arg18[%c0_26, %c0_27, %c0_28] : memref<2x64x32xf32, #tpu.memory_space<vmem>>, vector<1x8x32xf32>
    %40 = vector.shape_cast %39 : vector<1x8x32xf32> to vector<8x32xf32>
    %41 = vector.shape_cast %38 : vector<8x32xf32> to vector<1x8x32xf32>
    tpu.vector_store %arg18[%c0_26, %c0_27, %c0_28], %41 {strides = array<i32>} : memref<2x64x32xf32, #tpu.memory_space<vmem>>, vector<1x8x32xf32>,
    %c8 = arith.constant 8 : index
    %c0_29 = arith.constant 0 : index
    %42 = vector.load %arg17[%c8, %c0_29] : memref<64x256xf32, #tpu.memory_space<vmem>>, vector<8x96xf32>
    %cst_30 = arith.constant dense<0.000000e+00> : vector<8x96xf32>
    %43 = tpu.matmul %38, %10, %cst_30 {dimension_numbers = #tpu.dot_dimension_numbers<[1], [0], [0], [1], [0, 0, 1, 1], [], []>} : vector<8x32xf32>, vector<32x96xf32>, vector<8x96xf32> -> vector<8x96xf32>
    %44 = vector.extract_strided_slice %42 {offsets = [0, 0], sizes = [8, 64], strides = [1, 1]} : vector<8x96xf32> to vector<8x64xf32>
    %45 = vector.extract_strided_slice %43 {offsets = [0, 0], sizes = [8, 64], strides = [1, 1]} : vector<8x96xf32> to vector<8x64xf32>
    %46 = arith.addf %44, %45 : vector<8x64xf32>
    %47 = arith.negf %46 : vector<8x64xf32>
    %48 = math.exp %47 : vector<8x64xf32>
    %cst_31 = arith.constant 1.000000e+00 : f32
    %49 = vector.broadcast %cst_31 : f32 to vector<8x64xf32>
    %50 = arith.addf %49, %48 : vector<8x64xf32>
    %51 = arith.divf %49, %50 : vector<8x64xf32>
    %52 = vector.extract_strided_slice %51 {offsets = [0, 0], sizes = [8, 32], strides = [1, 1]} : vector<8x64xf32> to vector<8x32xf32>
    %53 = vector.extract_strided_slice %51 {offsets = [0, 32], sizes = [8, 32], strides = [1, 1]} : vector<8x64xf32> to vector<8x32xf32>
    %54 = vector.extract_strided_slice %42 {offsets = [0, 64], sizes = [8, 32], strides = [1, 1]} : vector<8x96xf32> to vector<8x32xf32>
    %55 = vector.extract_strided_slice %43 {offsets = [0, 64], sizes = [8, 32], strides = [1, 1]} : vector<8x96xf32> to vector<8x32xf32>
    %56 = vector.broadcast %12 : vector<1x32xf32> to vector<8x32xf32>
    %57 = arith.addf %55, %56 : vector<8x32xf32>
    %58 = arith.mulf %52, %57 : vector<8x32xf32>
    %59 = arith.addf %54, %58 : vector<8x32xf32>
    %60 = math.tanh %59 : vector<8x32xf32>
    %cst_32 = arith.constant 1.000000e+00 : f32
    %61 = vector.broadcast %cst_32 : f32 to vector<8x32xf32>
    %62 = arith.subf %61, %53 : vector<8x32xf32>
    %63 = arith.mulf %62, %60 : vector<8x32xf32>
    %64 = arith.mulf %53, %38 : vector<8x32xf32>
    %65 = arith.addf %63, %64 : vector<8x32xf32>
    %c0_33 = arith.constant 0 : index
    %c8_34 = arith.constant 8 : index
    %c0_35 = arith.constant 0 : index
    %66 = vector.load %arg18[%c0_33, %c8_34, %c0_35] : memref<2x64x32xf32, #tpu.memory_space<vmem>>, vector<1x8x32xf32>
    %67 = vector.shape_cast %66 : vector<1x8x32xf32> to vector<8x32xf32>
    %68 = vector.shape_cast %65 : vector<8x32xf32> to vector<1x8x32xf32>
    tpu.vector_store %arg18[%c0_33, %c8_34, %c0_35], %68 {strides = array<i32>} : memref<2x64x32xf32, #tpu.memory_space<vmem>>, vector<1x8x32xf32>,
    %c16 = arith.constant 16 : index
    %c0_36 = arith.constant 0 : index
    %69 = vector.load %arg17[%c16, %c0_36] : memref<64x256xf32, #tpu.memory_space<vmem>>, vector<8x96xf32>
    %cst_37 = arith.constant dense<0.000000e+00> : vector<8x96xf32>
    %70 = tpu.matmul %65, %10, %cst_37 {dimension_numbers = #tpu.dot_dimension_numbers<[1], [0], [0], [1], [0, 0, 1, 1], [], []>} : vector<8x32xf32>, vector<32x96xf32>, vector<8x96xf32> -> vector<8x96xf32>
    %71 = vector.extract_strided_slice %69 {offsets = [0, 0], sizes = [8, 64], strides = [1, 1]} : vector<8x96xf32> to vector<8x64xf32>
    %72 = vector.extract_strided_slice %70 {offsets = [0, 0], sizes = [8, 64], strides = [1, 1]} : vector<8x96xf32> to vector<8x64xf32>
    %73 = arith.addf %71, %72 : vector<8x64xf32>
    %74 = arith.negf %73 : vector<8x64xf32>
    %75 = math.exp %74 : vector<8x64xf32>
    %cst_38 = arith.constant 1.000000e+00 : f32
    %76 = vector.broadcast %cst_38 : f32 to vector<8x64xf32>
    %77 = arith.addf %76, %75 : vector<8x64xf32>
    %78 = arith.divf %76, %77 : vector<8x64xf32>
    %79 = vector.extract_strided_slice %78 {offsets = [0, 0], sizes = [8, 32], strides = [1, 1]} : vector<8x64xf32> to vector<8x32xf32>
    %80 = vector.extract_strided_slice %78 {offsets = [0, 32], sizes = [8, 32], strides = [1, 1]} : vector<8x64xf32> to vector<8x32xf32>
    %81 = vector.extract_strided_slice %69 {offsets = [0, 64], sizes = [8, 32], strides = [1, 1]} : vector<8x96xf32> to vector<8x32xf32>
    %82 = vector.extract_strided_slice %70 {offsets = [0, 64], sizes = [8, 32], strides = [1, 1]} : vector<8x96xf32> to vector<8x32xf32>
    %83 = vector.broadcast %12 : vector<1x32xf32> to vector<8x32xf32>
    %84 = arith.addf %82, %83 : vector<8x32xf32>
    %85 = arith.mulf %79, %84 : vector<8x32xf32>
    %86 = arith.addf %81, %85 : vector<8x32xf32>
    %87 = math.tanh %86 : vector<8x32xf32>
    %cst_39 = arith.constant 1.000000e+00 : f32
    %88 = vector.broadcast %cst_39 : f32 to vector<8x32xf32>
    %89 = arith.subf %88, %80 : vector<8x32xf32>
    %90 = arith.mulf %89, %87 : vector<8x32xf32>
    %91 = arith.mulf %80, %65 : vector<8x32xf32>
    %92 = arith.addf %90, %91 : vector<8x32xf32>
    %c0_40 = arith.constant 0 : index
    %c16_41 = arith.constant 16 : index
    %c0_42 = arith.constant 0 : index
    %93 = vector.load %arg18[%c0_40, %c16_41, %c0_42] : memref<2x64x32xf32, #tpu.memory_space<vmem>>, vector<1x8x32xf32>
    %94 = vector.shape_cast %93 : vector<1x8x32xf32> to vector<8x32xf32>
    %95 = vector.shape_cast %92 : vector<8x32xf32> to vector<1x8x32xf32>
    tpu.vector_store %arg18[%c0_40, %c16_41, %c0_42], %95 {strides = array<i32>} : memref<2x64x32xf32, #tpu.memory_space<vmem>>, vector<1x8x32xf32>,
    %c24 = arith.constant 24 : index
    %c0_43 = arith.constant 0 : index
    %96 = vector.load %arg17[%c24, %c0_43] : memref<64x256xf32, #tpu.memory_space<vmem>>, vector<8x96xf32>
    %cst_44 = arith.constant dense<0.000000e+00> : vector<8x96xf32>
    %97 = tpu.matmul %92, %10, %cst_44 {dimension_numbers = #tpu.dot_dimension_numbers<[1], [0], [0], [1], [0, 0, 1, 1], [], []>} : vector<8x32xf32>, vector<32x96xf32>, vector<8x96xf32> -> vector<8x96xf32>
    %98 = vector.extract_strided_slice %96 {offsets = [0, 0], sizes = [8, 64], strides = [1, 1]} : vector<8x96xf32> to vector<8x64xf32>
    %99 = vector.extract_strided_slice %97 {offsets = [0, 0], sizes = [8, 64], strides = [1, 1]} : vector<8x96xf32> to vector<8x64xf32>
    %100 = arith.addf %98, %99 : vector<8x64xf32>
    %101 = arith.negf %100 : vector<8x64xf32>
    %102 = math.exp %101 : vector<8x64xf32>
    %cst_45 = arith.constant 1.000000e+00 : f32
    %103 = vector.broadcast %cst_45 : f32 to vector<8x64xf32>
    %104 = arith.addf %103, %102 : vector<8x64xf32>
    %105 = arith.divf %103, %104 : vector<8x64xf32>
    %106 = vector.extract_strided_slice %105 {offsets = [0, 0], sizes = [8, 32], strides = [1, 1]} : vector<8x64xf32> to vector<8x32xf32>
    %107 = vector.extract_strided_slice %105 {offsets = [0, 32], sizes = [8, 32], strides = [1, 1]} : vector<8x64xf32> to vector<8x32xf32>
    %108 = vector.extract_strided_slice %96 {offsets = [0, 64], sizes = [8, 32], strides = [1, 1]} : vector<8x96xf32> to vector<8x32xf32>
    %109 = vector.extract_strided_slice %97 {offsets = [0, 64], sizes = [8, 32], strides = [1, 1]} : vector<8x96xf32> to vector<8x32xf32>
    %110 = vector.broadcast %12 : vector<1x32xf32> to vector<8x32xf32>
    %111 = arith.addf %109, %110 : vector<8x32xf32>
    %112 = arith.mulf %106, %111 : vector<8x32xf32>
    %113 = arith.addf %108, %112 : vector<8x32xf32>
    %114 = math.tanh %113 : vector<8x32xf32>
    %cst_46 = arith.constant 1.000000e+00 : f32
    %115 = vector.broadcast %cst_46 : f32 to vector<8x32xf32>
    %116 = arith.subf %115, %107 : vector<8x32xf32>
    %117 = arith.mulf %116, %114 : vector<8x32xf32>
    %118 = arith.mulf %107, %92 : vector<8x32xf32>
    %119 = arith.addf %117, %118 : vector<8x32xf32>
    %c0_47 = arith.constant 0 : index
    %c24_48 = arith.constant 24 : index
    %c0_49 = arith.constant 0 : index
    %120 = vector.load %arg18[%c0_47, %c24_48, %c0_49] : memref<2x64x32xf32, #tpu.memory_space<vmem>>, vector<1x8x32xf32>
    %121 = vector.shape_cast %120 : vector<1x8x32xf32> to vector<8x32xf32>
    %122 = vector.shape_cast %119 : vector<8x32xf32> to vector<1x8x32xf32>
    tpu.vector_store %arg18[%c0_47, %c24_48, %c0_49], %122 {strides = array<i32>} : memref<2x64x32xf32, #tpu.memory_space<vmem>>, vector<1x8x32xf32>,
    %c32 = arith.constant 32 : index
    %c0_50 = arith.constant 0 : index
    %123 = vector.load %arg17[%c32, %c0_50] : memref<64x256xf32, #tpu.memory_space<vmem>>, vector<8x96xf32>
    %cst_51 = arith.constant dense<0.000000e+00> : vector<8x96xf32>
    %124 = tpu.matmul %119, %10, %cst_51 {dimension_numbers = #tpu.dot_dimension_numbers<[1], [0], [0], [1], [0, 0, 1, 1], [], []>} : vector<8x32xf32>, vector<32x96xf32>, vector<8x96xf32> -> vector<8x96xf32>
    %125 = vector.extract_strided_slice %123 {offsets = [0, 0], sizes = [8, 64], strides = [1, 1]} : vector<8x96xf32> to vector<8x64xf32>
    %126 = vector.extract_strided_slice %124 {offsets = [0, 0], sizes = [8, 64], strides = [1, 1]} : vector<8x96xf32> to vector<8x64xf32>
    %127 = arith.addf %125, %126 : vector<8x64xf32>
    %128 = arith.negf %127 : vector<8x64xf32>
    %129 = math.exp %128 : vector<8x64xf32>
    %cst_52 = arith.constant 1.000000e+00 : f32
    %130 = vector.broadcast %cst_52 : f32 to vector<8x64xf32>
    %131 = arith.addf %130, %129 : vector<8x64xf32>
    %132 = arith.divf %130, %131 : vector<8x64xf32>
    %133 = vector.extract_strided_slice %132 {offsets = [0, 0], sizes = [8, 32], strides = [1, 1]} : vector<8x64xf32> to vector<8x32xf32>
    %134 = vector.extract_strided_slice %132 {offsets = [0, 32], sizes = [8, 32], strides = [1, 1]} : vector<8x64xf32> to vector<8x32xf32>
    %135 = vector.extract_strided_slice %123 {offsets = [0, 64], sizes = [8, 32], strides = [1, 1]} : vector<8x96xf32> to vector<8x32xf32>
    %136 = vector.extract_strided_slice %124 {offsets = [0, 64], sizes = [8, 32], strides = [1, 1]} : vector<8x96xf32> to vector<8x32xf32>
    %137 = vector.broadcast %12 : vector<1x32xf32> to vector<8x32xf32>
    %138 = arith.addf %136, %137 : vector<8x32xf32>
    %139 = arith.mulf %133, %138 : vector<8x32xf32>
    %140 = arith.addf %135, %139 : vector<8x32xf32>
    %141 = math.tanh %140 : vector<8x32xf32>
    %cst_53 = arith.constant 1.000000e+00 : f32
    %142 = vector.broadcast %cst_53 : f32 to vector<8x32xf32>
    %143 = arith.subf %142, %134 : vector<8x32xf32>
    %144 = arith.mulf %143, %141 : vector<8x32xf32>
    %145 = arith.mulf %134, %119 : vector<8x32xf32>
    %146 = arith.addf %144, %145 : vector<8x32xf32>
    %c0_54 = arith.constant 0 : index
    %c32_55 = arith.constant 32 : index
    %c0_56 = arith.constant 0 : index
    %147 = vector.load %arg18[%c0_54, %c32_55, %c0_56] : memref<2x64x32xf32, #tpu.memory_space<vmem>>, vector<1x8x32xf32>
    %148 = vector.shape_cast %147 : vector<1x8x32xf32> to vector<8x32xf32>
    %149 = vector.shape_cast %146 : vector<8x32xf32> to vector<1x8x32xf32>
    tpu.vector_store %arg18[%c0_54, %c32_55, %c0_56], %149 {strides = array<i32>} : memref<2x64x32xf32, #tpu.memory_space<vmem>>, vector<1x8x32xf32>,
    %c40 = arith.constant 40 : index
    %c0_57 = arith.constant 0 : index
    %150 = vector.load %arg17[%c40, %c0_57] : memref<64x256xf32, #tpu.memory_space<vmem>>, vector<8x96xf32>
    %cst_58 = arith.constant dense<0.000000e+00> : vector<8x96xf32>
    %151 = tpu.matmul %146, %10, %cst_58 {dimension_numbers = #tpu.dot_dimension_numbers<[1], [0], [0], [1], [0, 0, 1, 1], [], []>} : vector<8x32xf32>, vector<32x96xf32>, vector<8x96xf32> -> vector<8x96xf32>
    %152 = vector.extract_strided_slice %150 {offsets = [0, 0], sizes = [8, 64], strides = [1, 1]} : vector<8x96xf32> to vector<8x64xf32>
    %153 = vector.extract_strided_slice %151 {offsets = [0, 0], sizes = [8, 64], strides = [1, 1]} : vector<8x96xf32> to vector<8x64xf32>
    %154 = arith.addf %152, %153 : vector<8x64xf32>
    %155 = arith.negf %154 : vector<8x64xf32>
    %156 = math.exp %155 : vector<8x64xf32>
    %cst_59 = arith.constant 1.000000e+00 : f32
    %157 = vector.broadcast %cst_59 : f32 to vector<8x64xf32>
    %158 = arith.addf %157, %156 : vector<8x64xf32>
    %159 = arith.divf %157, %158 : vector<8x64xf32>
    %160 = vector.extract_strided_slice %159 {offsets = [0, 0], sizes = [8, 32], strides = [1, 1]} : vector<8x64xf32> to vector<8x32xf32>
    %161 = vector.extract_strided_slice %159 {offsets = [0, 32], sizes = [8, 32], strides = [1, 1]} : vector<8x64xf32> to vector<8x32xf32>
    %162 = vector.extract_strided_slice %150 {offsets = [0, 64], sizes = [8, 32], strides = [1, 1]} : vector<8x96xf32> to vector<8x32xf32>
    %163 = vector.extract_strided_slice %151 {offsets = [0, 64], sizes = [8, 32], strides = [1, 1]} : vector<8x96xf32> to vector<8x32xf32>
    %164 = vector.broadcast %12 : vector<1x32xf32> to vector<8x32xf32>
    %165 = arith.addf %163, %164 : vector<8x32xf32>
    %166 = arith.mulf %160, %165 : vector<8x32xf32>
    %167 = arith.addf %162, %166 : vector<8x32xf32>
    %168 = math.tanh %167 : vector<8x32xf32>
    %cst_60 = arith.constant 1.000000e+00 : f32
    %169 = vector.broadcast %cst_60 : f32 to vector<8x32xf32>
    %170 = arith.subf %169, %161 : vector<8x32xf32>
    %171 = arith.mulf %170, %168 : vector<8x32xf32>
    %172 = arith.mulf %161, %146 : vector<8x32xf32>
    %173 = arith.addf %171, %172 : vector<8x32xf32>
    %c0_61 = arith.constant 0 : index
    %c40_62 = arith.constant 40 : index
    %c0_63 = arith.constant 0 : index
    %174 = vector.load %arg18[%c0_61, %c40_62, %c0_63] : memref<2x64x32xf32, #tpu.memory_space<vmem>>, vector<1x8x32xf32>
    %175 = vector.shape_cast %174 : vector<1x8x32xf32> to vector<8x32xf32>
    %176 = vector.shape_cast %173 : vector<8x32xf32> to vector<1x8x32xf32>
    tpu.vector_store %arg18[%c0_61, %c40_62, %c0_63], %176 {strides = array<i32>} : memref<2x64x32xf32, #tpu.memory_space<vmem>>, vector<1x8x32xf32>,
    %c48 = arith.constant 48 : index
    %c0_64 = arith.constant 0 : index
    %177 = vector.load %arg17[%c48, %c0_64] : memref<64x256xf32, #tpu.memory_space<vmem>>, vector<8x96xf32>
    %cst_65 = arith.constant dense<0.000000e+00> : vector<8x96xf32>
    %178 = tpu.matmul %173, %10, %cst_65 {dimension_numbers = #tpu.dot_dimension_numbers<[1], [0], [0], [1], [0, 0, 1, 1], [], []>} : vector<8x32xf32>, vector<32x96xf32>, vector<8x96xf32> -> vector<8x96xf32>
    %179 = vector.extract_strided_slice %177 {offsets = [0, 0], sizes = [8, 64], strides = [1, 1]} : vector<8x96xf32> to vector<8x64xf32>
    %180 = vector.extract_strided_slice %178 {offsets = [0, 0], sizes = [8, 64], strides = [1, 1]} : vector<8x96xf32> to vector<8x64xf32>
    %181 = arith.addf %179, %180 : vector<8x64xf32>
    %182 = arith.negf %181 : vector<8x64xf32>
    %183 = math.exp %182 : vector<8x64xf32>
    %cst_66 = arith.constant 1.000000e+00 : f32
    %184 = vector.broadcast %cst_66 : f32 to vector<8x64xf32>
    %185 = arith.addf %184, %183 : vector<8x64xf32>
    %186 = arith.divf %184, %185 : vector<8x64xf32>
    %187 = vector.extract_strided_slice %186 {offsets = [0, 0], sizes = [8, 32], strides = [1, 1]} : vector<8x64xf32> to vector<8x32xf32>
    %188 = vector.extract_strided_slice %186 {offsets = [0, 32], sizes = [8, 32], strides = [1, 1]} : vector<8x64xf32> to vector<8x32xf32>
    %189 = vector.extract_strided_slice %177 {offsets = [0, 64], sizes = [8, 32], strides = [1, 1]} : vector<8x96xf32> to vector<8x32xf32>
    %190 = vector.extract_strided_slice %178 {offsets = [0, 64], sizes = [8, 32], strides = [1, 1]} : vector<8x96xf32> to vector<8x32xf32>
    %191 = vector.broadcast %12 : vector<1x32xf32> to vector<8x32xf32>
    %192 = arith.addf %190, %191 : vector<8x32xf32>
    %193 = arith.mulf %187, %192 : vector<8x32xf32>
    %194 = arith.addf %189, %193 : vector<8x32xf32>
    %195 = math.tanh %194 : vector<8x32xf32>
    %cst_67 = arith.constant 1.000000e+00 : f32
    %196 = vector.broadcast %cst_67 : f32 to vector<8x32xf32>
    %197 = arith.subf %196, %188 : vector<8x32xf32>
    %198 = arith.mulf %197, %195 : vector<8x32xf32>
    %199 = arith.mulf %188, %173 : vector<8x32xf32>
    %200 = arith.addf %198, %199 : vector<8x32xf32>
    %c0_68 = arith.constant 0 : index
    %c48_69 = arith.constant 48 : index
    %c0_70 = arith.constant 0 : index
    %201 = vector.load %arg18[%c0_68, %c48_69, %c0_70] : memref<2x64x32xf32, #tpu.memory_space<vmem>>, vector<1x8x32xf32>
    %202 = vector.shape_cast %201 : vector<1x8x32xf32> to vector<8x32xf32>
    %203 = vector.shape_cast %200 : vector<8x32xf32> to vector<1x8x32xf32>
    tpu.vector_store %arg18[%c0_68, %c48_69, %c0_70], %203 {strides = array<i32>} : memref<2x64x32xf32, #tpu.memory_space<vmem>>, vector<1x8x32xf32>,
    %c56 = arith.constant 56 : index
    %c0_71 = arith.constant 0 : index
    %204 = vector.load %arg17[%c56, %c0_71] : memref<64x256xf32, #tpu.memory_space<vmem>>, vector<8x96xf32>
    %cst_72 = arith.constant dense<0.000000e+00> : vector<8x96xf32>
    %205 = tpu.matmul %200, %10, %cst_72 {dimension_numbers = #tpu.dot_dimension_numbers<[1], [0], [0], [1], [0, 0, 1, 1], [], []>} : vector<8x32xf32>, vector<32x96xf32>, vector<8x96xf32> -> vector<8x96xf32>
    %206 = vector.extract_strided_slice %204 {offsets = [0, 0], sizes = [8, 64], strides = [1, 1]} : vector<8x96xf32> to vector<8x64xf32>
    %207 = vector.extract_strided_slice %205 {offsets = [0, 0], sizes = [8, 64], strides = [1, 1]} : vector<8x96xf32> to vector<8x64xf32>
    %208 = arith.addf %206, %207 : vector<8x64xf32>
    %209 = arith.negf %208 : vector<8x64xf32>
    %210 = math.exp %209 : vector<8x64xf32>
    %cst_73 = arith.constant 1.000000e+00 : f32
    %211 = vector.broadcast %cst_73 : f32 to vector<8x64xf32>
    %212 = arith.addf %211, %210 : vector<8x64xf32>
    %213 = arith.divf %211, %212 : vector<8x64xf32>
    %214 = vector.extract_strided_slice %213 {offsets = [0, 0], sizes = [8, 32], strides = [1, 1]} : vector<8x64xf32> to vector<8x32xf32>
    %215 = vector.extract_strided_slice %213 {offsets = [0, 32], sizes = [8, 32], strides = [1, 1]} : vector<8x64xf32> to vector<8x32xf32>
    %216 = vector.extract_strided_slice %204 {offsets = [0, 64], sizes = [8, 32], strides = [1, 1]} : vector<8x96xf32> to vector<8x32xf32>
    %217 = vector.extract_strided_slice %205 {offsets = [0, 64], sizes = [8, 32], strides = [1, 1]} : vector<8x96xf32> to vector<8x32xf32>
    %218 = vector.broadcast %12 : vector<1x32xf32> to vector<8x32xf32>
    %219 = arith.addf %217, %218 : vector<8x32xf32>
    %220 = arith.mulf %214, %219 : vector<8x32xf32>
    %221 = arith.addf %216, %220 : vector<8x32xf32>
    %222 = math.tanh %221 : vector<8x32xf32>
    %cst_74 = arith.constant 1.000000e+00 : f32
    %223 = vector.broadcast %cst_74 : f32 to vector<8x32xf32>
    %224 = arith.subf %223, %215 : vector<8x32xf32>
    %225 = arith.mulf %224, %222 : vector<8x32xf32>
    %226 = arith.mulf %215, %200 : vector<8x32xf32>
    %227 = arith.addf %225, %226 : vector<8x32xf32>
    %c0_75 = arith.constant 0 : index
    %c56_76 = arith.constant 56 : index
    %c0_77 = arith.constant 0 : index
    %228 = vector.load %arg18[%c0_75, %c56_76, %c0_77] : memref<2x64x32xf32, #tpu.memory_space<vmem>>, vector<1x8x32xf32>
    %229 = vector.shape_cast %228 : vector<1x8x32xf32> to vector<8x32xf32>
    %230 = vector.shape_cast %227 : vector<8x32xf32> to vector<1x8x32xf32>
    tpu.vector_store %arg18[%c0_75, %c56_76, %c0_77], %230 {strides = array<i32>} : memref<2x64x32xf32, #tpu.memory_space<vmem>>, vector<1x8x32xf32>,
    %cst_78 = arith.constant 0.000000e+00 : f32
    %231 = vector.broadcast %cst_78 : f32 to vector<8x32xf32>
    %c56_79 = arith.constant 56 : index
    %c128 = arith.constant 128 : index
    %232 = vector.load %arg17[%c56_79, %c128] : memref<64x256xf32, #tpu.memory_space<vmem>>, vector<8x96xf32>
    %cst_80 = arith.constant dense<0.000000e+00> : vector<8x96xf32>
    %233 = tpu.matmul %231, %11, %cst_80 {dimension_numbers = #tpu.dot_dimension_numbers<[1], [0], [0], [1], [0, 0, 1, 1], [], []>} : vector<8x32xf32>, vector<32x96xf32>, vector<8x96xf32> -> vector<8x96xf32>
    %234 = vector.extract_strided_slice %232 {offsets = [0, 0], sizes = [8, 64], strides = [1, 1]} : vector<8x96xf32> to vector<8x64xf32>
    %235 = vector.extract_strided_slice %233 {offsets = [0, 0], sizes = [8, 64], strides = [1, 1]} : vector<8x96xf32> to vector<8x64xf32>
    %236 = arith.addf %234, %235 : vector<8x64xf32>
    %237 = arith.negf %236 : vector<8x64xf32>
    %238 = math.exp %237 : vector<8x64xf32>
    %cst_81 = arith.constant 1.000000e+00 : f32
    %239 = vector.broadcast %cst_81 : f32 to vector<8x64xf32>
    %240 = arith.addf %239, %238 : vector<8x64xf32>
    %241 = arith.divf %239, %240 : vector<8x64xf32>
    %242 = vector.extract_strided_slice %241 {offsets = [0, 0], sizes = [8, 32], strides = [1, 1]} : vector<8x64xf32> to vector<8x32xf32>
    %243 = vector.extract_strided_slice %241 {offsets = [0, 32], sizes = [8, 32], strides = [1, 1]} : vector<8x64xf32> to vector<8x32xf32>
    %244 = vector.extract_strided_slice %232 {offsets = [0, 64], sizes = [8, 32], strides = [1, 1]} : vector<8x96xf32> to vector<8x32xf32>
    %245 = vector.extract_strided_slice %233 {offsets = [0, 64], sizes = [8, 32], strides = [1, 1]} : vector<8x96xf32> to vector<8x32xf32>
    %246 = vector.broadcast %13 : vector<1x32xf32> to vector<8x32xf32>
    %247 = arith.addf %245, %246 : vector<8x32xf32>
    %248 = arith.mulf %242, %247 : vector<8x32xf32>
    %249 = arith.addf %244, %248 : vector<8x32xf32>
    %250 = math.tanh %249 : vector<8x32xf32>
    %cst_82 = arith.constant 1.000000e+00 : f32
    %251 = vector.broadcast %cst_82 : f32 to vector<8x32xf32>
    %252 = arith.subf %251, %243 : vector<8x32xf32>
    %253 = arith.mulf %252, %250 : vector<8x32xf32>
    %254 = arith.mulf %243, %231 : vector<8x32xf32>
    %255 = arith.addf %253, %254 : vector<8x32xf32>
    %c1 = arith.constant 1 : index
    %c56_83 = arith.constant 56 : index
    %c0_84 = arith.constant 0 : index
    %256 = vector.load %arg18[%c1, %c56_83, %c0_84] : memref<2x64x32xf32, #tpu.memory_space<vmem>>, vector<1x8x32xf32>
    %257 = vector.shape_cast %256 : vector<1x8x32xf32> to vector<8x32xf32>
    %258 = vector.shape_cast %255 : vector<8x32xf32> to vector<1x8x32xf32>
    tpu.vector_store %arg18[%c1, %c56_83, %c0_84], %258 {strides = array<i32>} : memref<2x64x32xf32, #tpu.memory_space<vmem>>, vector<1x8x32xf32>,
    %c48_85 = arith.constant 48 : index
    %c128_86 = arith.constant 128 : index
    %259 = vector.load %arg17[%c48_85, %c128_86] : memref<64x256xf32, #tpu.memory_space<vmem>>, vector<8x96xf32>
    %cst_87 = arith.constant dense<0.000000e+00> : vector<8x96xf32>
    %260 = tpu.matmul %255, %11, %cst_87 {dimension_numbers = #tpu.dot_dimension_numbers<[1], [0], [0], [1], [0, 0, 1, 1], [], []>} : vector<8x32xf32>, vector<32x96xf32>, vector<8x96xf32> -> vector<8x96xf32>
    %261 = vector.extract_strided_slice %259 {offsets = [0, 0], sizes = [8, 64], strides = [1, 1]} : vector<8x96xf32> to vector<8x64xf32>
    %262 = vector.extract_strided_slice %260 {offsets = [0, 0], sizes = [8, 64], strides = [1, 1]} : vector<8x96xf32> to vector<8x64xf32>
    %263 = arith.addf %261, %262 : vector<8x64xf32>
    %264 = arith.negf %263 : vector<8x64xf32>
    %265 = math.exp %264 : vector<8x64xf32>
    %cst_88 = arith.constant 1.000000e+00 : f32
    %266 = vector.broadcast %cst_88 : f32 to vector<8x64xf32>
    %267 = arith.addf %266, %265 : vector<8x64xf32>
    %268 = arith.divf %266, %267 : vector<8x64xf32>
    %269 = vector.extract_strided_slice %268 {offsets = [0, 0], sizes = [8, 32], strides = [1, 1]} : vector<8x64xf32> to vector<8x32xf32>
    %270 = vector.extract_strided_slice %268 {offsets = [0, 32], sizes = [8, 32], strides = [1, 1]} : vector<8x64xf32> to vector<8x32xf32>
    %271 = vector.extract_strided_slice %259 {offsets = [0, 64], sizes = [8, 32], strides = [1, 1]} : vector<8x96xf32> to vector<8x32xf32>
    %272 = vector.extract_strided_slice %260 {offsets = [0, 64], sizes = [8, 32], strides = [1, 1]} : vector<8x96xf32> to vector<8x32xf32>
    %273 = vector.broadcast %13 : vector<1x32xf32> to vector<8x32xf32>
    %274 = arith.addf %272, %273 : vector<8x32xf32>
    %275 = arith.mulf %269, %274 : vector<8x32xf32>
    %276 = arith.addf %271, %275 : vector<8x32xf32>
    %277 = math.tanh %276 : vector<8x32xf32>
    %cst_89 = arith.constant 1.000000e+00 : f32
    %278 = vector.broadcast %cst_89 : f32 to vector<8x32xf32>
    %279 = arith.subf %278, %270 : vector<8x32xf32>
    %280 = arith.mulf %279, %277 : vector<8x32xf32>
    %281 = arith.mulf %270, %255 : vector<8x32xf32>
    %282 = arith.addf %280, %281 : vector<8x32xf32>
    %c1_90 = arith.constant 1 : index
    %c48_91 = arith.constant 48 : index
    %c0_92 = arith.constant 0 : index
    %283 = vector.load %arg18[%c1_90, %c48_91, %c0_92] : memref<2x64x32xf32, #tpu.memory_space<vmem>>, vector<1x8x32xf32>
    %284 = vector.shape_cast %283 : vector<1x8x32xf32> to vector<8x32xf32>
    %285 = vector.shape_cast %282 : vector<8x32xf32> to vector<1x8x32xf32>
    tpu.vector_store %arg18[%c1_90, %c48_91, %c0_92], %285 {strides = array<i32>} : memref<2x64x32xf32, #tpu.memory_space<vmem>>, vector<1x8x32xf32>,
    %c40_93 = arith.constant 40 : index
    %c128_94 = arith.constant 128 : index
    %286 = vector.load %arg17[%c40_93, %c128_94] : memref<64x256xf32, #tpu.memory_space<vmem>>, vector<8x96xf32>
    %cst_95 = arith.constant dense<0.000000e+00> : vector<8x96xf32>
    %287 = tpu.matmul %282, %11, %cst_95 {dimension_numbers = #tpu.dot_dimension_numbers<[1], [0], [0], [1], [0, 0, 1, 1], [], []>} : vector<8x32xf32>, vector<32x96xf32>, vector<8x96xf32> -> vector<8x96xf32>
    %288 = vector.extract_strided_slice %286 {offsets = [0, 0], sizes = [8, 64], strides = [1, 1]} : vector<8x96xf32> to vector<8x64xf32>
    %289 = vector.extract_strided_slice %287 {offsets = [0, 0], sizes = [8, 64], strides = [1, 1]} : vector<8x96xf32> to vector<8x64xf32>
    %290 = arith.addf %288, %289 : vector<8x64xf32>
    %291 = arith.negf %290 : vector<8x64xf32>
    %292 = math.exp %291 : vector<8x64xf32>
    %cst_96 = arith.constant 1.000000e+00 : f32
    %293 = vector.broadcast %cst_96 : f32 to vector<8x64xf32>
    %294 = arith.addf %293, %292 : vector<8x64xf32>
    %295 = arith.divf %293, %294 : vector<8x64xf32>
    %296 = vector.extract_strided_slice %295 {offsets = [0, 0], sizes = [8, 32], strides = [1, 1]} : vector<8x64xf32> to vector<8x32xf32>
    %297 = vector.extract_strided_slice %295 {offsets = [0, 32], sizes = [8, 32], strides = [1, 1]} : vector<8x64xf32> to vector<8x32xf32>
    %298 = vector.extract_strided_slice %286 {offsets = [0, 64], sizes = [8, 32], strides = [1, 1]} : vector<8x96xf32> to vector<8x32xf32>
    %299 = vector.extract_strided_slice %287 {offsets = [0, 64], sizes = [8, 32], strides = [1, 1]} : vector<8x96xf32> to vector<8x32xf32>
    %300 = vector.broadcast %13 : vector<1x32xf32> to vector<8x32xf32>
    %301 = arith.addf %299, %300 : vector<8x32xf32>
    %302 = arith.mulf %296, %301 : vector<8x32xf32>
    %303 = arith.addf %298, %302 : vector<8x32xf32>
    %304 = math.tanh %303 : vector<8x32xf32>
    %cst_97 = arith.constant 1.000000e+00 : f32
    %305 = vector.broadcast %cst_97 : f32 to vector<8x32xf32>
    %306 = arith.subf %305, %297 : vector<8x32xf32>
    %307 = arith.mulf %306, %304 : vector<8x32xf32>
    %308 = arith.mulf %297, %282 : vector<8x32xf32>
    %309 = arith.addf %307, %308 : vector<8x32xf32>
    %c1_98 = arith.constant 1 : index
    %c40_99 = arith.constant 40 : index
    %c0_100 = arith.constant 0 : index
    %310 = vector.load %arg18[%c1_98, %c40_99, %c0_100] : memref<2x64x32xf32, #tpu.memory_space<vmem>>, vector<1x8x32xf32>
    %311 = vector.shape_cast %310 : vector<1x8x32xf32> to vector<8x32xf32>
    %312 = vector.shape_cast %309 : vector<8x32xf32> to vector<1x8x32xf32>
    tpu.vector_store %arg18[%c1_98, %c40_99, %c0_100], %312 {strides = array<i32>} : memref<2x64x32xf32, #tpu.memory_space<vmem>>, vector<1x8x32xf32>,
    %c32_101 = arith.constant 32 : index
    %c128_102 = arith.constant 128 : index
    %313 = vector.load %arg17[%c32_101, %c128_102] : memref<64x256xf32, #tpu.memory_space<vmem>>, vector<8x96xf32>
    %cst_103 = arith.constant dense<0.000000e+00> : vector<8x96xf32>
    %314 = tpu.matmul %309, %11, %cst_103 {dimension_numbers = #tpu.dot_dimension_numbers<[1], [0], [0], [1], [0, 0, 1, 1], [], []>} : vector<8x32xf32>, vector<32x96xf32>, vector<8x96xf32> -> vector<8x96xf32>
    %315 = vector.extract_strided_slice %313 {offsets = [0, 0], sizes = [8, 64], strides = [1, 1]} : vector<8x96xf32> to vector<8x64xf32>
    %316 = vector.extract_strided_slice %314 {offsets = [0, 0], sizes = [8, 64], strides = [1, 1]} : vector<8x96xf32> to vector<8x64xf32>
    %317 = arith.addf %315, %316 : vector<8x64xf32>
    %318 = arith.negf %317 : vector<8x64xf32>
    %319 = math.exp %318 : vector<8x64xf32>
    %cst_104 = arith.constant 1.000000e+00 : f32
    %320 = vector.broadcast %cst_104 : f32 to vector<8x64xf32>
    %321 = arith.addf %320, %319 : vector<8x64xf32>
    %322 = arith.divf %320, %321 : vector<8x64xf32>
    %323 = vector.extract_strided_slice %322 {offsets = [0, 0], sizes = [8, 32], strides = [1, 1]} : vector<8x64xf32> to vector<8x32xf32>
    %324 = vector.extract_strided_slice %322 {offsets = [0, 32], sizes = [8, 32], strides = [1, 1]} : vector<8x64xf32> to vector<8x32xf32>
    %325 = vector.extract_strided_slice %313 {offsets = [0, 64], sizes = [8, 32], strides = [1, 1]} : vector<8x96xf32> to vector<8x32xf32>
    %326 = vector.extract_strided_slice %314 {offsets = [0, 64], sizes = [8, 32], strides = [1, 1]} : vector<8x96xf32> to vector<8x32xf32>
    %327 = vector.broadcast %13 : vector<1x32xf32> to vector<8x32xf32>
    %328 = arith.addf %326, %327 : vector<8x32xf32>
    %329 = arith.mulf %323, %328 : vector<8x32xf32>
    %330 = arith.addf %325, %329 : vector<8x32xf32>
    %331 = math.tanh %330 : vector<8x32xf32>
    %cst_105 = arith.constant 1.000000e+00 : f32
    %332 = vector.broadcast %cst_105 : f32 to vector<8x32xf32>
    %333 = arith.subf %332, %324 : vector<8x32xf32>
    %334 = arith.mulf %333, %331 : vector<8x32xf32>
    %335 = arith.mulf %324, %309 : vector<8x32xf32>
    %336 = arith.addf %334, %335 : vector<8x32xf32>
    %c1_106 = arith.constant 1 : index
    %c32_107 = arith.constant 32 : index
    %c0_108 = arith.constant 0 : index
    %337 = vector.load %arg18[%c1_106, %c32_107, %c0_108] : memref<2x64x32xf32, #tpu.memory_space<vmem>>, vector<1x8x32xf32>
    %338 = vector.shape_cast %337 : vector<1x8x32xf32> to vector<8x32xf32>
    %339 = vector.shape_cast %336 : vector<8x32xf32> to vector<1x8x32xf32>
    tpu.vector_store %arg18[%c1_106, %c32_107, %c0_108], %339 {strides = array<i32>} : memref<2x64x32xf32, #tpu.memory_space<vmem>>, vector<1x8x32xf32>,
    %c24_109 = arith.constant 24 : index
    %c128_110 = arith.constant 128 : index
    %340 = vector.load %arg17[%c24_109, %c128_110] : memref<64x256xf32, #tpu.memory_space<vmem>>, vector<8x96xf32>
    %cst_111 = arith.constant dense<0.000000e+00> : vector<8x96xf32>
    %341 = tpu.matmul %336, %11, %cst_111 {dimension_numbers = #tpu.dot_dimension_numbers<[1], [0], [0], [1], [0, 0, 1, 1], [], []>} : vector<8x32xf32>, vector<32x96xf32>, vector<8x96xf32> -> vector<8x96xf32>
    %342 = vector.extract_strided_slice %340 {offsets = [0, 0], sizes = [8, 64], strides = [1, 1]} : vector<8x96xf32> to vector<8x64xf32>
    %343 = vector.extract_strided_slice %341 {offsets = [0, 0], sizes = [8, 64], strides = [1, 1]} : vector<8x96xf32> to vector<8x64xf32>
    %344 = arith.addf %342, %343 : vector<8x64xf32>
    %345 = arith.negf %344 : vector<8x64xf32>
    %346 = math.exp %345 : vector<8x64xf32>
    %cst_112 = arith.constant 1.000000e+00 : f32
    %347 = vector.broadcast %cst_112 : f32 to vector<8x64xf32>
    %348 = arith.addf %347, %346 : vector<8x64xf32>
    %349 = arith.divf %347, %348 : vector<8x64xf32>
    %350 = vector.extract_strided_slice %349 {offsets = [0, 0], sizes = [8, 32], strides = [1, 1]} : vector<8x64xf32> to vector<8x32xf32>
    %351 = vector.extract_strided_slice %349 {offsets = [0, 32], sizes = [8, 32], strides = [1, 1]} : vector<8x64xf32> to vector<8x32xf32>
    %352 = vector.extract_strided_slice %340 {offsets = [0, 64], sizes = [8, 32], strides = [1, 1]} : vector<8x96xf32> to vector<8x32xf32>
    %353 = vector.extract_strided_slice %341 {offsets = [0, 64], sizes = [8, 32], strides = [1, 1]} : vector<8x96xf32> to vector<8x32xf32>
    %354 = vector.broadcast %13 : vector<1x32xf32> to vector<8x32xf32>
    %355 = arith.addf %353, %354 : vector<8x32xf32>
    %356 = arith.mulf %350, %355 : vector<8x32xf32>
    %357 = arith.addf %352, %356 : vector<8x32xf32>
    %358 = math.tanh %357 : vector<8x32xf32>
    %cst_113 = arith.constant 1.000000e+00 : f32
    %359 = vector.broadcast %cst_113 : f32 to vector<8x32xf32>
    %360 = arith.subf %359, %351 : vector<8x32xf32>
    %361 = arith.mulf %360, %358 : vector<8x32xf32>
    %362 = arith.mulf %351, %336 : vector<8x32xf32>
    %363 = arith.addf %361, %362 : vector<8x32xf32>
    %c1_114 = arith.constant 1 : index
    %c24_115 = arith.constant 24 : index
    %c0_116 = arith.constant 0 : index
    %364 = vector.load %arg18[%c1_114, %c24_115, %c0_116] : memref<2x64x32xf32, #tpu.memory_space<vmem>>, vector<1x8x32xf32>
    %365 = vector.shape_cast %364 : vector<1x8x32xf32> to vector<8x32xf32>
    %366 = vector.shape_cast %363 : vector<8x32xf32> to vector<1x8x32xf32>
    tpu.vector_store %arg18[%c1_114, %c24_115, %c0_116], %366 {strides = array<i32>} : memref<2x64x32xf32, #tpu.memory_space<vmem>>, vector<1x8x32xf32>,
    %c16_117 = arith.constant 16 : index
    %c128_118 = arith.constant 128 : index
    %367 = vector.load %arg17[%c16_117, %c128_118] : memref<64x256xf32, #tpu.memory_space<vmem>>, vector<8x96xf32>
    %cst_119 = arith.constant dense<0.000000e+00> : vector<8x96xf32>
    %368 = tpu.matmul %363, %11, %cst_119 {dimension_numbers = #tpu.dot_dimension_numbers<[1], [0], [0], [1], [0, 0, 1, 1], [], []>} : vector<8x32xf32>, vector<32x96xf32>, vector<8x96xf32> -> vector<8x96xf32>
    %369 = vector.extract_strided_slice %367 {offsets = [0, 0], sizes = [8, 64], strides = [1, 1]} : vector<8x96xf32> to vector<8x64xf32>
    %370 = vector.extract_strided_slice %368 {offsets = [0, 0], sizes = [8, 64], strides = [1, 1]} : vector<8x96xf32> to vector<8x64xf32>
    %371 = arith.addf %369, %370 : vector<8x64xf32>
    %372 = arith.negf %371 : vector<8x64xf32>
    %373 = math.exp %372 : vector<8x64xf32>
    %cst_120 = arith.constant 1.000000e+00 : f32
    %374 = vector.broadcast %cst_120 : f32 to vector<8x64xf32>
    %375 = arith.addf %374, %373 : vector<8x64xf32>
    %376 = arith.divf %374, %375 : vector<8x64xf32>
    %377 = vector.extract_strided_slice %376 {offsets = [0, 0], sizes = [8, 32], strides = [1, 1]} : vector<8x64xf32> to vector<8x32xf32>
    %378 = vector.extract_strided_slice %376 {offsets = [0, 32], sizes = [8, 32], strides = [1, 1]} : vector<8x64xf32> to vector<8x32xf32>
    %379 = vector.extract_strided_slice %367 {offsets = [0, 64], sizes = [8, 32], strides = [1, 1]} : vector<8x96xf32> to vector<8x32xf32>
    %380 = vector.extract_strided_slice %368 {offsets = [0, 64], sizes = [8, 32], strides = [1, 1]} : vector<8x96xf32> to vector<8x32xf32>
    %381 = vector.broadcast %13 : vector<1x32xf32> to vector<8x32xf32>
    %382 = arith.addf %380, %381 : vector<8x32xf32>
    %383 = arith.mulf %377, %382 : vector<8x32xf32>
    %384 = arith.addf %379, %383 : vector<8x32xf32>
    %385 = math.tanh %384 : vector<8x32xf32>
    %cst_121 = arith.constant 1.000000e+00 : f32
    %386 = vector.broadcast %cst_121 : f32 to vector<8x32xf32>
    %387 = arith.subf %386, %378 : vector<8x32xf32>
    %388 = arith.mulf %387, %385 : vector<8x32xf32>
    %389 = arith.mulf %378, %363 : vector<8x32xf32>
    %390 = arith.addf %388, %389 : vector<8x32xf32>
    %c1_122 = arith.constant 1 : index
    %c16_123 = arith.constant 16 : index
    %c0_124 = arith.constant 0 : index
    %391 = vector.load %arg18[%c1_122, %c16_123, %c0_124] : memref<2x64x32xf32, #tpu.memory_space<vmem>>, vector<1x8x32xf32>
    %392 = vector.shape_cast %391 : vector<1x8x32xf32> to vector<8x32xf32>
    %393 = vector.shape_cast %390 : vector<8x32xf32> to vector<1x8x32xf32>
    tpu.vector_store %arg18[%c1_122, %c16_123, %c0_124], %393 {strides = array<i32>} : memref<2x64x32xf32, #tpu.memory_space<vmem>>, vector<1x8x32xf32>,
    %c8_125 = arith.constant 8 : index
    %c128_126 = arith.constant 128 : index
    %394 = vector.load %arg17[%c8_125, %c128_126] : memref<64x256xf32, #tpu.memory_space<vmem>>, vector<8x96xf32>
    %cst_127 = arith.constant dense<0.000000e+00> : vector<8x96xf32>
    %395 = tpu.matmul %390, %11, %cst_127 {dimension_numbers = #tpu.dot_dimension_numbers<[1], [0], [0], [1], [0, 0, 1, 1], [], []>} : vector<8x32xf32>, vector<32x96xf32>, vector<8x96xf32> -> vector<8x96xf32>
    %396 = vector.extract_strided_slice %394 {offsets = [0, 0], sizes = [8, 64], strides = [1, 1]} : vector<8x96xf32> to vector<8x64xf32>
    %397 = vector.extract_strided_slice %395 {offsets = [0, 0], sizes = [8, 64], strides = [1, 1]} : vector<8x96xf32> to vector<8x64xf32>
    %398 = arith.addf %396, %397 : vector<8x64xf32>
    %399 = arith.negf %398 : vector<8x64xf32>
    %400 = math.exp %399 : vector<8x64xf32>
    %cst_128 = arith.constant 1.000000e+00 : f32
    %401 = vector.broadcast %cst_128 : f32 to vector<8x64xf32>
    %402 = arith.addf %401, %400 : vector<8x64xf32>
    %403 = arith.divf %401, %402 : vector<8x64xf32>
    %404 = vector.extract_strided_slice %403 {offsets = [0, 0], sizes = [8, 32], strides = [1, 1]} : vector<8x64xf32> to vector<8x32xf32>
    %405 = vector.extract_strided_slice %403 {offsets = [0, 32], sizes = [8, 32], strides = [1, 1]} : vector<8x64xf32> to vector<8x32xf32>
    %406 = vector.extract_strided_slice %394 {offsets = [0, 64], sizes = [8, 32], strides = [1, 1]} : vector<8x96xf32> to vector<8x32xf32>
    %407 = vector.extract_strided_slice %395 {offsets = [0, 64], sizes = [8, 32], strides = [1, 1]} : vector<8x96xf32> to vector<8x32xf32>
    %408 = vector.broadcast %13 : vector<1x32xf32> to vector<8x32xf32>
    %409 = arith.addf %407, %408 : vector<8x32xf32>
    %410 = arith.mulf %404, %409 : vector<8x32xf32>
    %411 = arith.addf %406, %410 : vector<8x32xf32>
    %412 = math.tanh %411 : vector<8x32xf32>
    %cst_129 = arith.constant 1.000000e+00 : f32
    %413 = vector.broadcast %cst_129 : f32 to vector<8x32xf32>
    %414 = arith.subf %413, %405 : vector<8x32xf32>
    %415 = arith.mulf %414, %412 : vector<8x32xf32>
    %416 = arith.mulf %405, %390 : vector<8x32xf32>
    %417 = arith.addf %415, %416 : vector<8x32xf32>
    %c1_130 = arith.constant 1 : index
    %c8_131 = arith.constant 8 : index
    %c0_132 = arith.constant 0 : index
    %418 = vector.load %arg18[%c1_130, %c8_131, %c0_132] : memref<2x64x32xf32, #tpu.memory_space<vmem>>, vector<1x8x32xf32>
    %419 = vector.shape_cast %418 : vector<1x8x32xf32> to vector<8x32xf32>
    %420 = vector.shape_cast %417 : vector<8x32xf32> to vector<1x8x32xf32>
    tpu.vector_store %arg18[%c1_130, %c8_131, %c0_132], %420 {strides = array<i32>} : memref<2x64x32xf32, #tpu.memory_space<vmem>>, vector<1x8x32xf32>,
    %c0_133 = arith.constant 0 : index
    %c128_134 = arith.constant 128 : index
    %421 = vector.load %arg17[%c0_133, %c128_134] : memref<64x256xf32, #tpu.memory_space<vmem>>, vector<8x96xf32>
    %cst_135 = arith.constant dense<0.000000e+00> : vector<8x96xf32>
    %422 = tpu.matmul %417, %11, %cst_135 {dimension_numbers = #tpu.dot_dimension_numbers<[1], [0], [0], [1], [0, 0, 1, 1], [], []>} : vector<8x32xf32>, vector<32x96xf32>, vector<8x96xf32> -> vector<8x96xf32>
    %423 = vector.extract_strided_slice %421 {offsets = [0, 0], sizes = [8, 64], strides = [1, 1]} : vector<8x96xf32> to vector<8x64xf32>
    %424 = vector.extract_strided_slice %422 {offsets = [0, 0], sizes = [8, 64], strides = [1, 1]} : vector<8x96xf32> to vector<8x64xf32>
    %425 = arith.addf %423, %424 : vector<8x64xf32>
    %426 = arith.negf %425 : vector<8x64xf32>
    %427 = math.exp %426 : vector<8x64xf32>
    %cst_136 = arith.constant 1.000000e+00 : f32
    %428 = vector.broadcast %cst_136 : f32 to vector<8x64xf32>
    %429 = arith.addf %428, %427 : vector<8x64xf32>
    %430 = arith.divf %428, %429 : vector<8x64xf32>
    %431 = vector.extract_strided_slice %430 {offsets = [0, 0], sizes = [8, 32], strides = [1, 1]} : vector<8x64xf32> to vector<8x32xf32>
    %432 = vector.extract_strided_slice %430 {offsets = [0, 32], sizes = [8, 32], strides = [1, 1]} : vector<8x64xf32> to vector<8x32xf32>
    %433 = vector.extract_strided_slice %421 {offsets = [0, 64], sizes = [8, 32], strides = [1, 1]} : vector<8x96xf32> to vector<8x32xf32>
    %434 = vector.extract_strided_slice %422 {offsets = [0, 64], sizes = [8, 32], strides = [1, 1]} : vector<8x96xf32> to vector<8x32xf32>
    %435 = vector.broadcast %13 : vector<1x32xf32> to vector<8x32xf32>
    %436 = arith.addf %434, %435 : vector<8x32xf32>
    %437 = arith.mulf %431, %436 : vector<8x32xf32>
    %438 = arith.addf %433, %437 : vector<8x32xf32>
    %439 = math.tanh %438 : vector<8x32xf32>
    %cst_137 = arith.constant 1.000000e+00 : f32
    %440 = vector.broadcast %cst_137 : f32 to vector<8x32xf32>
    %441 = arith.subf %440, %432 : vector<8x32xf32>
    %442 = arith.mulf %441, %439 : vector<8x32xf32>
    %443 = arith.mulf %432, %417 : vector<8x32xf32>
    %444 = arith.addf %442, %443 : vector<8x32xf32>
    %c1_138 = arith.constant 1 : index
    %c0_139 = arith.constant 0 : index
    %c0_140 = arith.constant 0 : index
    %445 = vector.load %arg18[%c1_138, %c0_139, %c0_140] : memref<2x64x32xf32, #tpu.memory_space<vmem>>, vector<1x8x32xf32>
    %446 = vector.shape_cast %445 : vector<1x8x32xf32> to vector<8x32xf32>
    %447 = vector.shape_cast %444 : vector<8x32xf32> to vector<1x8x32xf32>
    tpu.vector_store %arg18[%c1_138, %c0_139, %c0_140], %447 {strides = array<i32>} : memref<2x64x32xf32, #tpu.memory_space<vmem>>, vector<1x8x32xf32>,
    %c0_141 = arith.constant 0 : index
    %c0_142 = arith.constant 0 : index
    %c0_143 = arith.constant 0 : index
    %448 = vector.load %arg18[%c0_141, %c0_142, %c0_143] : memref<2x64x32xf32, #tpu.memory_space<vmem>>, vector<1x64x32xf32>
    %449 = vector.shape_cast %448 : vector<1x64x32xf32> to vector<64x32xf32>
    %c1_144 = arith.constant 1 : index
    %c0_145 = arith.constant 0 : index
    %c0_146 = arith.constant 0 : index
    %450 = vector.load %arg18[%c1_144, %c0_145, %c0_146] : memref<2x64x32xf32, #tpu.memory_space<vmem>>, vector<1x64x32xf32>
    %451 = vector.shape_cast %450 : vector<1x64x32xf32> to vector<64x32xf32>
    %452 = math.tanh %449 : vector<64x32xf32>
    %c0_147 = arith.constant 0 : index
    %c0_148 = arith.constant 0 : index
    %453 = vector.load %arg9[%c0_147, %c0_148] : memref<1x32xf32, #tpu.memory_space<vmem>>, vector<1x32xf32>
    %454 = vector.broadcast %453 : vector<1x32xf32> to vector<64x32xf32>
    %455 = arith.mulf %452, %454 : vector<64x32xf32>
    %cst_149 = arith.constant dense<0.000000e+00> : vector<64xf32>
    %456 = vector.multi_reduction <add>, %455, %cst_149 [1] : vector<64x32xf32> to vector<64xf32>
    %457 = vector.shape_cast %456 : vector<64xf32> to vector<64x1xf32>
    %458 = math.tanh %451 : vector<64x32xf32>
    %c0_150 = arith.constant 0 : index
    %c0_151 = arith.constant 0 : index
    %459 = vector.load %arg10[%c0_150, %c0_151] : memref<1x32xf32, #tpu.memory_space<vmem>>, vector<1x32xf32>
    %460 = vector.broadcast %459 : vector<1x32xf32> to vector<64x32xf32>
    %461 = arith.mulf %458, %460 : vector<64x32xf32>
    %cst_152 = arith.constant dense<0.000000e+00> : vector<64xf32>
    %462 = vector.multi_reduction <add>, %461, %cst_152 [1] : vector<64x32xf32> to vector<64xf32>
    %463 = vector.shape_cast %462 : vector<64xf32> to vector<64x1xf32>
    %464 = arith.addf %457, %463 : vector<64x1xf32>
    %465 = vector.shape_cast %464 : vector<64x1xf32> to vector<8x8x1xf32>
    %cst_153 = arith.constant dense<0xFF800000> : vector<8x1xf32>
    %466 = vector.multi_reduction <maximumf>, %465, %cst_153 [0] : vector<8x8x1xf32> to vector<8x1xf32>
    %467 = vector.shape_cast %466 : vector<8x1xf32> to vector<1x8x1xf32>
    %468 = vector.broadcast %467 : vector<1x8x1xf32> to vector<8x8x1xf32>
    %469 = arith.subf %465, %468 : vector<8x8x1xf32>
    %470 = math.exp %469 : vector<8x8x1xf32>
    %cst_154 = arith.constant dense<0.000000e+00> : vector<8x1xf32>
    %471 = vector.multi_reduction <add>, %470, %cst_154 [0] : vector<8x8x1xf32> to vector<8x1xf32>
    %472 = vector.shape_cast %471 : vector<8x1xf32> to vector<1x8x1xf32>
    %473 = vector.broadcast %472 : vector<1x8x1xf32> to vector<8x8x1xf32>
    %474 = arith.divf %470, %473 : vector<8x8x1xf32>
    %c0_155 = arith.constant 0 : index
    %c0_156 = arith.constant 0 : index
    %475 = vector.load %arg16[%c0_155, %c0_156] : memref<64x128xf32, #tpu.memory_space<vmem>>, vector<64x128xf32>
    %476 = vector.shape_cast %475 : vector<64x128xf32> to vector<8x8x128xf32>
    %cst_157 = arith.constant 0.000000e+00 : f32
    %477 = vector.broadcast %cst_157 : f32 to vector<8x8x128xf32>
    %478 = arith.maximumf %476, %477 : vector<8x8x128xf32>
    %cst_158 = arith.constant dense<0xFF800000> : vector<8x128xf32>
    %479 = vector.multi_reduction <maximumf>, %478, %cst_158 [0] : vector<8x8x128xf32> to vector<8x128xf32>
    %480 = vector.shape_cast %449 : vector<64x32xf32> to vector<8x8x32xf32>
    %481 = vector.broadcast %474 : vector<8x8x1xf32> to vector<8x8x32xf32>
    %482 = arith.mulf %480, %481 : vector<8x8x32xf32>
    %cst_159 = arith.constant 0.000000e+00 : f32
    %483 = vector.broadcast %cst_159 : f32 to vector<8x8x32xf32>
    %484 = arith.maximumf %482, %483 : vector<8x8x32xf32>
    %cst_160 = arith.constant dense<0xFF800000> : vector<8x32xf32>
    %485 = vector.multi_reduction <maximumf>, %484, %cst_160 [0] : vector<8x8x32xf32> to vector<8x32xf32>
    %486 = vector.shape_cast %451 : vector<64x32xf32> to vector<8x8x32xf32>
    %487 = vector.broadcast %474 : vector<8x8x1xf32> to vector<8x8x32xf32>
    %488 = arith.mulf %486, %487 : vector<8x8x32xf32>
    %cst_161 = arith.constant 0.000000e+00 : f32
    %489 = vector.broadcast %cst_161 : f32 to vector<8x8x32xf32>
    %490 = arith.maximumf %488, %489 : vector<8x8x32xf32>
    %cst_162 = arith.constant dense<0xFF800000> : vector<8x32xf32>
    %491 = vector.multi_reduction <maximumf>, %490, %cst_162 [0] : vector<8x8x32xf32> to vector<8x32xf32>
    %492 = tpu.concatenate %479, %485, %491 in 1 : vector<8x128xf32>, vector<8x32xf32>, vector<8x32xf32> -> vector<8x192xf32>
    %c0_163 = arith.constant 0 : index
    %c0_164 = arith.constant 0 : index
    %493 = vector.load %arg11[%c0_163, %c0_164] : memref<192x64xf32, #tpu.memory_space<vmem>>, vector<192x64xf32>
    %cst_165 = arith.constant dense<0.000000e+00> : vector<8x64xf32>
    %494 = tpu.matmul %492, %493, %cst_165 {dimension_numbers = #tpu.dot_dimension_numbers<[1], [0], [0], [1], [0, 0, 1, 1], [], []>} : vector<8x192xf32>, vector<192x64xf32>, vector<8x64xf32> -> vector<8x64xf32>
    %c0_166 = arith.constant 0 : index
    %c0_167 = arith.constant 0 : index
    %495 = vector.load %arg12[%c0_166, %c0_167] : memref<1x64xf32, #tpu.memory_space<vmem>>, vector<1x64xf32>
    %496 = vector.broadcast %495 : vector<1x64xf32> to vector<8x64xf32>
    %497 = arith.addf %494, %496 : vector<8x64xf32>
    %c0_168 = arith.constant 0 : index
    %c0_169 = arith.constant 0 : index
    %498 = vector.load %arg13[%c0_168, %c0_169] : memref<64x128xf32, #tpu.memory_space<vmem>>, vector<64x128xf32>
    %cst_170 = arith.constant dense<0.000000e+00> : vector<8x128xf32>
    %499 = tpu.matmul %497, %498, %cst_170 {dimension_numbers = #tpu.dot_dimension_numbers<[1], [0], [0], [1], [0, 0, 1, 1], [], []>} : vector<8x64xf32>, vector<64x128xf32>, vector<8x128xf32> -> vector<8x128xf32>
    %c0_171 = arith.constant 0 : index
    %c0_172 = arith.constant 0 : index
    %500 = vector.load %arg14[%c0_171, %c0_172] : memref<1x128xf32, #tpu.memory_space<vmem>>, vector<1x128xf32>
    %501 = vector.broadcast %500 : vector<1x128xf32> to vector<8x128xf32>
    %502 = arith.addf %499, %501 : vector<8x128xf32>
    %c0_173 = arith.constant 0 : index
    %c0_174 = arith.constant 0 : index
    %503 = vector.load %arg15[%c0_173, %c0_174] : memref<8x128xf32, #tpu.memory_space<vmem>>, vector<8x128xf32>
    tpu.vector_store %arg15[%c0_173, %c0_174], %502 {strides = array<i32>} : memref<8x128xf32, #tpu.memory_space<vmem>>, vector<8x128xf32>,
    return
  }
  func.func @transform_1(%arg0: i32, %arg1: memref<64xi32, #tpu.memory_space<smem>>) -> (i32, i32) {
    %c0_i32 = arith.constant 0 : i32
    %c0_i32_0 = arith.constant 0 : i32
    %c0_i32_1 = arith.constant 0 : i32
    return %c0_i32, %c0_i32_0 : i32, i32
  }
  func.func @transform_2(%arg0: i32, %arg1: memref<64xi32, #tpu.memory_space<smem>>) -> (i32, i32) {
    %c0_i32 = arith.constant 0 : i32
    %c0_i32_0 = arith.constant 0 : i32
    %c0_i32_1 = arith.constant 0 : i32
    return %c0_i32, %c0_i32_0 : i32, i32
  }
  func.func @transform_3(%arg0: i32, %arg1: memref<64xi32, #tpu.memory_space<smem>>) -> (i32, i32) {
    %c0_i32 = arith.constant 0 : i32
    %c0_i32_0 = arith.constant 0 : i32
    %c0_i32_1 = arith.constant 0 : i32
    return %c0_i32, %c0_i32_0 : i32, i32
  }
  func.func @transform_4(%arg0: i32, %arg1: memref<64xi32, #tpu.memory_space<smem>>) -> (i32, i32) {
    %c0_i32 = arith.constant 0 : i32
    %c0_i32_0 = arith.constant 0 : i32
    %c0_i32_1 = arith.constant 0 : i32
    return %c0_i32, %c0_i32_0 : i32, i32
  }
  func.func @transform_5(%arg0: i32, %arg1: memref<64xi32, #tpu.memory_space<smem>>) -> (i32, i32) {
    %c0_i32 = arith.constant 0 : i32
    %c0_i32_0 = arith.constant 0 : i32
    %c0_i32_1 = arith.constant 0 : i32
    return %c0_i32, %c0_i32_0 : i32, i32
  }
  func.func @transform_6(%arg0: i32, %arg1: memref<64xi32, #tpu.memory_space<smem>>) -> (i32, i32) {
    %c0_i32 = arith.constant 0 : i32
    %c0_i32_0 = arith.constant 0 : i32
    %c0_i32_1 = arith.constant 0 : i32
    return %c0_i32, %c0_i32_0 : i32, i32
  }
  func.func @transform_7(%arg0: i32, %arg1: memref<64xi32, #tpu.memory_space<smem>>) -> (i32, i32) {
    %c0_i32 = arith.constant 0 : i32
    %c0_i32_0 = arith.constant 0 : i32
    %c0_i32_1 = arith.constant 0 : i32
    return %c0_i32, %c0_i32_0 : i32, i32
  }
  func.func @transform_8(%arg0: i32, %arg1: memref<64xi32, #tpu.memory_space<smem>>) -> (i32, i32) {
    %c0_i32 = arith.constant 0 : i32
    %c0_i32_0 = arith.constant 0 : i32
    %c0_i32_1 = arith.constant 0 : i32
    return %c0_i32, %c0_i32_0 : i32, i32
  }
  func.func @transform_9(%arg0: i32, %arg1: memref<64xi32, #tpu.memory_space<smem>>) -> (i32, i32) {
    %c0_i32 = arith.constant 0 : i32
    %c0_i32_0 = arith.constant 0 : i32
    %c0_i32_1 = arith.constant 0 : i32
    return %c0_i32, %c0_i32_0 : i32, i32
  }
  func.func @transform_10(%arg0: i32, %arg1: memref<64xi32, #tpu.memory_space<smem>>) -> (i32, i32) {
    %c0_i32 = arith.constant 0 : i32
    %c0_i32_0 = arith.constant 0 : i32
    %c0_i32_1 = arith.constant 0 : i32
    return %c0_i32, %c0_i32_0 : i32, i32
  }
  func.func @transform_11(%arg0: i32, %arg1: memref<64xi32, #tpu.memory_space<smem>>) -> (i32, i32) {
    %c0_i32 = arith.constant 0 : i32
    %c0_i32_0 = arith.constant 0 : i32
    %c0_i32_1 = arith.constant 0 : i32
    return %c0_i32, %c0_i32_0 : i32, i32
  }
  func.func @transform_12(%arg0: i32, %arg1: memref<64xi32, #tpu.memory_space<smem>>) -> (i32, i32) {
    %c0_i32 = arith.constant 0 : i32
    %c0_i32_0 = arith.constant 0 : i32
    %c0_i32_1 = arith.constant 0 : i32
    return %c0_i32, %c0_i32_0 : i32, i32
  }
  func.func @transform_13(%arg0: i32, %arg1: memref<64xi32, #tpu.memory_space<smem>>) -> (i32, i32) {
    %c0_i32 = arith.constant 0 : i32
    %c0_i32_0 = arith.constant 0 : i32
    return %arg0, %c0_i32 : i32, i32
  }
}

</mosaic_0001>

<llo_original>
// kernel: textrcnn_attn_forward.1
$region0: #{textrcnn_attn_forward.1}
  #allocation0 [shape = 'u32[]', space=smem, size = 0x4, offset = 0x4, fixed_abs, tag = 'smem constant byte address 0x4 - core index']
  #allocation1 [shape = 'u32[144,128]{1,0:T(1,128)}', space=vmem, size = 0x12000, scoped, tag = 'internal scratch']
  #allocation2 [shape = 'f32[64,128]{1,0:T(8,128)}', space=vmem, size = 0x8000, scoped, tag = 'scratch operand']
  #allocation3 [shape = 'f32[64,256]{1,0:T(8,128)}', space=vmem, size = 0x10000, scoped, tag = 'scratch operand']
  #allocation4 [shape = 'f32[2,64,32]{2,1,0:T(8,128)}', space=vmem, size = 0x10000, scoped, tag = 'scratch operand']
  #allocation5 [shape = 's32[8]{0}', space=sflag, size = 0x20, scoped, tag = 'scratch operand']
  #allocation6 [shape = 's32[1]{0}', space=sflag, size = 0x4, scoped, tag = 'scoped memory for textrcnn_attn_forward.1']
  #allocation7 [shape = 'u8[512]{0}', space=smem, size = 0x200, scoped, tag = 'prefetched SMEM operand 0']
  #allocation12 [shape = 's32[]', space=sflag, size = 0x4, offset = 0, fixed_abs, tag = 'sflag constant byte address 0x0 - dummy sync flag']
  #allocation13 [shape = 's32[]', space=sflag, size = 0x4, offset = 0, fixed_abs, tag = 'sflag constant byte address 0x0 - dummy sync flag']
  #allocation14 [shape = 'u32[]', space=smem, size = 0x4, offset = 0x44, fixed_abs, tag = 'smem constant byte address 0x44 - assertion arg 0']
  #allocation15 [shape = 'u32[]', space=smem, size = 0x4, offset = 0x48, fixed_abs, tag = 'smem constant byte address 0x48 - assertion arg 1']
  #allocation16 [shape = 's32[]', space=sflag, size = 0x4, offset = 0, fixed_abs, tag = 'sflag constant byte address 0x0 - dummy sync flag']
  #allocation17 [shape = 's32[]', space=sflag, size = 0x4, offset = 0, fixed_abs, tag = 'sflag constant byte address 0x0 - dummy sync flag']
  %s0 = inlined_call_operand.vmem [shape: s32[64], index: 0, kind: input, shape index: {}]
  %s1 = inlined_call_operand.hbm [shape: f32[1000,128], index: 1, kind: input, shape index: {}]
  %s2 = inlined_call_operand.vmem [shape: f32[128,256], index: 2, kind: input, shape index: {}]
  %s3 = inlined_call_operand.vmem [shape: f32[1,256], index: 3, kind: input, shape index: {}]
  %s4 = inlined_call_operand.vmem [shape: f32[32,96], index: 4, kind: input, shape index: {}]
  %s5 = inlined_call_operand.vmem [shape: f32[32,96], index: 5, kind: input, shape index: {}]
  %s6 = inlined_call_operand.vmem [shape: f32[1,32], index: 6, kind: input, shape index: {}]
  %s7 = inlined_call_operand.vmem [shape: f32[1,32], index: 7, kind: input, shape index: {}]
  %s8 = inlined_call_operand.vmem [shape: f32[1,32], index: 8, kind: input, shape index: {}]
  %s9 = inlined_call_operand.vmem [shape: f32[1,32], index: 9, kind: input, shape index: {}]
  %s10 = inlined_call_operand.vmem [shape: f32[192,64], index: 10, kind: input, shape index: {}]
  %s11 = inlined_call_operand.hbm [shape: f32[1,64], index: 11, kind: input, shape index: {}]
  %s12 = inlined_call_operand.vmem [shape: f32[64,128], index: 12, kind: input, shape index: {}]
  %s13 = inlined_call_operand.hbm [shape: f32[1,128], index: 13, kind: input, shape index: {}]
  %s14 = inlined_call_operand.vmem [shape: f32[8,128], index: 14, kind: output, shape index: {}]
  %s15 = sld [smem:[#allocation0]]
  $region92: #{textrcnn_attn_forward.1} parent=0
    _
  %s17 = ssub.s32 1, %s15
  %s18 = scalar_select 0, %s17, %s15
  %s19 = sshll.u32 %s0, 4
  %s20 = int_to_ptr.vmem [resolvable:$true] %s19
  %22 = dma.vmem_to_smem %s20, 16, [#allocation7], [#allocation6]
  %23 = dma.done [#allocation6], 16
  %24 = sfence
  $region1: #{textrcnn_attn_forward.1} parent=0
    #allocation8 [shape = 'u8[512]{0}', space=vmem, size = 0x400, scoped, tag = 'input window, operand 11, single buffered']
    #allocation9 [shape = 's32[1]{0}', space=sflag, size = 0x4, scoped, tag = 'scoped memory for textrcnn_attn_forward.1']
    #allocation10 [shape = 'u8[512]{0}', space=vmem, size = 0x400, scoped, tag = 'input window, operand 13, single buffered']
    #allocation11 [shape = 's32[1]{0}', space=sflag, size = 0x4, scoped, tag = 'scoped memory for textrcnn_attn_forward.1']
    %25 = vsyncpa [#allocation9], 0
    %26 = vsyncpa [#allocation11], 0
    // Predicated region
    $region2: #{textrcnn_attn_forward.1} parent=1 // pred_check
      _
    $region3: #{textrcnn_attn_forward.1} parent=1 // pred_check_branch
      %28 = sbr.rel (0) target = $region5
    $region4: #{textrcnn_attn_forward.1} parent=1 // pred_region
      _
    $region5: #{textrcnn_attn_forward.1} parent=1 // pred_fallthru
      _
    // Predicated region
    $region6: #{textrcnn_attn_forward.1} parent=1 // pred_check
      _
    $region7: #{textrcnn_attn_forward.1} parent=1 // pred_check_branch
      %30 = sbr.rel (0) target = $region9
    $region8: #{textrcnn_attn_forward.1} parent=1 // pred_region
      _
    $region9: #{textrcnn_attn_forward.1} parent=1 // pred_fallthru
      _
    // Predicated region
    $region10: #{textrcnn_attn_forward.1} parent=1 // pred_check
      _
    $region11: #{textrcnn_attn_forward.1} parent=1 // pred_check_branch
      %32 = sbr.rel (0) target = $region13
    $region12: #{textrcnn_attn_forward.1} parent=1 // pred_region
      _
    $region13: #{textrcnn_attn_forward.1} parent=1 // pred_fallthru
      _
    // Predicated region
    $region14: #{textrcnn_attn_forward.1} parent=1 // pred_check
      _
    $region15: #{textrcnn_attn_forward.1} parent=1 // pred_check_branch
      %34 = sbr.rel (0) target = $region17
    $region16: #{textrcnn_attn_forward.1} parent=1 // pred_region
      _
    $region17: #{textrcnn_attn_forward.1} parent=1 // pred_fallthru
      _
    // Predicated region
    $region18: #{textrcnn_attn_forward.1} parent=1 // pred_check
      _
    $region19: #{textrcnn_attn_forward.1} parent=1 // pred_check_branch
      %36 = sbr.rel (0) target = $region21
    $region20: #{textrcnn_attn_forward.1} parent=1 // pred_region
      _
    $region21: #{textrcnn_attn_forward.1} parent=1 // pred_fallthru
      _
    // Predicated region
    $region22: #{textrcnn_attn_forward.1} parent=1 // pred_check
      _
    $region23: #{textrcnn_attn_forward.1} parent=1 // pred_check_branch
      %38 = sbr.rel (0) target = $region25
    $region24: #{textrcnn_attn_forward.1} parent=1 // pred_region
      _
    $region25: #{textrcnn_attn_forward.1} parent=1 // pred_fallthru
      _
    // Predicated region
    $region26: #{textrcnn_attn_forward.1} parent=1 // pred_check
      _
    $region27: #{textrcnn_attn_forward.1} parent=1 // pred_check_branch
      %40 = sbr.rel (0) target = $region29
    $region28: #{textrcnn_attn_forward.1} parent=1 // pred_region
      _
    $region29: #{textrcnn_attn_forward.1} parent=1 // pred_fallthru
      _
    // Predicated region
    $region30: #{textrcnn_attn_forward.1} parent=1 // pred_check
      _
    $region31: #{textrcnn_attn_forward.1} parent=1 // pred_check_branch
      %42 = sbr.rel (0) target = $region33
    $region32: #{textrcnn_attn_forward.1} parent=1 // pred_region
      _
    $region33: #{textrcnn_attn_forward.1} parent=1 // pred_fallthru
      _
    // Predicated region
    $region34: #{textrcnn_attn_forward.1} parent=1 // pred_check
      _
    $region35: #{textrcnn_attn_forward.1} parent=1 // pred_check_branch
      %44 = sbr.rel (0) target = $region37
    $region36: #{textrcnn_attn_forward.1} parent=1 // pred_region
      _
    $region37: #{textrcnn_attn_forward.1} parent=1 // pred_fallthru
      _
    // Predicated region
    $region38: #{textrcnn_attn_forward.1} parent=1 // pred_check
      _
    $region39: #{textrcnn_attn_forward.1} parent=1 // pred_check_branch
      %46 = sbr.rel (0) target = $region41
    $region40: #{textrcnn_attn_forward.1} parent=1 // pred_region
      %s48 = ssub.s32 16, 16
      %49 = vsyncadd [#allocation9], %s48
      %s51 = sshll.u32 [#allocation8], 4
      %s52 = int_to_ptr.vmem [resolvable:$true] %s51
      %54 = dma.hbm_to_vmem [thread:$0]  %s11, 16, %s52, [#allocation9]
    $region41: #{textrcnn_attn_forward.1} parent=1 // pred_fallthru
      _
    // Predicated region
    $region42: #{textrcnn_attn_forward.1} parent=1 // pred_check
      _
    $region43: #{textrcnn_attn_forward.1} parent=1 // pred_check_branch
      %56 = sbr.rel (0) target = $region45
    $region44: #{textrcnn_attn_forward.1} parent=1 // pred_region
      _
    $region45: #{textrcnn_attn_forward.1} parent=1 // pred_fallthru
      _
    // Predicated region
    $region46: #{textrcnn_attn_forward.1} parent=1 // pred_check
      _
    $region47: #{textrcnn_attn_forward.1} parent=1 // pred_check_branch
      %58 = sbr.rel (0) target = $region49
    $region48: #{textrcnn_attn_forward.1} parent=1 // pred_region
      %s60 = ssub.s32 16, 16
      %61 = vsyncadd [#allocation11], %s60
      %s63 = sshll.u32 [#allocation10], 4
      %s64 = int_to_ptr.vmem [resolvable:$true] %s63
      %66 = dma.hbm_to_vmem [thread:$0]  %s13, 16, %s64, [#allocation11]
    $region49: #{textrcnn_attn_forward.1} parent=1 // pred_fallthru
      _
    // Predicated region
    $region50: #{textrcnn_attn_forward.1} parent=1 // pred_check
      _
    $region51: #{textrcnn_attn_forward.1} parent=1 // pred_check_branch
      %68 = sbr.rel (0) target = $region53
    $region52: #{textrcnn_attn_forward.1} parent=1 // pred_region
      %69 = dma.done [#allocation9], 16
    $region53: #{textrcnn_attn_forward.1} parent=1 // pred_fallthru
      _
    // Predicated region
    $region54: #{textrcnn_attn_forward.1} parent=1 // pred_check
      _
    $region55: #{textrcnn_attn_forward.1} parent=1 // pred_check_branch
      %71 = sbr.rel (0) target = $region57
    $region56: #{textrcnn_attn_forward.1} parent=1 // pred_region
      %72 = dma.done [#allocation11], 16
    $region57: #{textrcnn_attn_forward.1} parent=1 // pred_fallthru
      _
    %s73 = smul.u32 0, 64
    loop: start=0, step=1, limit=8
    $region58: #{textrcnn_attn_forward.1} parent=1 // loop_pre_header
      _
    $region59: #{textrcnn_attn_forward.1} parent=1 // loop_header
      %s75 = sphi 0, %s79
      %p76 = scmp.ge.s32.totalorder %s75, 8
    $region60: #{textrcnn_attn_forward.1} parent=1 // loop_header_branch
      %78 = sbr.rel (%p76) target = $region64
    $region61: #{textrcnn_attn_forward.1} parent=1 // loop_body
      %s80 = sadd.s32 %s73, %s75
      %s81 = sld [smem:[#allocation7 + %s80]]
      %p82 = scmp.lt.s32.totalorder %s75, 0
      %s83 = ssub.s32 0, %s75
      %s84 = scalar_select %p82, %s83, %s75
      %s85 = sand.u32 %s84, 7
      %s86 = ssub.s32 0, %s85
      %s87 = scalar_select %p82, %s86, %s85
      %p88 = scmp.ne.s32.totalorder %s87, 0
      %p89 = scmp.lt.s32.totalorder %s87, 0
      %p90 = pnand %p89, %p88
      %p91 = pneg %p90
      %s92 = sadd.s32 %s87, 8
      %s93 = scalar_select %p91, %s92, %s87
      %s94 = smul.addr %s81, 16
      %s95 = scalar_lea.hbm %s1, %s94
      %s96 = scalar_lea.vmem [#allocation2], %s75
      %s97 = scalar_lea.sflag [#allocation5], %s93
      // Predicated region
      $region65: #{textrcnn_attn_forward.1} parent=61 // pred_check
        _
      $region66: #{textrcnn_attn_forward.1} parent=61 // pred_check_branch
        %99 = sbr.rel target = $region68
      $region67: #{textrcnn_attn_forward.1} parent=61 // pred_region
        %100 = sst [smem:[#allocation14]] [#allocation13]
        %101 = sst [smem:[#allocation15]] [#allocation12]
      $region68: #{textrcnn_attn_forward.1} parent=61 // pred_fallthru
        _
      %103 = shalt.err (0)
      %s105 = sshll.u32 %s96, 4
      %s106 = int_to_ptr.vmem [resolvable:$true] %s105
      %108 = dma.hbm_to_vmem [thread:$0]  %s95, 16, %s106, %s97
    $region62: #{textrcnn_attn_forward.1} parent=1 // loop_footer
      %s79 = sadd.s32 1, %s75
    $region63: #{textrcnn_attn_forward.1} parent=1 // loop_footer_branch
      %74 = sbr.rel target = $region59
    $region64: #{textrcnn_attn_forward.1} parent=1 // loop_exit
      _
    loop: start=0, step=1, limit=64
    $region69: #{textrcnn_attn_forward.1} parent=1 // loop_pre_header
      _
    $region70: #{textrcnn_attn_forward.1} parent=1 // loop_header
      %s110 = sphi 0, %s114
      %p111 = scmp.ge.s32.totalorder %s110, 64
    $region71: #{textrcnn_attn_forward.1} parent=1 // loop_header_branch
      %113 = sbr.rel (%p111) target = $region75
    $region72: #{textrcnn_attn_forward.1} parent=1 // loop_body
      %s115 = sadd.s32 %s73, %s110
      %s116 = sld [smem:[#allocation7 + %s115]]
      %p117 = scmp.lt.s32.totalorder %s110, 0
      %s118 = ssub.s32 0, %s110
      %s119 = scalar_select %p117, %s118, %s110
      %s120 = sand.u32 %s119, 7
      %s121 = ssub.s32 0, %s120
      %s122 = scalar_select %p117, %s121, %s120
      %p123 = scmp.ne.s32.totalorder %s122, 0
      %p124 = scmp.lt.s32.totalorder %s122, 0
      %p125 = pnand %p124, %p123
      %p126 = pneg %p125
      %s127 = sadd.s32 %s122, 8
      %s128 = scalar_select %p126, %s127, %s122
      %s129 = scalar_lea.sflag [#allocation5], %s128
      %s130 = smul.u32 1, 1
      %s131 = sshll.u32 %s130, 4
      %132 = dma.done %s129, %s131
      %s133 = sadd.s32 %s110, 8
      %p134 = scmp.lt.s32.totalorder %s133, 64
      // Predicated region
      $region76: #{textrcnn_attn_forward.1} parent=72 // pred_check
        %p135 = pneg %p134
      $region77: #{textrcnn_attn_forward.1} parent=72 // pred_check_branch
        %137 = sbr.rel (%p135) target = $region79
      $region78: #{textrcnn_attn_forward.1} parent=72 // pred_region
        %s138 = sadd.s32 %s73, %s133
        %s139 = sld [smem:[#allocation7 + %s138]]
        %p140 = scmp.lt.s32.totalorder %s133, 0
        %s141 = ssub.s32 0, %s133
        %s142 = scalar_select %p140, %s141, %s133
        %s143 = sand.u32 %s142, 7
        %s144 = ssub.s32 0, %s143
        %s145 = scalar_select %p140, %s144, %s143
        %p146 = scmp.ne.s32.totalorder %s145, 0
        %p147 = scmp.lt.s32.totalorder %s145, 0
        %p148 = pnand %p147, %p146
        %p149 = pneg %p148
        %s150 = sadd.s32 %s145, 8
        %s151 = scalar_select %p149, %s150, %s145
        %s152 = smul.addr %s139, 16
        %s153 = scalar_lea.hbm %s1, %s152
        %s154 = scalar_lea.vmem [#allocation2], %s133
        %s155 = scalar_lea.sflag [#allocation5], %s151
        // Predicated region
        $region80: #{textrcnn_attn_forward.1} parent=78 // pred_check
          _
        $region81: #{textrcnn_attn_forward.1} parent=78 // pred_check_branch
          %157 = sbr.rel target = $region83
        $region82: #{textrcnn_attn_forward.1} parent=78 // pred_region
          %158 = sst [smem:[#allocation14]] [#allocation17]
          %159 = sst [smem:[#allocation15]] [#allocation16]
        $region83: #{textrcnn_attn_forward.1} parent=78 // pred_fallthru
          _
        %161 = shalt.err (0)
        %s163 = sshll.u32 %s154, 4
        %s164 = int_to_ptr.vmem [resolvable:$true] %s163
        %166 = dma.hbm_to_vmem [thread:$0]  %s153, 16, %s164, %s155
      $region79: #{textrcnn_attn_forward.1} parent=72 // pred_fallthru
        _
    $region73: #{textrcnn_attn_forward.1} parent=1 // loop_footer
      %s114 = sadd.s32 1, %s110
    $region74: #{textrcnn_attn_forward.1} parent=1 // loop_footer_branch
      %109 = sbr.rel target = $region70
    $region75: #{textrcnn_attn_forward.1} parent=1 // loop_exit
      _
    %v167 = vld [vmem:[#allocation2] sm:$0xff]
    %v168 = vld [vmem:[#allocation2 + $0x8] sm:$0xff]
    %v169 = vld [vmem:[#allocation2 + $0x10] sm:$0xff]
    %v170 = vld [vmem:[#allocation2 + $0x18] sm:$0xff]
    %v171 = vld [vmem:[#allocation2 + $0x20] sm:$0xff]
    %v172 = vld [vmem:[#allocation2 + $0x28] sm:$0xff]
    %v173 = vld [vmem:[#allocation2 + $0x30] sm:$0xff]
    %v174 = vld [vmem:[#allocation2 + $0x38] sm:$0xff]
    %v175 = vld [vmem:[%s2] sm:$0xff]
    %v176 = vld [vmem:[%s2 + $0x8] sm:$0xff]
    %v177 = vld [vmem:[%s2 + $0x10] sm:$0xff]
    %v178 = vld [vmem:[%s2 + $0x18] sm:$0xff]
    %v179 = vld [vmem:[%s2 + $0x20] sm:$0xff]
    %v180 = vld [vmem:[%s2 + $0x28] sm:$0xff]
    %v181 = vld [vmem:[%s2 + $0x30] sm:$0xff]
    %v182 = vld [vmem:[%s2 + $0x38] sm:$0xff]
    %v183 = vld [vmem:[%s2 + $0x40] sm:$0xff]
    %v184 = vld [vmem:[%s2 + $0x48] sm:$0xff]
    %v185 = vld [vmem:[%s2 + $0x50] sm:$0xff]
    %v186 = vld [vmem:[%s2 + $0x58] sm:$0xff]
    %v187 = vld [vmem:[%s2 + $0x60] sm:$0xff]
    %v188 = vld [vmem:[%s2 + $0x68] sm:$0xff]
    %v189 = vld [vmem:[%s2 + $0x70] sm:$0xff]
    %v190 = vld [vmem:[%s2 + $0x78] sm:$0xff]
    %v191 = vld [vmem:[%s2 + $0x80] sm:$0xff]
    %v192 = vld [vmem:[%s2 + $0x88] sm:$0xff]
    %v193 = vld [vmem:[%s2 + $0x90] sm:$0xff]
    %v194 = vld [vmem:[%s2 + $0x98] sm:$0xff]
    %v195 = vld [vmem:[%s2 + $0xa0] sm:$0xff]
    %v196 = vld [vmem:[%s2 + $0xa8] sm:$0xff]
    %v197 = vld [vmem:[%s2 + $0xb0] sm:$0xff]
    %v198 = vld [vmem:[%s2 + $0xb8] sm:$0xff]
    %v199 = vld [vmem:[%s2 + $0xc0] sm:$0xff]
    %v200 = vld [vmem:[%s2 + $0xc8] sm:$0xff]
    %v201 = vld [vmem:[%s2 + $0xd0] sm:$0xff]
    %v202 = vld [vmem:[%s2 + $0xd8] sm:$0xff]
    %v203 = vld [vmem:[%s2 + $0xe0] sm:$0xff]
    %v204 = vld [vmem:[%s2 + $0xe8] sm:$0xff]
    %v205 = vld [vmem:[%s2 + $0xf0] sm:$0xff]
    %v206 = vld [vmem:[%s2 + $0xf8] sm:$0xff]
    %v207 = vld [vmem:[%s3] sm:$0x3]
    %v209 = vlaneseq
    %v210 = vshrl.u32 %v209, 7
    %v211 = vsub.s32 0, %v210
    %v212 = vrot.slane %v207, %v211
    %v213 = vlaneseq
    %v214 = vshrl.u32 %v213, 7
    %v215 = vsub.s32 1, %v214
    %v216 = vrot.slane %v207, %v215
    %219 = vmatprep.subr.mxu0 %v176
    %220 = vmatpush1.msra.mxu0 %v175
    %221 = vmatprep.subr.mxu0 %v178
    %222 = vmatpush1.msra.mxu0 %v177
    %223 = vmatprep.subr.mxu0 %v180
    %224 = vmatpush1.msra.mxu0 %v179
    %225 = vmatprep.subr.mxu0 %v182
    %226 = vmatpush1.msra.mxu0 %v181
    %227 = vmatprep.subr.mxu0 %v184
    %228 = vmatpush1.msra.mxu0 %v183
    %229 = vmatprep.subr.mxu0 %v186
    %230 = vmatpush1.msra.mxu0 %v185
    %231 = vmatprep.subr.mxu0 %v188
    %232 = vmatpush1.msra.mxu0 %v187
    %233 = vmatprep.subr.mxu0 %v190
    %234 = vmatpush1.msra.mxu0 %v189
    %235 = vmatprep.subr.mxu0 %v192
    %236 = vmatpush1.msra.mxu0 %v191
    %237 = vmatprep.subr.mxu0 %v194
    %238 = vmatpush1.msra.mxu0 %v193
    %239 = vmatprep.subr.mxu0 %v196
    %240 = vmatpush1.msra.mxu0 %v195
    %241 = vmatprep.subr.mxu0 %v198
    %242 = vmatpush1.msra.mxu0 %v197
    %243 = vmatprep.subr.mxu0 %v200
    %244 = vmatpush1.msra.mxu0 %v199
    %245 = vmatprep.subr.mxu0 %v202
    %246 = vmatpush1.msra.mxu0 %v201
    %247 = vmatprep.subr.mxu0 %v204
    %248 = vmatpush1.msra.mxu0 %v203
    %249 = vmatprep.subr.mxu0 %v206
    %250 = vmatpush1.msra.mxu0 %v205
    %251 = vmatprep.subr.mxu0 0.0
    %252 = vmatpush1.msra.mxu0 0.0
    %253 = vmatprep.subr.mxu0 0.0
    %254 = vmatpush1.msra.mxu0 0.0
    %255 = vmatprep.subr.mxu0 0.0
    %256 = vmatpush1.msra.mxu0 0.0
    %257 = vmatprep.subr.mxu0 0.0
    %258 = vmatpush1.msra.mxu0 0.0
    %259 = vmatprep.subr.mxu0 0.0
    %260 = vmatpush1.msra.mxu0 0.0
    %261 = vmatprep.subr.mxu0 0.0
    %262 = vmatpush1.msra.mxu0 0.0
    %263 = vmatprep.subr.mxu0 0.0
    %264 = vmatpush1.msra.mxu0 0.0
    %265 = vmatprep.subr.mxu0 0.0
    %266 = vmatpush1.msra.mxu0 0.0
    %267 = vmatprep.subr.mxu0 0.0
    %268 = vmatpush1.msra.mxu0 0.0
    %269 = vmatprep.subr.mxu0 0.0
    %270 = vmatpush1.msra.mxu0 0.0
    %271 = vmatprep.subr.mxu0 0.0
    %272 = vmatpush1.msra.mxu0 0.0
    %273 = vmatprep.subr.mxu0 0.0
    %274 = vmatpush1.msra.mxu0 0.0
    %275 = vmatprep.subr.mxu0 0.0
    %276 = vmatpush1.msra.mxu0 0.0
    %277 = vmatprep.subr.mxu0 0.0
    %278 = vmatpush1.msra.mxu0 0.0
    %279 = vmatprep.subr.mxu0 0.0
    %280 = vmatpush1.msra.mxu0 0.0
    %281 = vmatprep.subr.mxu0 0.0
    %282 = vmatpush1.msra.mxu0 0.0
    %283 = vmatprep.mubr.f32.mxu0 0.0
    %284 = vmatmul.mubr.f32.gmra.mrb[0].mxu0 %v167
    %v285 = vpop.f32.mrb[0].mxu0
    %v286 = vadd.f32 %v212, %v285
    %v287 = vpop.f32.mrb[0].mxu0
    %v288 = vadd.f32 %v216, %v287
    %289 = vmatprep.mubr.f32.mxu0 0.0
    %290 = vmatmul.mubr.f32.gmra.mrb[0].mxu0 %v168
    %v291 = vpop.f32.mrb[0].mxu0
    %v292 = vadd.f32 %v212, %v291
    %v293 = vpop.f32.mrb[0].mxu0
    %v294 = vadd.f32 %v216, %v293
    %295 = vmatprep.mubr.f32.mxu0 0.0
    %296 = vmatmul.mubr.f32.gmra.mrb[0].mxu0 %v169
    %v297 = vpop.f32.mrb[0].mxu0
    %v298 = vadd.f32 %v212, %v297
    %v299 = vpop.f32.mrb[0].mxu0
    %v300 = vadd.f32 %v216, %v299
    %301 = vmatprep.mubr.f32.mxu0 0.0
    %302 = vmatmul.mubr.f32.gmra.mrb[0].mxu0 %v170
    %v303 = vpop.f32.mrb[0].mxu0
    %v304 = vadd.f32 %v212, %v303
    %v305 = vpop.f32.mrb[0].mxu0
    %v306 = vadd.f32 %v216, %v305
    %307 = vmatprep.mubr.f32.mxu0 0.0
    %308 = vmatmul.mubr.f32.gmra.mrb[0].mxu0 %v171
    %v309 = vpop.f32.mrb[0].mxu0
    %v310 = vadd.f32 %v212, %v309
    %v311 = vpop.f32.mrb[0].mxu0
    %v312 = vadd.f32 %v216, %v311
    %313 = vmatprep.mubr.f32.mxu0 0.0
    %314 = vmatmul.mubr.f32.gmra.mrb[0].mxu0 %v172
    %v315 = vpop.f32.mrb[0].mxu0
    %v316 = vadd.f32 %v212, %v315
    %v317 = vpop.f32.mrb[0].mxu0
    %v318 = vadd.f32 %v216, %v317
    %319 = vmatprep.mubr.f32.mxu0 0.0
    %320 = vmatmul.mubr.f32.gmra.mrb[0].mxu0 %v173
    %v321 = vpop.f32.mrb[0].mxu0
    %v322 = vadd.f32 %v212, %v321
    %v323 = vpop.f32.mrb[0].mxu0
    %v324 = vadd.f32 %v216, %v323
    %325 = vmatprep.mubr.f32.mxu0 0.0
    %326 = vmatmul.mubr.f32.gmra.mrb[0].mxu0 %v174
    %v327 = vpop.f32.mrb[0].mxu0
    %v328 = vadd.f32 %v212, %v327
    %v329 = vpop.f32.mrb[0].mxu0
    %v330 = vadd.f32 %v216, %v329
    %331 = vdwg.mxu0
    %332 = vst [vmem:[#allocation3] sm:$0xff] %v286
    %333 = vst [vmem:[#allocation3 + $0x8] sm:$0xff] %v288
    %334 = vst [vmem:[#allocation3 + $0x10] sm:$0xff] %v292
    %335 = vst [vmem:[#allocation3 + $0x18] sm:$0xff] %v294
    %336 = vst [vmem:[#allocation3 + $0x20] sm:$0xff] %v298
    %337 = vst [vmem:[#allocation3 + $0x28] sm:$0xff] %v300
    %338 = vst [vmem:[#allocation3 + $0x30] sm:$0xff] %v304
    %339 = vst [vmem:[#allocation3 + $0x38] sm:$0xff] %v306
    %340 = vst [vmem:[#allocation3 + $0x40] sm:$0xff] %v310
    %341 = vst [vmem:[#allocation3 + $0x48] sm:$0xff] %v312
    %342 = vst [vmem:[#allocation3 + $0x50] sm:$0xff] %v316
    %343 = vst [vmem:[#allocation3 + $0x58] sm:$0xff] %v318
    %344 = vst [vmem:[#allocation3 + $0x60] sm:$0xff] %v322
    %345 = vst [vmem:[#allocation3 + $0x68] sm:$0xff] %v324
    %346 = vst [vmem:[#allocation3 + $0x70] sm:$0xff] %v328
    %347 = vst [vmem:[#allocation3 + $0x78] sm:$0xff] %v330
    %v348 = vld [vmem:[%s4] sm:$0xff]
    %v349 = vld [vmem:[%s4 + $0x8] sm:$0xff]
    %v350 = vld [vmem:[%s4 + $0x10] sm:$0xff]
    %v351 = vld [vmem:[%s4 + $0x18] sm:$0xff]
    %v352 = vld [vmem:[%s5] sm:$0xff]
    %v353 = vld [vmem:[%s5 + $0x8] sm:$0xff]
    %v354 = vld [vmem:[%s5 + $0x10] sm:$0xff]
    %v355 = vld [vmem:[%s5 + $0x18] sm:$0xff]
    %v356 = vld [vmem:[%s6] sm:$0x1]
    %v357 = vld [vmem:[%s7] sm:$0x1]
    %v358 = vld [vmem:[#allocation3] sm:$0xff]
    %vm359 = vcmask 261120
    %v361 = vsel %vm359, 0.0, 0
    %363 = vmatprep.subr.mxu0 0.0
    %364 = vmatpush1.msra.mxu0 %v348
    %365 = vmatprep.subr.mxu0 0.0
    %366 = vmatpush1.msra.mxu0 %v349
    %367 = vmatprep.subr.mxu0 0.0
    %368 = vmatpush1.msra.mxu0 %v350
    %369 = vmatprep.subr.mxu0 0.0
    %370 = vmatpush1.msra.mxu0 %v351
    %371 = vmatprep.subr.mxu0 0.0
    %372 = vmatpush1.msra.mxu0 0.0
    %373 = vmatprep.subr.mxu0 0.0
    %374 = vmatpush1.msra.mxu0 0.0
    %375 = vmatprep.subr.mxu0 0.0
    %376 = vmatpush1.msra.mxu0 0.0
    %377 = vmatprep.subr.mxu0 0.0
    %378 = vmatpush1.msra.mxu0 0.0
    %379 = vmatprep.subr.mxu0 0.0
    %380 = vmatpush1.msra.mxu0 0.0
    %381 = vmatprep.subr.mxu0 0.0
    %382 = vmatpush1.msra.mxu0 0.0
    %383 = vmatprep.subr.mxu0 0.0
    %384 = vmatpush1.msra.mxu0 0.0
    %385 = vmatprep.subr.mxu0 0.0
    %386 = vmatpush1.msra.mxu0 0.0
    %387 = vmatprep.subr.mxu0 0.0
    %388 = vmatpush1.msra.mxu0 0.0
    %389 = vmatprep.subr.mxu0 0.0
    %390 = vmatpush1.msra.mxu0 0.0
    %391 = vmatprep.subr.mxu0 0.0
    %392 = vmatpush1.msra.mxu0 0.0
    %393 = vmatprep.subr.mxu0 0.0
    %394 = vmatpush1.msra.mxu0 0.0
    %395 = vmatprep.subr.mxu0 0.0
    %396 = vmatpush1.msra.mxu0 0.0
    %397 = vmatprep.subr.mxu0 0.0
    %398 = vmatpush1.msra.mxu0 0.0
    %399 = vmatprep.subr.mxu0 0.0
    %400 = vmatpush1.msra.mxu0 0.0
    %401 = vmatprep.subr.mxu0 0.0
    %402 = vmatpush1.msra.mxu0 0.0
    %403 = vmatprep.subr.mxu0 0.0
    %404 = vmatpush1.msra.mxu0 0.0
    %405 = vmatprep.subr.mxu0 0.0
    %406 = vmatpush1.msra.mxu0 0.0
    %407 = vmatprep.subr.mxu0 0.0
    %408 = vmatpush1.msra.mxu0 0.0
    %409 = vmatprep.subr.mxu0 0.0
    %410 = vmatpush1.msra.mxu0 0.0
    %411 = vmatprep.subr.mxu0 0.0
    %412 = vmatpush1.msra.mxu0 0.0
    %413 = vmatprep.subr.mxu0 0.0
    %414 = vmatpush1.msra.mxu0 0.0
    %415 = vmatprep.subr.mxu0 0.0
    %416 = vmatpush1.msra.mxu0 0.0
    %417 = vmatprep.subr.mxu0 0.0
    %418 = vmatpush1.msra.mxu0 0.0
    %419 = vmatprep.subr.mxu0 0.0
    %420 = vmatpush1.msra.mxu0 0.0
    %421 = vmatprep.subr.mxu0 0.0
    %422 = vmatpush1.msra.mxu0 0.0
    %423 = vmatprep.subr.mxu0 0.0
    %424 = vmatpush1.msra.mxu0 0.0
    %425 = vmatprep.subr.mxu0 0.0
    %426 = vmatpush1.msra.mxu0 0.0
    %427 = vmatprep.mubr.f32.mxu0 0.0
    %428 = vmatmul.mubr.f32.gmra.mrb[0].mxu0 %v361
    %v429 = vpop.f32.mrb[0].mxu0
    %v430 = vadd.f32 0.0, %v429
    %v431 = vpop.f32.mrb[0].mxu0
    %432 = vdwg.mxu0
    %v433 = vadd.f32 %v358, %v430
    %v434 = vxor.u32 %v433, 2147483648
    %v435 = vmul.f32 %v434, 1.442695
    %v436 = vpow.pop %v435
    %v437 = vadd.f32 %v436, 1.0
    %v438 = vrcp.pop %v437
    %v439 = vmul.f32 1.0, %v438
    %v441 = vlaneseq
    %v442 = vshrl.u32 %v441, 7
    %v443 = vsub.s32 0, %v442
    %v444 = vrot.slane %v356, %v443
    %445 = vrot.lane.b32.xlu0 %v444, 64
    %v446 = vpop.permute.xlu0 %445
    %v448 = vadd.f32 %v430, %v446
    %450 = vrot.lane.b32.xlu0 %v448, 64
    %v451 = vpop.permute.xlu0 %450
    %v453 = vmul.f32 %v439, %v451
    %455 = vrot.lane.b32.xlu0 %v453, 64
    %v456 = vpop.permute.xlu0 %455
    %v458 = vadd.f32 %v358, %v456
    %v459 = vtanh.pop %v458
    %v460 = vsub.f32 1.0, %v439
    %462 = vrot.lane.b32.xlu0 %v459, 96
    %v463 = vpop.permute.xlu0 %462
    %v465 = vmul.f32 %v460, %v463
    %v466 = vmul.f32 %v439, 0.0
    %v467 = vadd.f32 %v465, %v466
    %469 = vrot.lane.b32.xlu0 %v467, 96
    %v470 = vpop.permute.xlu0 %469
    %472 = vst.msk [vmem:[#allocation4] sm:$0xff] %vm359, %v470
    %v473 = vld [vmem:[#allocation3 + $0x10] sm:$0xff]
    %v474 = vsel %vm359, %v470, 0
    %476 = vmatprep.subr.mxu0 0.0
    %477 = vmatpush1.msra.mxu0 %v348
    %478 = vmatprep.subr.mxu0 0.0
    %479 = vmatpush1.msra.mxu0 %v349
    %480 = vmatprep.subr.mxu0 0.0
    %481 = vmatpush1.msra.mxu0 %v350
    %482 = vmatprep.subr.mxu0 0.0
    %483 = vmatpush1.msra.mxu0 %v351
    %484 = vmatprep.subr.mxu0 0.0
    %485 = vmatpush1.msra.mxu0 0.0
    %486 = vmatprep.subr.mxu0 0.0
    %487 = vmatpush1.msra.mxu0 0.0
    %488 = vmatprep.subr.mxu0 0.0
    %489 = vmatpush1.msra.mxu0 0.0
    %490 = vmatprep.subr.mxu0 0.0
    %491 = vmatpush1.msra.mxu0 0.0
    %492 = vmatprep.subr.mxu0 0.0
    %493 = vmatpush1.msra.mxu0 0.0
    %494 = vmatprep.subr.mxu0 0.0
    %495 = vmatpush1.msra.mxu0 0.0
    %496 = vmatprep.subr.mxu0 0.0
    %497 = vmatpush1.msra.mxu0 0.0
    %498 = vmatprep.subr.mxu0 0.0
    %499 = vmatpush1.msra.mxu0 0.0
    %500 = vmatprep.subr.mxu0 0.0
    %501 = vmatpush1.msra.mxu0 0.0
    %502 = vmatprep.subr.mxu0 0.0
    %503 = vmatpush1.msra.mxu0 0.0
    %504 = vmatprep.subr.mxu0 0.0
    %505 = vmatpush1.msra.mxu0 0.0
    %506 = vmatprep.subr.mxu0 0.0
    %507 = vmatpush1.msra.mxu0 0.0
    %508 = vmatprep.subr.mxu0 0.0
    %509 = vmatpush1.msra.mxu0 0.0
    %510 = vmatprep.subr.mxu0 0.0
    %511 = vmatpush1.msra.mxu0 0.0
    %512 = vmatprep.subr.mxu0 0.0
    %513 = vmatpush1.msra.mxu0 0.0
    %514 = vmatprep.subr.mxu0 0.0
    %515 = vmatpush1.msra.mxu0 0.0
    %516 = vmatprep.subr.mxu0 0.0
    %517 = vmatpush1.msra.mxu0 0.0
    %518 = vmatprep.subr.mxu0 0.0
    %519 = vmatpush1.msra.mxu0 0.0
    %520 = vmatprep.subr.mxu0 0.0
    %521 = vmatpush1.msra.mxu0 0.0
    %522 = vmatprep.subr.mxu0 0.0
    %523 = vmatpush1.msra.mxu0 0.0
    %524 = vmatprep.subr.mxu0 0.0
    %525 = vmatpush1.msra.mxu0 0.0
    %526 = vmatprep.subr.mxu0 0.0
    %527 = vmatpush1.msra.mxu0 0.0
    %528 = vmatprep.subr.mxu0 0.0
    %529 = vmatpush1.msra.mxu0 0.0
    %530 = vmatprep.subr.mxu0 0.0
    %531 = vmatpush1.msra.mxu0 0.0
    %532 = vmatprep.subr.mxu0 0.0
    %533 = vmatpush1.msra.mxu0 0.0
    %534 = vmatprep.subr.mxu0 0.0
    %535 = vmatpush1.msra.mxu0 0.0
    %536 = vmatprep.subr.mxu0 0.0
    %537 = vmatpush1.msra.mxu0 0.0
    %538 = vmatprep.subr.mxu0 0.0
    %539 = vmatpush1.msra.mxu0 0.0
    %540 = vmatprep.mubr.f32.mxu0 0.0
    %541 = vmatmul.mubr.f32.gmra.mrb[0].mxu0 %v474
    %v542 = vpop.f32.mrb[0].mxu0
    %v543 = vadd.f32 0.0, %v542
    %v544 = vpop.f32.mrb[0].mxu0
    %545 = vdwg.mxu0
    %v546 = vadd.f32 %v473, %v543
    %v547 = vxor.u32 %v546, 2147483648
    %v548 = vmul.f32 %v547, 1.442695
    %v549 = vpow.pop %v548
    %v550 = vadd.f32 %v549, 1.0
    %v551 = vrcp.pop %v550
    %v552 = vmul.f32 1.0, %v551
    %v553 = vadd.f32 %v543, %v446
    %555 = vrot.lane.b32.xlu0 %v553, 64
    %v556 = vpop.permute.xlu0 %555
    %v558 = vmul.f32 %v552, %v556
    %560 = vrot.lane.b32.xlu0 %v558, 64
    %v561 = vpop.permute.xlu0 %560
    %v563 = vadd.f32 %v473, %v561
    %v564 = vtanh.pop %v563
    %v565 = vsub.f32 1.0, %v552
    %567 = vrot.lane.b32.xlu0 %v564, 96
    %v568 = vpop.permute.xlu0 %567
    %v570 = vmul.f32 %v565, %v568
    %v571 = vmul.f32 %v552, %v467
    %v572 = vadd.f32 %v570, %v571
    %574 = vrot.lane.b32.xlu0 %v572, 96
    %v575 = vpop.permute.xlu0 %574
    %577 = vst.msk [vmem:[#allocation4 + $0x8] sm:$0xff] %vm359, %v575
    %v578 = vld [vmem:[#allocation3 + $0x20] sm:$0xff]
    %v579 = vsel %vm359, %v575, 0
    %581 = vmatprep.subr.mxu0 0.0
    %582 = vmatpush1.msra.mxu0 %v348
    %583 = vmatprep.subr.mxu0 0.0
    %584 = vmatpush1.msra.mxu0 %v349
    %585 = vmatprep.subr.mxu0 0.0
    %586 = vmatpush1.msra.mxu0 %v350
    %587 = vmatprep.subr.mxu0 0.0
    %588 = vmatpush1.msra.mxu0 %v351
    %589 = vmatprep.subr.mxu0 0.0
    %590 = vmatpush1.msra.mxu0 0.0
    %591 = vmatprep.subr.mxu0 0.0
    %592 = vmatpush1.msra.mxu0 0.0
    %593 = vmatprep.subr.mxu0 0.0
    %594 = vmatpush1.msra.mxu0 0.0
    %595 = vmatprep.subr.mxu0 0.0
    %596 = vmatpush1.msra.mxu0 0.0
    %597 = vmatprep.subr.mxu0 0.0
    %598 = vmatpush1.msra.mxu0 0.0
    %599 = vmatprep.subr.mxu0 0.0
    %600 = vmatpush1.msra.mxu0 0.0
    %601 = vmatprep.subr.mxu0 0.0
    %602 = vmatpush1.msra.mxu0 0.0
    %603 = vmatprep.subr.mxu0 0.0
    %604 = vmatpush1.msra.mxu0 0.0
    %605 = vmatprep.subr.mxu0 0.0
    %606 = vmatpush1.msra.mxu0 0.0
    %607 = vmatprep.subr.mxu0 0.0
    %608 = vmatpush1.msra.mxu0 0.0
    %609 = vmatprep.subr.mxu0 0.0
    %610 = vmatpush1.msra.mxu0 0.0
    %611 = vmatprep.subr.mxu0 0.0
    %612 = vmatpush1.msra.mxu0 0.0
    %613 = vmatprep.subr.mxu0 0.0
    %614 = vmatpush1.msra.mxu0 0.0
    %615 = vmatprep.subr.mxu0 0.0
    %616 = vmatpush1.msra.mxu0 0.0
    %617 = vmatprep.subr.mxu0 0.0
    %618 = vmatpush1.msra.mxu0 0.0
    %619 = vmatprep.subr.mxu0 0.0
    %620 = vmatpush1.msra.mxu0 0.0
    %621 = vmatprep.subr.mxu0 0.0
    %622 = vmatpush1.msra.mxu0 0.0
    %623 = vmatprep.subr.mxu0 0.0
    %624 = vmatpush1.msra.mxu0 0.0
    %625 = vmatprep.subr.mxu0 0.0
    %626 = vmatpush1.msra.mxu0 0.0
    %627 = vmatprep.subr.mxu0 0.0
    %628 = vmatpush1.msra.mxu0 0.0
    %629 = vmatprep.subr.mxu0 0.0
    %630 = vmatpush1.msra.mxu0 0.0
    %631 = vmatprep.subr.mxu0 0.0
    %632 = vmatpush1.msra.mxu0 0.0
    %633 = vmatprep.subr.mxu0 0.0
    %634 = vmatpush1.msra.mxu0 0.0
    %635 = vmatprep.subr.mxu0 0.0
    %636 = vmatpush1.msra.mxu0 0.0
    %637 = vmatprep.subr.mxu0 0.0
    %638 = vmatpush1.msra.mxu0 0.0
    %639 = vmatprep.subr.mxu0 0.0
    %640 = vmatpush1.msra.mxu0 0.0
    %641 = vmatprep.subr.mxu0 0.0
    %642 = vmatpush1.msra.mxu0 0.0
    %643 = vmatprep.subr.mxu0 0.0
    %644 = vmatpush1.msra.mxu0 0.0
    %645 = vmatprep.mubr.f32.mxu0 0.0
    %646 = vmatmul.mubr.f32.gmra.mrb[0].mxu0 %v579
    %v647 = vpop.f32.mrb[0].mxu0
    %v648 = vadd.f32 0.0, %v647
    %v649 = vpop.f32.mrb[0].mxu0
    %650 = vdwg.mxu0
    %v651 = vadd.f32 %v578, %v648
    %v652 = vxor.u32 %v651, 2147483648
    %v653 = vmul.f32 %v652, 1.442695
    %v654 = vpow.pop %v653
    %v655 = vadd.f32 %v654, 1.0
    %v656 = vrcp.pop %v655
    %v657 = vmul.f32 1.0, %v656
    %v658 = vadd.f32 %v648, %v446
    %660 = vrot.lane.b32.xlu0 %v658, 64
    %v661 = vpop.permute.xlu0 %660
    %v663 = vmul.f32 %v657, %v661
    %665 = vrot.lane.b32.xlu0 %v663, 64
    %v666 = vpop.permute.xlu0 %665
    %v668 = vadd.f32 %v578, %v666
    %v669 = vtanh.pop %v668
    %v670 = vsub.f32 1.0, %v657
    %672 = vrot.lane.b32.xlu0 %v669, 96
    %v673 = vpop.permute.xlu0 %672
    %v675 = vmul.f32 %v670, %v673
    %v676 = vmul.f32 %v657, %v572
    %v677 = vadd.f32 %v675, %v676
    %679 = vrot.lane.b32.xlu0 %v677, 96
    %v680 = vpop.permute.xlu0 %679
    %682 = vst.msk [vmem:[#allocation4 + $0x10] sm:$0xff] %vm359, %v680
    %v683 = vld [vmem:[#allocation3 + $0x30] sm:$0xff]
    %v684 = vsel %vm359, %v680, 0
    %686 = vmatprep.subr.mxu0 0.0
    %687 = vmatpush1.msra.mxu0 %v348
    %688 = vmatprep.subr.mxu0 0.0
    %689 = vmatpush1.msra.mxu0 %v349
    %690 = vmatprep.subr.mxu0 0.0
    %691 = vmatpush1.msra.mxu0 %v350
    %692 = vmatprep.subr.mxu0 0.0
    %693 = vmatpush1.msra.mxu0 %v351
    %694 = vmatprep.subr.mxu0 0.0
    %695 = vmatpush1.msra.mxu0 0.0
    %696 = vmatprep.subr.mxu0 0.0
    %697 = vmatpush1.msra.mxu0 0.0
    %698 = vmatprep.subr.mxu0 0.0
    %699 = vmatpush1.msra.mxu0 0.0
    %700 = vmatprep.subr.mxu0 0.0
    %701 = vmatpush1.msra.mxu0 0.0
    %702 = vmatprep.subr.mxu0 0.0
    %703 = vmatpush1.msra.mxu0 0.0
    %704 = vmatprep.subr.mxu0 0.0
    %705 = vmatpush1.msra.mxu0 0.0
    %706 = vmatprep.subr.mxu0 0.0
    %707 = vmatpush1.msra.mxu0 0.0
    %708 = vmatprep.subr.mxu0 0.0
    %709 = vmatpush1.msra.mxu0 0.0
    %710 = vmatprep.subr.mxu0 0.0
    %711 = vmatpush1.msra.mxu0 0.0
    %712 = vmatprep.subr.mxu0 0.0
    %713 = vmatpush1.msra.mxu0 0.0
    %714 = vmatprep.subr.mxu0 0.0
    %715 = vmatpush1.msra.mxu0 0.0
    %716 = vmatprep.subr.mxu0 0.0
    %717 = vmatpush1.msra.mxu0 0.0
    %718 = vmatprep.subr.mxu0 0.0
    %719 = vmatpush1.msra.mxu0 0.0
    %720 = vmatprep.subr.mxu0 0.0
    %721 = vmatpush1.msra.mxu0 0.0
    %722 = vmatprep.subr.mxu0 0.0
    %723 = vmatpush1.msra.mxu0 0.0
    %724 = vmatprep.subr.mxu0 0.0
    %725 = vmatpush1.msra.mxu0 0.0
    %726 = vmatprep.subr.mxu0 0.0
    %727 = vmatpush1.msra.mxu0 0.0
    %728 = vmatprep.subr.mxu0 0.0
    %729 = vmatpush1.msra.mxu0 0.0
    %730 = vmatprep.subr.mxu0 0.0
    %731 = vmatpush1.msra.mxu0 0.0
    %732 = vmatprep.subr.mxu0 0.0
    %733 = vmatpush1.msra.mxu0 0.0
    %734 = vmatprep.subr.mxu0 0.0
    %735 = vmatpush1.msra.mxu0 0.0
    %736 = vmatprep.subr.mxu0 0.0
    %737 = vmatpush1.msra.mxu0 0.0
    %738 = vmatprep.subr.mxu0 0.0
    %739 = vmatpush1.msra.mxu0 0.0
    %740 = vmatprep.subr.mxu0 0.0
    %741 = vmatpush1.msra.mxu0 0.0
    %742 = vmatprep.subr.mxu0 0.0
    %743 = vmatpush1.msra.mxu0 0.0
    %744 = vmatprep.subr.mxu0 0.0
    %745 = vmatpush1.msra.mxu0 0.0
    %746 = vmatprep.subr.mxu0 0.0
    %747 = vmatpush1.msra.mxu0 0.0
    %748 = vmatprep.subr.mxu0 0.0
    %749 = vmatpush1.msra.mxu0 0.0
    %750 = vmatprep.mubr.f32.mxu0 0.0
    %751 = vmatmul.mubr.f32.gmra.mrb[0].mxu0 %v684
    %v752 = vpop.f32.mrb[0].mxu0
    %v753 = vadd.f32 0.0, %v752
    %v754 = vpop.f32.mrb[0].mxu0
    %755 = vdwg.mxu0
    %v756 = vadd.f32 %v683, %v753
    %v757 = vxor.u32 %v756, 2147483648
    %v758 = vmul.f32 %v757, 1.442695
    %v759 = vpow.pop %v758
    %v760 = vadd.f32 %v759, 1.0
    %v761 = vrcp.pop %v760
    %v762 = vmul.f32 1.0, %v761
    %v763 = vadd.f32 %v753, %v446
    %765 = vrot.lane.b32.xlu0 %v763, 64
    %v766 = vpop.permute.xlu0 %765
    %v768 = vmul.f32 %v762, %v766
    %770 = vrot.lane.b32.xlu0 %v768, 64
    %v771 = vpop.permute.xlu0 %770
    %v773 = vadd.f32 %v683, %v771
    %v774 = vtanh.pop %v773
    %v775 = vsub.f32 1.0, %v762
    %777 = vrot.lane.b32.xlu0 %v774, 96
    %v778 = vpop.permute.xlu0 %777
    %v780 = vmul.f32 %v775, %v778
    %v781 = vmul.f32 %v762, %v677
    %v782 = vadd.f32 %v780, %v781
    %784 = vrot.lane.b32.xlu0 %v782, 96
    %v785 = vpop.permute.xlu0 %784
    %787 = vst.msk [vmem:[#allocation4 + $0x18] sm:$0xff] %vm359, %v785
    %v788 = vld [vmem:[#allocation3 + $0x40] sm:$0xff]
    %v789 = vsel %vm359, %v785, 0
    %791 = vmatprep.subr.mxu0 0.0
    %792 = vmatpush1.msra.mxu0 %v348
    %793 = vmatprep.subr.mxu0 0.0
    %794 = vmatpush1.msra.mxu0 %v349
    %795 = vmatprep.subr.mxu0 0.0
    %796 = vmatpush1.msra.mxu0 %v350
    %797 = vmatprep.subr.mxu0 0.0
    %798 = vmatpush1.msra.mxu0 %v351
    %799 = vmatprep.subr.mxu0 0.0
    %800 = vmatpush1.msra.mxu0 0.0
    %801 = vmatprep.subr.mxu0 0.0
    %802 = vmatpush1.msra.mxu0 0.0
    %803 = vmatprep.subr.mxu0 0.0
    %804 = vmatpush1.msra.mxu0 0.0
    %805 = vmatprep.subr.mxu0 0.0
    %806 = vmatpush1.msra.mxu0 0.0
    %807 = vmatprep.subr.mxu0 0.0
    %808 = vmatpush1.msra.mxu0 0.0
    %809 = vmatprep.subr.mxu0 0.0
    %810 = vmatpush1.msra.mxu0 0.0
    %811 = vmatprep.subr.mxu0 0.0
    %812 = vmatpush1.msra.mxu0 0.0
    %813 = vmatprep.subr.mxu0 0.0
    %814 = vmatpush1.msra.mxu0 0.0
    %815 = vmatprep.subr.mxu0 0.0
    %816 = vmatpush1.msra.mxu0 0.0
    %817 = vmatprep.subr.mxu0 0.0
    %818 = vmatpush1.msra.mxu0 0.0
    %819 = vmatprep.subr.mxu0 0.0
    %820 = vmatpush1.msra.mxu0 0.0
    %821 = vmatprep.subr.mxu0 0.0
    %822 = vmatpush1.msra.mxu0 0.0
    %823 = vmatprep.subr.mxu0 0.0
    %824 = vmatpush1.msra.mxu0 0.0
    %825 = vmatprep.subr.mxu0 0.0
    %826 = vmatpush1.msra.mxu0 0.0
    %827 = vmatprep.subr.mxu0 0.0
    %828 = vmatpush1.msra.mxu0 0.0
    %829 = vmatprep.subr.mxu0 0.0
    %830 = vmatpush1.msra.mxu0 0.0
    %831 = vmatprep.subr.mxu0 0.0
    %832 = vmatpush1.msra.mxu0 0.0
    %833 = vmatprep.subr.mxu0 0.0
    %834 = vmatpush1.msra.mxu0 0.0
    %835 = vmatprep.subr.mxu0 0.0
    %836 = vmatpush1.msra.mxu0 0.0
    %837 = vmatprep.subr.mxu0 0.0
    %838 = vmatpush1.msra.mxu0 0.0
    %839 = vmatprep.subr.mxu0 0.0
    %840 = vmatpush1.msra.mxu0 0.0
    %841 = vmatprep.subr.mxu0 0.0
    %842 = vmatpush1.msra.mxu0 0.0
    %843 = vmatprep.subr.mxu0 0.0
    %844 = vmatpush1.msra.mxu0 0.0
    %845 = vmatprep.subr.mxu0 0.0
    %846 = vmatpush1.msra.mxu0 0.0
    %847 = vmatprep.subr.mxu0 0.0
    %848 = vmatpush1.msra.mxu0 0.0
    %849 = vmatprep.subr.mxu0 0.0
    %850 = vmatpush1.msra.mxu0 0.0
    %851 = vmatprep.subr.mxu0 0.0
    %852 = vmatpush1.msra.mxu0 0.0
    %853 = vmatprep.subr.mxu0 0.0
    %854 = vmatpush1.msra.mxu0 0.0
    %855 = vmatprep.mubr.f32.mxu0 0.0
    %856 = vmatmul.mubr.f32.gmra.mrb[0].mxu0 %v789
    %v857 = vpop.f32.mrb[0].mxu0
    %v858 = vadd.f32 0.0, %v857
    %v859 = vpop.f32.mrb[0].mxu0
    %860 = vdwg.mxu0
    %v861 = vadd.f32 %v788, %v858
    %v862 = vxor.u32 %v861, 2147483648
    %v863 = vmul.f32 %v862, 1.442695
    %v864 = vpow.pop %v863
    %v865 = vadd.f32 %v864, 1.0
    %v866 = vrcp.pop %v865
    %v867 = vmul.f32 1.0, %v866
    %v868 = vadd.f32 %v858, %v446
    %870 = vrot.lane.b32.xlu0 %v868, 64
    %v871 = vpop.permute.xlu0 %870
    %v873 = vmul.f32 %v867, %v871
    %875 = vrot.lane.b32.xlu0 %v873, 64
    %v876 = vpop.permute.xlu0 %875
    %v878 = vadd.f32 %v788, %v876
    %v879 = vtanh.pop %v878
    %v880 = vsub.f32 1.0, %v867
    %882 = vrot.lane.b32.xlu0 %v879, 96
    %v883 = vpop.permute.xlu0 %882
    %v885 = vmul.f32 %v880, %v883
    %v886 = vmul.f32 %v867, %v782
    %v887 = vadd.f32 %v885, %v886
    %889 = vrot.lane.b32.xlu0 %v887, 96
    %v890 = vpop.permute.xlu0 %889
    %892 = vst.msk [vmem:[#allocation4 + $0x20] sm:$0xff] %vm359, %v890
    %v893 = vld [vmem:[#allocation3 + $0x50] sm:$0xff]
    %v894 = vsel %vm359, %v890, 0
    %896 = vmatprep.subr.mxu0 0.0
    %897 = vmatpush1.msra.mxu0 %v348
    %898 = vmatprep.subr.mxu0 0.0
    %899 = vmatpush1.msra.mxu0 %v349
    %900 = vmatprep.subr.mxu0 0.0
    %901 = vmatpush1.msra.mxu0 %v350
    %902 = vmatprep.subr.mxu0 0.0
    %903 = vmatpush1.msra.mxu0 %v351
    %904 = vmatprep.subr.mxu0 0.0
    %905 = vmatpush1.msra.mxu0 0.0
    %906 = vmatprep.subr.mxu0 0.0
    %907 = vmatpush1.msra.mxu0 0.0
    %908 = vmatprep.subr.mxu0 0.0
    %909 = vmatpush1.msra.mxu0 0.0
    %910 = vmatprep.subr.mxu0 0.0
    %911 = vmatpush1.msra.mxu0 0.0
    %912 = vmatprep.subr.mxu0 0.0
    %913 = vmatpush1.msra.mxu0 0.0
    %914 = vmatprep.subr.mxu0 0.0
    %915 = vmatpush1.msra.mxu0 0.0
    %916 = vmatprep.subr.mxu0 0.0
    %917 = vmatpush1.msra.mxu0 0.0
    %918 = vmatprep.subr.mxu0 0.0
    %919 = vmatpush1.msra.mxu0 0.0
    %920 = vmatprep.subr.mxu0 0.0
    %921 = vmatpush1.msra.mxu0 0.0
    %922 = vmatprep.subr.mxu0 0.0
    %923 = vmatpush1.msra.mxu0 0.0
    %924 = vmatprep.subr.mxu0 0.0
    %925 = vmatpush1.msra.mxu0 0.0
    %926 = vmatprep.subr.mxu0 0.0
    %927 = vmatpush1.msra.mxu0 0.0
    %928 = vmatprep.subr.mxu0 0.0
    %929 = vmatpush1.msra.mxu0 0.0
    %930 = vmatprep.subr.mxu0 0.0
    %931 = vmatpush1.msra.mxu0 0.0
    %932 = vmatprep.subr.mxu0 0.0
    %933 = vmatpush1.msra.mxu0 0.0
    %934 = vmatprep.subr.mxu0 0.0
    %935 = vmatpush1.msra.mxu0 0.0
    %936 = vmatprep.subr.mxu0 0.0
    %937 = vmatpush1.msra.mxu0 0.0
    %938 = vmatprep.subr.mxu0 0.0
    %939 = vmatpush1.msra.mxu0 0.0
    %940 = vmatprep.subr.mxu0 0.0
    %941 = vmatpush1.msra.mxu0 0.0
    %942 = vmatprep.subr.mxu0 0.0
    %943 = vmatpush1.msra.mxu0 0.0
    %944 = vmatprep.subr.mxu0 0.0
    %945 = vmatpush1.msra.mxu0 0.0
    %946 = vmatprep.subr.mxu0 0.0
    %947 = vmatpush1.msra.mxu0 0.0
    %948 = vmatprep.subr.mxu0 0.0
    %949 = vmatpush1.msra.mxu0 0.0
    %950 = vmatprep.subr.mxu0 0.0
    %951 = vmatpush1.msra.mxu0 0.0
    %952 = vmatprep.subr.mxu0 0.0
    %953 = vmatpush1.msra.mxu0 0.0
    %954 = vmatprep.subr.mxu0 0.0
    %955 = vmatpush1.msra.mxu0 0.0
    %956 = vmatprep.subr.mxu0 0.0
    %957 = vmatpush1.msra.mxu0 0.0
    %958 = vmatprep.subr.mxu0 0.0
    %959 = vmatpush1.msra.mxu0 0.0
    %960 = vmatprep.mubr.f32.mxu0 0.0
    %961 = vmatmul.mubr.f32.gmra.mrb[0].mxu0 %v894
    %v962 = vpop.f32.mrb[0].mxu0
    %v963 = vadd.f32 0.0, %v962
    %v964 = vpop.f32.mrb[0].mxu0
    %965 = vdwg.mxu0
    %v966 = vadd.f32 %v893, %v963
    %v967 = vxor.u32 %v966, 2147483648
    %v968 = vmul.f32 %v967, 1.442695
    %v969 = vpow.pop %v968
    %v970 = vadd.f32 %v969, 1.0
    %v971 = vrcp.pop %v970
    %v972 = vmul.f32 1.0, %v971
    %v973 = vadd.f32 %v963, %v446
    %975 = vrot.lane.b32.xlu0 %v973, 64
    %v976 = vpop.permute.xlu0 %975
    %v978 = vmul.f32 %v972, %v976
    %980 = vrot.lane.b32.xlu0 %v978, 64
    %v981 = vpop.permute.xlu0 %980
    %v983 = vadd.f32 %v893, %v981
    %v984 = vtanh.pop %v983
    %v985 = vsub.f32 1.0, %v972
    %987 = vrot.lane.b32.xlu0 %v984, 96
    %v988 = vpop.permute.xlu0 %987
    %v990 = vmul.f32 %v985, %v988
    %v991 = vmul.f32 %v972, %v887
    %v992 = vadd.f32 %v990, %v991
    %994 = vrot.lane.b32.xlu0 %v992, 96
    %v995 = vpop.permute.xlu0 %994
    %997 = vst.msk [vmem:[#allocation4 + $0x28] sm:$0xff] %vm359, %v995
    %v998 = vld [vmem:[#allocation3 + $0x60] sm:$0xff]
    %v999 = vsel %vm359, %v995, 0
    %1001 = vmatprep.subr.mxu0 0.0
    %1002 = vmatpush1.msra.mxu0 %v348
    %1003 = vmatprep.subr.mxu0 0.0
    %1004 = vmatpush1.msra.mxu0 %v349
    %1005 = vmatprep.subr.mxu0 0.0
    %1006 = vmatpush1.msra.mxu0 %v350
    %1007 = vmatprep.subr.mxu0 0.0
    %1008 = vmatpush1.msra.mxu0 %v351
    %1009 = vmatprep.subr.mxu0 0.0
    %1010 = vmatpush1.msra.mxu0 0.0
    %1011 = vmatprep.subr.mxu0 0.0
    %1012 = vmatpush1.msra.mxu0 0.0
    %1013 = vmatprep.subr.mxu0 0.0
    %1014 = vmatpush1.msra.mxu0 0.0
    %1015 = vmatprep.subr.mxu0 0.0
    %1016 = vmatpush1.msra.mxu0 0.0
    %1017 = vmatprep.subr.mxu0 0.0
    %1018 = vmatpush1.msra.mxu0 0.0
    %1019 = vmatprep.subr.mxu0 0.0
    %1020 = vmatpush1.msra.mxu0 0.0
    %1021 = vmatprep.subr.mxu0 0.0
    %1022 = vmatpush1.msra.mxu0 0.0
    %1023 = vmatprep.subr.mxu0 0.0
    %1024 = vmatpush1.msra.mxu0 0.0
    %1025 = vmatprep.subr.mxu0 0.0
    %1026 = vmatpush1.msra.mxu0 0.0
    %1027 = vmatprep.subr.mxu0 0.0
    %1028 = vmatpush1.msra.mxu0 0.0
    %1029 = vmatprep.subr.mxu0 0.0
    %1030 = vmatpush1.msra.mxu0 0.0
    %1031 = vmatprep.subr.mxu0 0.0
    %1032 = vmatpush1.msra.mxu0 0.0
    %1033 = vmatprep.subr.mxu0 0.0
    %1034 = vmatpush1.msra.mxu0 0.0
    %1035 = vmatprep.subr.mxu0 0.0
    %1036 = vmatpush1.msra.mxu0 0.0
    %1037 = vmatprep.subr.mxu0 0.0
    %1038 = vmatpush1.msra.mxu0 0.0
    %1039 = vmatprep.subr.mxu0 0.0
    %1040 = vmatpush1.msra.mxu0 0.0
    %1041 = vmatprep.subr.mxu0 0.0
    %1042 = vmatpush1.msra.mxu0 0.0
    %1043 = vmatprep.subr.mxu0 0.0
    %1044 = vmatpush1.msra.mxu0 0.0
    %1045 = vmatprep.subr.mxu0 0.0
    %1046 = vmatpush1.msra.mxu0 0.0
    %1047 = vmatprep.subr.mxu0 0.0
    %1048 = vmatpush1.msra.mxu0 0.0
    %1049 = vmatprep.subr.mxu0 0.0
    %1050 = vmatpush1.msra.mxu0 0.0
    %1051 = vmatprep.subr.mxu0 0.0
    %1052 = vmatpush1.msra.mxu0 0.0
    %1053 = vmatprep.subr.mxu0 0.0
    %1054 = vmatpush1.msra.mxu0 0.0
    %1055 = vmatprep.subr.mxu0 0.0
    %1056 = vmatpush1.msra.mxu0 0.0
    %1057 = vmatprep.subr.mxu0 0.0
    %1058 = vmatpush1.msra.mxu0 0.0
    %1059 = vmatprep.subr.mxu0 0.0
    %1060 = vmatpush1.msra.mxu0 0.0
    %1061 = vmatprep.subr.mxu0 0.0
    %1062 = vmatpush1.msra.mxu0 0.0
    %1063 = vmatprep.subr.mxu0 0.0
    %1064 = vmatpush1.msra.mxu0 0.0
    %1065 = vmatprep.mubr.f32.mxu0 0.0
    %1066 = vmatmul.mubr.f32.gmra.mrb[0].mxu0 %v999
    %v1067 = vpop.f32.mrb[0].mxu0
    %v1068 = vadd.f32 0.0, %v1067
    %v1069 = vpop.f32.mrb[0].mxu0
    %1070 = vdwg.mxu0
    %v1071 = vadd.f32 %v998, %v1068
    %v1072 = vxor.u32 %v1071, 2147483648
    %v1073 = vmul.f32 %v1072, 1.442695
    %v1074 = vpow.pop %v1073
    %v1075 = vadd.f32 %v1074, 1.0
    %v1076 = vrcp.pop %v1075
    %v1077 = vmul.f32 1.0, %v1076
    %v1078 = vadd.f32 %v1068, %v446
    %1080 = vrot.lane.b32.xlu0 %v1078, 64
    %v1081 = vpop.permute.xlu0 %1080
    %v1083 = vmul.f32 %v1077, %v1081
    %1085 = vrot.lane.b32.xlu0 %v1083, 64
    %v1086 = vpop.permute.xlu0 %1085
    %v1088 = vadd.f32 %v998, %v1086
    %v1089 = vtanh.pop %v1088
    %v1090 = vsub.f32 1.0, %v1077
    %1092 = vrot.lane.b32.xlu0 %v1089, 96
    %v1093 = vpop.permute.xlu0 %1092
    %v1095 = vmul.f32 %v1090, %v1093
    %v1096 = vmul.f32 %v1077, %v992
    %v1097 = vadd.f32 %v1095, %v1096
    %1099 = vrot.lane.b32.xlu0 %v1097, 96
    %v1100 = vpop.permute.xlu0 %1099
    %1102 = vst.msk [vmem:[#allocation4 + $0x30] sm:$0xff] %vm359, %v1100
    %v1103 = vld [vmem:[#allocation3 + $0x70] sm:$0xff]
    %v1104 = vsel %vm359, %v1100, 0
    %1106 = vmatprep.subr.mxu0 0.0
    %1107 = vmatpush1.msra.mxu0 %v348
    %1108 = vmatprep.subr.mxu0 0.0
    %1109 = vmatpush1.msra.mxu0 %v349
    %1110 = vmatprep.subr.mxu0 0.0
    %1111 = vmatpush1.msra.mxu0 %v350
    %1112 = vmatprep.subr.mxu0 0.0
    %1113 = vmatpush1.msra.mxu0 %v351
    %1114 = vmatprep.subr.mxu0 0.0
    %1115 = vmatpush1.msra.mxu0 0.0
    %1116 = vmatprep.subr.mxu0 0.0
    %1117 = vmatpush1.msra.mxu0 0.0
    %1118 = vmatprep.subr.mxu0 0.0
    %1119 = vmatpush1.msra.mxu0 0.0
    %1120 = vmatprep.subr.mxu0 0.0
    %1121 = vmatpush1.msra.mxu0 0.0
    %1122 = vmatprep.subr.mxu0 0.0
    %1123 = vmatpush1.msra.mxu0 0.0
    %1124 = vmatprep.subr.mxu0 0.0
    %1125 = vmatpush1.msra.mxu0 0.0
    %1126 = vmatprep.subr.mxu0 0.0
    %1127 = vmatpush1.msra.mxu0 0.0
    %1128 = vmatprep.subr.mxu0 0.0
    %1129 = vmatpush1.msra.mxu0 0.0
    %1130 = vmatprep.subr.mxu0 0.0
    %1131 = vmatpush1.msra.mxu0 0.0
    %1132 = vmatprep.subr.mxu0 0.0
    %1133 = vmatpush1.msra.mxu0 0.0
    %1134 = vmatprep.subr.mxu0 0.0
    %1135 = vmatpush1.msra.mxu0 0.0
    %1136 = vmatprep.subr.mxu0 0.0
    %1137 = vmatpush1.msra.mxu0 0.0
    %1138 = vmatprep.subr.mxu0 0.0
    %1139 = vmatpush1.msra.mxu0 0.0
    %1140 = vmatprep.subr.mxu0 0.0
    %1141 = vmatpush1.msra.mxu0 0.0
    %1142 = vmatprep.subr.mxu0 0.0
    %1143 = vmatpush1.msra.mxu0 0.0
    %1144 = vmatprep.subr.mxu0 0.0
    %1145 = vmatpush1.msra.mxu0 0.0
    %1146 = vmatprep.subr.mxu0 0.0
    %1147 = vmatpush1.msra.mxu0 0.0
    %1148 = vmatprep.subr.mxu0 0.0
    %1149 = vmatpush1.msra.mxu0 0.0
    %1150 = vmatprep.subr.mxu0 0.0
    %1151 = vmatpush1.msra.mxu0 0.0
    %1152 = vmatprep.subr.mxu0 0.0
    %1153 = vmatpush1.msra.mxu0 0.0
    %1154 = vmatprep.subr.mxu0 0.0
    %1155 = vmatpush1.msra.mxu0 0.0
    %1156 = vmatprep.subr.mxu0 0.0
    %1157 = vmatpush1.msra.mxu0 0.0
    %1158 = vmatprep.subr.mxu0 0.0
    %1159 = vmatpush1.msra.mxu0 0.0
    %1160 = vmatprep.subr.mxu0 0.0
    %1161 = vmatpush1.msra.mxu0 0.0
    %1162 = vmatprep.subr.mxu0 0.0
    %1163 = vmatpush1.msra.mxu0 0.0
    %1164 = vmatprep.subr.mxu0 0.0
    %1165 = vmatpush1.msra.mxu0 0.0
    %1166 = vmatprep.subr.mxu0 0.0
    %1167 = vmatpush1.msra.mxu0 0.0
    %1168 = vmatprep.subr.mxu0 0.0
    %1169 = vmatpush1.msra.mxu0 0.0
    %1170 = vmatprep.mubr.f32.mxu0 0.0
    %1171 = vmatmul.mubr.f32.gmra.mrb[0].mxu0 %v1104
    %v1172 = vpop.f32.mrb[0].mxu0
    %v1173 = vadd.f32 0.0, %v1172
    %v1174 = vpop.f32.mrb[0].mxu0
    %1175 = vdwg.mxu0
    %v1176 = vadd.f32 %v1103, %v1173
    %v1177 = vxor.u32 %v1176, 2147483648
    %v1178 = vmul.f32 %v1177, 1.442695
    %v1179 = vpow.pop %v1178
    %v1180 = vadd.f32 %v1179, 1.0
    %v1181 = vrcp.pop %v1180
    %v1182 = vmul.f32 1.0, %v1181
    %v1183 = vadd.f32 %v1173, %v446
    %1185 = vrot.lane.b32.xlu0 %v1183, 64
    %v1186 = vpop.permute.xlu0 %1185
    %v1188 = vmul.f32 %v1182, %v1186
    %1190 = vrot.lane.b32.xlu0 %v1188, 64
    %v1191 = vpop.permute.xlu0 %1190
    %v1193 = vadd.f32 %v1103, %v1191
    %v1194 = vtanh.pop %v1193
    %v1195 = vsub.f32 1.0, %v1182
    %1197 = vrot.lane.b32.xlu0 %v1194, 96
    %v1198 = vpop.permute.xlu0 %1197
    %v1200 = vmul.f32 %v1195, %v1198
    %v1201 = vmul.f32 %v1182, %v1097
    %v1202 = vadd.f32 %v1200, %v1201
    %1204 = vrot.lane.b32.xlu0 %v1202, 96
    %v1205 = vpop.permute.xlu0 %1204
    %1207 = vst.msk [vmem:[#allocation4 + $0x38] sm:$0xff] %vm359, %v1205
    %v1208 = vld [vmem:[#allocation3 + $0x78] sm:$0xff]
    %1209 = vmatprep.subr.mxu0 0.0
    %1210 = vmatpush1.msra.mxu0 %v352
    %1211 = vmatprep.subr.mxu0 0.0
    %1212 = vmatpush1.msra.mxu0 %v353
    %1213 = vmatprep.subr.mxu0 0.0
    %1214 = vmatpush1.msra.mxu0 %v354
    %1215 = vmatprep.subr.mxu0 0.0
    %1216 = vmatpush1.msra.mxu0 %v355
    %1217 = vmatprep.subr.mxu0 0.0
    %1218 = vmatpush1.msra.mxu0 0.0
    %1219 = vmatprep.subr.mxu0 0.0
    %1220 = vmatpush1.msra.mxu0 0.0
    %1221 = vmatprep.subr.mxu0 0.0
    %1222 = vmatpush1.msra.mxu0 0.0
    %1223 = vmatprep.subr.mxu0 0.0
    %1224 = vmatpush1.msra.mxu0 0.0
    %1225 = vmatprep.subr.mxu0 0.0
    %1226 = vmatpush1.msra.mxu0 0.0
    %1227 = vmatprep.subr.mxu0 0.0
    %1228 = vmatpush1.msra.mxu0 0.0
    %1229 = vmatprep.subr.mxu0 0.0
    %1230 = vmatpush1.msra.mxu0 0.0
    %1231 = vmatprep.subr.mxu0 0.0
    %1232 = vmatpush1.msra.mxu0 0.0
    %1233 = vmatprep.subr.mxu0 0.0
    %1234 = vmatpush1.msra.mxu0 0.0
    %1235 = vmatprep.subr.mxu0 0.0
    %1236 = vmatpush1.msra.mxu0 0.0
    %1237 = vmatprep.subr.mxu0 0.0
    %1238 = vmatpush1.msra.mxu0 0.0
    %1239 = vmatprep.subr.mxu0 0.0
    %1240 = vmatpush1.msra.mxu0 0.0
    %1241 = vmatprep.subr.mxu0 0.0
    %1242 = vmatpush1.msra.mxu0 0.0
    %1243 = vmatprep.subr.mxu0 0.0
    %1244 = vmatpush1.msra.mxu0 0.0
    %1245 = vmatprep.subr.mxu0 0.0
    %1246 = vmatpush1.msra.mxu0 0.0
    %1247 = vmatprep.subr.mxu0 0.0
    %1248 = vmatpush1.msra.mxu0 0.0
    %1249 = vmatprep.subr.mxu0 0.0
    %1250 = vmatpush1.msra.mxu0 0.0
    %1251 = vmatprep.subr.mxu0 0.0
    %1252 = vmatpush1.msra.mxu0 0.0
    %1253 = vmatprep.subr.mxu0 0.0
    %1254 = vmatpush1.msra.mxu0 0.0
    %1255 = vmatprep.subr.mxu0 0.0
    %1256 = vmatpush1.msra.mxu0 0.0
    %1257 = vmatprep.subr.mxu0 0.0
    %1258 = vmatpush1.msra.mxu0 0.0
    %1259 = vmatprep.subr.mxu0 0.0
    %1260 = vmatpush1.msra.mxu0 0.0
    %1261 = vmatprep.subr.mxu0 0.0
    %1262 = vmatpush1.msra.mxu0 0.0
    %1263 = vmatprep.subr.mxu0 0.0
    %1264 = vmatpush1.msra.mxu0 0.0
    %1265 = vmatprep.subr.mxu0 0.0
    %1266 = vmatpush1.msra.mxu0 0.0
    %1267 = vmatprep.subr.mxu0 0.0
    %1268 = vmatpush1.msra.mxu0 0.0
    %1269 = vmatprep.subr.mxu0 0.0
    %1270 = vmatpush1.msra.mxu0 0.0
    %1271 = vmatprep.subr.mxu0 0.0
    %1272 = vmatpush1.msra.mxu0 0.0
    %1273 = vmatprep.mubr.f32.mxu0 0.0
    %1274 = vmatmul.mubr.f32.gmra.mrb[0].mxu0 %v361
    %v1275 = vpop.f32.mrb[0].mxu0
    %v1276 = vadd.f32 0.0, %v1275
    %v1277 = vpop.f32.mrb[0].mxu0
    %1278 = vdwg.mxu0
    %v1279 = vadd.f32 %v1208, %v1276
    %v1280 = vxor.u32 %v1279, 2147483648
    %v1281 = vmul.f32 %v1280, 1.442695
    %v1282 = vpow.pop %v1281
    %v1283 = vadd.f32 %v1282, 1.0
    %v1284 = vrcp.pop %v1283
    %v1285 = vmul.f32 1.0, %v1284
    %v1287 = vlaneseq
    %v1288 = vshrl.u32 %v1287, 7
    %v1289 = vsub.s32 0, %v1288
    %v1290 = vrot.slane %v357, %v1289
    %1291 = vrot.lane.b32.xlu0 %v1290, 64
    %v1292 = vpop.permute.xlu0 %1291
    %v1294 = vadd.f32 %v1276, %v1292
    %1296 = vrot.lane.b32.xlu0 %v1294, 64
    %v1297 = vpop.permute.xlu0 %1296
    %v1299 = vmul.f32 %v1285, %v1297
    %1301 = vrot.lane.b32.xlu0 %v1299, 64
    %v1302 = vpop.permute.xlu0 %1301
    %v1304 = vadd.f32 %v1208, %v1302
    %v1305 = vtanh.pop %v1304
    %v1306 = vsub.f32 1.0, %v1285
    %1308 = vrot.lane.b32.xlu0 %v1305, 96
    %v1309 = vpop.permute.xlu0 %1308
    %v1311 = vmul.f32 %v1306, %v1309
    %v1312 = vmul.f32 %v1285, 0.0
    %v1313 = vadd.f32 %v1311, %v1312
    %1315 = vrot.lane.b32.xlu0 %v1313, 96
    %v1316 = vpop.permute.xlu0 %1315
    %s1318 = scalar_lea.vmem [#allocation4], 64
    %1319 = vst.msk [vmem:[%s1318 + $0x38] sm:$0xff] %vm359, %v1316
    %v1320 = vld [vmem:[#allocation3 + $0x68] sm:$0xff]
    %v1321 = vsel %vm359, %v1316, 0
    %1323 = vmatprep.subr.mxu0 0.0
    %1324 = vmatpush1.msra.mxu0 %v352
    %1325 = vmatprep.subr.mxu0 0.0
    %1326 = vmatpush1.msra.mxu0 %v353
    %1327 = vmatprep.subr.mxu0 0.0
    %1328 = vmatpush1.msra.mxu0 %v354
    %1329 = vmatprep.subr.mxu0 0.0
    %1330 = vmatpush1.msra.mxu0 %v355
    %1331 = vmatprep.subr.mxu0 0.0
    %1332 = vmatpush1.msra.mxu0 0.0
    %1333 = vmatprep.subr.mxu0 0.0
    %1334 = vmatpush1.msra.mxu0 0.0
    %1335 = vmatprep.subr.mxu0 0.0
    %1336 = vmatpush1.msra.mxu0 0.0
    %1337 = vmatprep.subr.mxu0 0.0
    %1338 = vmatpush1.msra.mxu0 0.0
    %1339 = vmatprep.subr.mxu0 0.0
    %1340 = vmatpush1.msra.mxu0 0.0
    %1341 = vmatprep.subr.mxu0 0.0
    %1342 = vmatpush1.msra.mxu0 0.0
    %1343 = vmatprep.subr.mxu0 0.0
    %1344 = vmatpush1.msra.mxu0 0.0
    %1345 = vmatprep.subr.mxu0 0.0
    %1346 = vmatpush1.msra.mxu0 0.0
    %1347 = vmatprep.subr.mxu0 0.0
    %1348 = vmatpush1.msra.mxu0 0.0
    %1349 = vmatprep.subr.mxu0 0.0
    %1350 = vmatpush1.msra.mxu0 0.0
    %1351 = vmatprep.subr.mxu0 0.0
    %1352 = vmatpush1.msra.mxu0 0.0
    %1353 = vmatprep.subr.mxu0 0.0
    %1354 = vmatpush1.msra.mxu0 0.0
    %1355 = vmatprep.subr.mxu0 0.0
    %1356 = vmatpush1.msra.mxu0 0.0
    %1357 = vmatprep.subr.mxu0 0.0
    %1358 = vmatpush1.msra.mxu0 0.0
    %1359 = vmatprep.subr.mxu0 0.0
    %1360 = vmatpush1.msra.mxu0 0.0
    %1361 = vmatprep.subr.mxu0 0.0
    %1362 = vmatpush1.msra.mxu0 0.0
    %1363 = vmatprep.subr.mxu0 0.0
    %1364 = vmatpush1.msra.mxu0 0.0
    %1365 = vmatprep.subr.mxu0 0.0
    %1366 = vmatpush1.msra.mxu0 0.0
    %1367 = vmatprep.subr.mxu0 0.0
    %1368 = vmatpush1.msra.mxu0 0.0
    %1369 = vmatprep.subr.mxu0 0.0
    %1370 = vmatpush1.msra.mxu0 0.0
    %1371 = vmatprep.subr.mxu0 0.0
    %1372 = vmatpush1.msra.mxu0 0.0
    %1373 = vmatprep.subr.mxu0 0.0
    %1374 = vmatpush1.msra.mxu0 0.0
    %1375 = vmatprep.subr.mxu0 0.0
    %1376 = vmatpush1.msra.mxu0 0.0
    %1377 = vmatprep.subr.mxu0 0.0
    %1378 = vmatpush1.msra.mxu0 0.0
    %1379 = vmatprep.subr.mxu0 0.0
    %1380 = vmatpush1.msra.mxu0 0.0
    %1381 = vmatprep.subr.mxu0 0.0
    %1382 = vmatpush1.msra.mxu0 0.0
    %1383 = vmatprep.subr.mxu0 0.0
    %1384 = vmatpush1.msra.mxu0 0.0
    %1385 = vmatprep.subr.mxu0 0.0
    %1386 = vmatpush1.msra.mxu0 0.0
    %1387 = vmatprep.mubr.f32.mxu0 0.0
    %1388 = vmatmul.mubr.f32.gmra.mrb[0].mxu0 %v1321
    %v1389 = vpop.f32.mrb[0].mxu0
    %v1390 = vadd.f32 0.0, %v1389
    %v1391 = vpop.f32.mrb[0].mxu0
    %1392 = vdwg.mxu0
    %v1393 = vadd.f32 %v1320, %v1390
    %v1394 = vxor.u32 %v1393, 2147483648
    %v1395 = vmul.f32 %v1394, 1.442695
    %v1396 = vpow.pop %v1395
    %v1397 = vadd.f32 %v1396, 1.0
    %v1398 = vrcp.pop %v1397
    %v1399 = vmul.f32 1.0, %v1398
    %v1400 = vadd.f32 %v1390, %v1292
    %1402 = vrot.lane.b32.xlu0 %v1400, 64
    %v1403 = vpop.permute.xlu0 %1402
    %v1405 = vmul.f32 %v1399, %v1403
    %1407 = vrot.lane.b32.xlu0 %v1405, 64
    %v1408 = vpop.permute.xlu0 %1407
    %v1410 = vadd.f32 %v1320, %v1408
    %v1411 = vtanh.pop %v1410
    %v1412 = vsub.f32 1.0, %v1399
    %1414 = vrot.lane.b32.xlu0 %v1411, 96
    %v1415 = vpop.permute.xlu0 %1414
    %v1417 = vmul.f32 %v1412, %v1415
    %v1418 = vmul.f32 %v1399, %v1313
    %v1419 = vadd.f32 %v1417, %v1418
    %1421 = vrot.lane.b32.xlu0 %v1419, 96
    %v1422 = vpop.permute.xlu0 %1421
    %1424 = vst.msk [vmem:[%s1318 + $0x30] sm:$0xff] %vm359, %v1422
    %v1425 = vld [vmem:[#allocation3 + $0x58] sm:$0xff]
    %v1426 = vsel %vm359, %v1422, 0
    %1428 = vmatprep.subr.mxu0 0.0
    %1429 = vmatpush1.msra.mxu0 %v352
    %1430 = vmatprep.subr.mxu0 0.0
    %1431 = vmatpush1.msra.mxu0 %v353
    %1432 = vmatprep.subr.mxu0 0.0
    %1433 = vmatpush1.msra.mxu0 %v354
    %1434 = vmatprep.subr.mxu0 0.0
    %1435 = vmatpush1.msra.mxu0 %v355
    %1436 = vmatprep.subr.mxu0 0.0
    %1437 = vmatpush1.msra.mxu0 0.0
    %1438 = vmatprep.subr.mxu0 0.0
    %1439 = vmatpush1.msra.mxu0 0.0
    %1440 = vmatprep.subr.mxu0 0.0
    %1441 = vmatpush1.msra.mxu0 0.0
    %1442 = vmatprep.subr.mxu0 0.0
    %1443 = vmatpush1.msra.mxu0 0.0
    %1444 = vmatprep.subr.mxu0 0.0
    %1445 = vmatpush1.msra.mxu0 0.0
    %1446 = vmatprep.subr.mxu0 0.0
    %1447 = vmatpush1.msra.mxu0 0.0
    %1448 = vmatprep.subr.mxu0 0.0
    %1449 = vmatpush1.msra.mxu0 0.0
    %1450 = vmatprep.subr.mxu0 0.0
    %1451 = vmatpush1.msra.mxu0 0.0
    %1452 = vmatprep.subr.mxu0 0.0
    %1453 = vmatpush1.msra.mxu0 0.0
    %1454 = vmatprep.subr.mxu0 0.0
    %1455 = vmatpush1.msra.mxu0 0.0
    %1456 = vmatprep.subr.mxu0 0.0
    %1457 = vmatpush1.msra.mxu0 0.0
    %1458 = vmatprep.subr.mxu0 0.0
    %1459 = vmatpush1.msra.mxu0 0.0
    %1460 = vmatprep.subr.mxu0 0.0
    %1461 = vmatpush1.msra.mxu0 0.0
    %1462 = vmatprep.subr.mxu0 0.0
    %1463 = vmatpush1.msra.mxu0 0.0
    %1464 = vmatprep.subr.mxu0 0.0
    %1465 = vmatpush1.msra.mxu0 0.0
    %1466 = vmatprep.subr.mxu0 0.0
    %1467 = vmatpush1.msra.mxu0 0.0
    %1468 = vmatprep.subr.mxu0 0.0
    %1469 = vmatpush1.msra.mxu0 0.0
    %1470 = vmatprep.subr.mxu0 0.0
    %1471 = vmatpush1.msra.mxu0 0.0
    %1472 = vmatprep.subr.mxu0 0.0
    %1473 = vmatpush1.msra.mxu0 0.0
    %1474 = vmatprep.subr.mxu0 0.0
    %1475 = vmatpush1.msra.mxu0 0.0
    %1476 = vmatprep.subr.mxu0 0.0
    %1477 = vmatpush1.msra.mxu0 0.0
    %1478 = vmatprep.subr.mxu0 0.0
    %1479 = vmatpush1.msra.mxu0 0.0
    %1480 = vmatprep.subr.mxu0 0.0
    %1481 = vmatpush1.msra.mxu0 0.0
    %1482 = vmatprep.subr.mxu0 0.0
    %1483 = vmatpush1.msra.mxu0 0.0
    %1484 = vmatprep.subr.mxu0 0.0
    %1485 = vmatpush1.msra.mxu0 0.0
    %1486 = vmatprep.subr.mxu0 0.0
    %1487 = vmatpush1.msra.mxu0 0.0
    %1488 = vmatprep.subr.mxu0 0.0
    %1489 = vmatpush1.msra.mxu0 0.0
    %1490 = vmatprep.subr.mxu0 0.0
    %1491 = vmatpush1.msra.mxu0 0.0
    %1492 = vmatprep.mubr.f32.mxu0 0.0
    %1493 = vmatmul.mubr.f32.gmra.mrb[0].mxu0 %v1426
    %v1494 = vpop.f32.mrb[0].mxu0
    %v1495 = vadd.f32 0.0, %v1494
    %v1496 = vpop.f32.mrb[0].mxu0
    %1497 = vdwg.mxu0
    %v1498 = vadd.f32 %v1425, %v1495
    %v1499 = vxor.u32 %v1498, 2147483648
    %v1500 = vmul.f32 %v1499, 1.442695
    %v1501 = vpow.pop %v1500
    %v1502 = vadd.f32 %v1501, 1.0
    %v1503 = vrcp.pop %v1502
    %v1504 = vmul.f32 1.0, %v1503
    %v1505 = vadd.f32 %v1495, %v1292
    %1507 = vrot.lane.b32.xlu0 %v1505, 64
    %v1508 = vpop.permute.xlu0 %1507
    %v1510 = vmul.f32 %v1504, %v1508
    %1512 = vrot.lane.b32.xlu0 %v1510, 64
    %v1513 = vpop.permute.xlu0 %1512
    %v1515 = vadd.f32 %v1425, %v1513
    %v1516 = vtanh.pop %v1515
    %v1517 = vsub.f32 1.0, %v1504
    %1519 = vrot.lane.b32.xlu0 %v1516, 96
    %v1520 = vpop.permute.xlu0 %1519
    %v1522 = vmul.f32 %v1517, %v1520
    %v1523 = vmul.f32 %v1504, %v1419
    %v1524 = vadd.f32 %v1522, %v1523
    %1526 = vrot.lane.b32.xlu0 %v1524, 96
    %v1527 = vpop.permute.xlu0 %1526
    %1529 = vst.msk [vmem:[%s1318 + $0x28] sm:$0xff] %vm359, %v1527
    %v1530 = vld [vmem:[#allocation3 + $0x48] sm:$0xff]
    %v1531 = vsel %vm359, %v1527, 0
    %1533 = vmatprep.subr.mxu0 0.0
    %1534 = vmatpush1.msra.mxu0 %v352
    %1535 = vmatprep.subr.mxu0 0.0
    %1536 = vmatpush1.msra.mxu0 %v353
    %1537 = vmatprep.subr.mxu0 0.0
    %1538 = vmatpush1.msra.mxu0 %v354
    %1539 = vmatprep.subr.mxu0 0.0
    %1540 = vmatpush1.msra.mxu0 %v355
    %1541 = vmatprep.subr.mxu0 0.0
    %1542 = vmatpush1.msra.mxu0 0.0
    %1543 = vmatprep.subr.mxu0 0.0
    %1544 = vmatpush1.msra.mxu0 0.0
    %1545 = vmatprep.subr.mxu0 0.0
    %1546 = vmatpush1.msra.mxu0 0.0
    %1547 = vmatprep.subr.mxu0 0.0
    %1548 = vmatpush1.msra.mxu0 0.0
    %1549 = vmatprep.subr.mxu0 0.0
    %1550 = vmatpush1.msra.mxu0 0.0
    %1551 = vmatprep.subr.mxu0 0.0
    %1552 = vmatpush1.msra.mxu0 0.0
    %1553 = vmatprep.subr.mxu0 0.0
    %1554 = vmatpush1.msra.mxu0 0.0
    %1555 = vmatprep.subr.mxu0 0.0
    %1556 = vmatpush1.msra.mxu0 0.0
    %1557 = vmatprep.subr.mxu0 0.0
    %1558 = vmatpush1.msra.mxu0 0.0
    %1559 = vmatprep.subr.mxu0 0.0
    %1560 = vmatpush1.msra.mxu0 0.0
    %1561 = vmatprep.subr.mxu0 0.0
    %1562 = vmatpush1.msra.mxu0 0.0
    %1563 = vmatprep.subr.mxu0 0.0
    %1564 = vmatpush1.msra.mxu0 0.0
    %1565 = vmatprep.subr.mxu0 0.0
    %1566 = vmatpush1.msra.mxu0 0.0
    %1567 = vmatprep.subr.mxu0 0.0
    %1568 = vmatpush1.msra.mxu0 0.0
    %1569 = vmatprep.subr.mxu0 0.0
    %1570 = vmatpush1.msra.mxu0 0.0
    %1571 = vmatprep.subr.mxu0 0.0
    %1572 = vmatpush1.msra.mxu0 0.0
    %1573 = vmatprep.subr.mxu0 0.0
    %1574 = vmatpush1.msra.mxu0 0.0
    %1575 = vmatprep.subr.mxu0 0.0
    %1576 = vmatpush1.msra.mxu0 0.0
    %1577 = vmatprep.subr.mxu0 0.0
    %1578 = vmatpush1.msra.mxu0 0.0
    %1579 = vmatprep.subr.mxu0 0.0
    %1580 = vmatpush1.msra.mxu0 0.0
    %1581 = vmatprep.subr.mxu0 0.0
    %1582 = vmatpush1.msra.mxu0 0.0
    %1583 = vmatprep.subr.mxu0 0.0
    %1584 = vmatpush1.msra.mxu0 0.0
    %1585 = vmatprep.subr.mxu0 0.0
    %1586 = vmatpush1.msra.mxu0 0.0
    %1587 = vmatprep.subr.mxu0 0.0
    %1588 = vmatpush1.msra.mxu0 0.0
    %1589 = vmatprep.subr.mxu0 0.0
    %1590 = vmatpush1.msra.mxu0 0.0
    %1591 = vmatprep.subr.mxu0 0.0
    %1592 = vmatpush1.msra.mxu0 0.0
    %1593 = vmatprep.subr.mxu0 0.0
    %1594 = vmatpush1.msra.mxu0 0.0
    %1595 = vmatprep.subr.mxu0 0.0
    %1596 = vmatpush1.msra.mxu0 0.0
    %1597 = vmatprep.mubr.f32.mxu0 0.0
    %1598 = vmatmul.mubr.f32.gmra.mrb[0].mxu0 %v1531
    %v1599 = vpop.f32.mrb[0].mxu0
    %v1600 = vadd.f32 0.0, %v1599
    %v1601 = vpop.f32.mrb[0].mxu0
    %1602 = vdwg.mxu0
    %v1603 = vadd.f32 %v1530, %v1600
    %v1604 = vxor.u32 %v1603, 2147483648
    %v1605 = vmul.f32 %v1604, 1.442695
    %v1606 = vpow.pop %v1605
    %v1607 = vadd.f32 %v1606, 1.0
    %v1608 = vrcp.pop %v1607
    %v1609 = vmul.f32 1.0, %v1608
    %v1610 = vadd.f32 %v1600, %v1292
    %1612 = vrot.lane.b32.xlu0 %v1610, 64
    %v1613 = vpop.permute.xlu0 %1612
    %v1615 = vmul.f32 %v1609, %v1613
    %1617 = vrot.lane.b32.xlu0 %v1615, 64
    %v1618 = vpop.permute.xlu0 %1617
    %v1620 = vadd.f32 %v1530, %v1618
    %v1621 = vtanh.pop %v1620
    %v1622 = vsub.f32 1.0, %v1609
    %1624 = vrot.lane.b32.xlu0 %v1621, 96
    %v1625 = vpop.permute.xlu0 %1624
    %v1627 = vmul.f32 %v1622, %v1625
    %v1628 = vmul.f32 %v1609, %v1524
    %v1629 = vadd.f32 %v1627, %v1628
    %1631 = vrot.lane.b32.xlu0 %v1629, 96
    %v1632 = vpop.permute.xlu0 %1631
    %1634 = vst.msk [vmem:[%s1318 + $0x20] sm:$0xff] %vm359, %v1632
    %v1635 = vld [vmem:[#allocation3 + $0x38] sm:$0xff]
    %v1636 = vsel %vm359, %v1632, 0
    %1638 = vmatprep.subr.mxu0 0.0
    %1639 = vmatpush1.msra.mxu0 %v352
    %1640 = vmatprep.subr.mxu0 0.0
    %1641 = vmatpush1.msra.mxu0 %v353
    %1642 = vmatprep.subr.mxu0 0.0
    %1643 = vmatpush1.msra.mxu0 %v354
    %1644 = vmatprep.subr.mxu0 0.0
    %1645 = vmatpush1.msra.mxu0 %v355
    %1646 = vmatprep.subr.mxu0 0.0
    %1647 = vmatpush1.msra.mxu0 0.0
    %1648 = vmatprep.subr.mxu0 0.0
    %1649 = vmatpush1.msra.mxu0 0.0
    %1650 = vmatprep.subr.mxu0 0.0
    %1651 = vmatpush1.msra.mxu0 0.0
    %1652 = vmatprep.subr.mxu0 0.0
    %1653 = vmatpush1.msra.mxu0 0.0
    %1654 = vmatprep.subr.mxu0 0.0
    %1655 = vmatpush1.msra.mxu0 0.0
    %1656 = vmatprep.subr.mxu0 0.0
    %1657 = vmatpush1.msra.mxu0 0.0
    %1658 = vmatprep.subr.mxu0 0.0
    %1659 = vmatpush1.msra.mxu0 0.0
    %1660 = vmatprep.subr.mxu0 0.0
    %1661 = vmatpush1.msra.mxu0 0.0
    %1662 = vmatprep.subr.mxu0 0.0
    %1663 = vmatpush1.msra.mxu0 0.0
    %1664 = vmatprep.subr.mxu0 0.0
    %1665 = vmatpush1.msra.mxu0 0.0
    %1666 = vmatprep.subr.mxu0 0.0
    %1667 = vmatpush1.msra.mxu0 0.0
    %1668 = vmatprep.subr.mxu0 0.0
    %1669 = vmatpush1.msra.mxu0 0.0
    %1670 = vmatprep.subr.mxu0 0.0
    %1671 = vmatpush1.msra.mxu0 0.0
    %1672 = vmatprep.subr.mxu0 0.0
    %1673 = vmatpush1.msra.mxu0 0.0
    %1674 = vmatprep.subr.mxu0 0.0
    %1675 = vmatpush1.msra.mxu0 0.0
    %1676 = vmatprep.subr.mxu0 0.0
    %1677 = vmatpush1.msra.mxu0 0.0
    %1678 = vmatprep.subr.mxu0 0.0
    %1679 = vmatpush1.msra.mxu0 0.0
    %1680 = vmatprep.subr.mxu0 0.0
    %1681 = vmatpush1.msra.mxu0 0.0
    %1682 = vmatprep.subr.mxu0 0.0
    %1683 = vmatpush1.msra.mxu0 0.0
    %1684 = vmatprep.subr.mxu0 0.0
    %1685 = vmatpush1.msra.mxu0 0.0
    %1686 = vmatprep.subr.mxu0 0.0
    %1687 = vmatpush1.msra.mxu0 0.0
    %1688 = vmatprep.subr.mxu0 0.0
    %1689 = vmatpush1.msra.mxu0 0.0
    %1690 = vmatprep.subr.mxu0 0.0
    %1691 = vmatpush1.msra.mxu0 0.0
    %1692 = vmatprep.subr.mxu0 0.0
    %1693 = vmatpush1.msra.mxu0 0.0
    %1694 = vmatprep.subr.mxu0 0.0
    %1695 = vmatpush1.msra.mxu0 0.0
    %1696 = vmatprep.subr.mxu0 0.0
    %1697 = vmatpush1.msra.mxu0 0.0
    %1698 = vmatprep.subr.mxu0 0.0
    %1699 = vmatpush1.msra.mxu0 0.0
    %1700 = vmatprep.subr.mxu0 0.0
    %1701 = vmatpush1.msra.mxu0 0.0
    %1702 = vmatprep.mubr.f32.mxu0 0.0
    %1703 = vmatmul.mubr.f32.gmra.mrb[0].mxu0 %v1636
    %v1704 = vpop.f32.mrb[0].mxu0
    %v1705 = vadd.f32 0.0, %v1704
    %v1706 = vpop.f32.mrb[0].mxu0
    %1707 = vdwg.mxu0
    %v1708 = vadd.f32 %v1635, %v1705
    %v1709 = vxor.u32 %v1708, 2147483648
    %v1710 = vmul.f32 %v1709, 1.442695
    %v1711 = vpow.pop %v1710
    %v1712 = vadd.f32 %v1711, 1.0
    %v1713 = vrcp.pop %v1712
    %v1714 = vmul.f32 1.0, %v1713
    %v1715 = vadd.f32 %v1705, %v1292
    %1717 = vrot.lane.b32.xlu0 %v1715, 64
    %v1718 = vpop.permute.xlu0 %1717
    %v1720 = vmul.f32 %v1714, %v1718
    %1722 = vrot.lane.b32.xlu0 %v1720, 64
    %v1723 = vpop.permute.xlu0 %1722
    %v1725 = vadd.f32 %v1635, %v1723
    %v1726 = vtanh.pop %v1725
    %v1727 = vsub.f32 1.0, %v1714
    %1729 = vrot.lane.b32.xlu0 %v1726, 96
    %v1730 = vpop.permute.xlu0 %1729
    %v1732 = vmul.f32 %v1727, %v1730
    %v1733 = vmul.f32 %v1714, %v1629
    %v1734 = vadd.f32 %v1732, %v1733
    %1736 = vrot.lane.b32.xlu0 %v1734, 96
    %v1737 = vpop.permute.xlu0 %1736
    %1739 = vst.msk [vmem:[%s1318 + $0x18] sm:$0xff] %vm359, %v1737
    %v1740 = vld [vmem:[#allocation3 + $0x28] sm:$0xff]
    %v1741 = vsel %vm359, %v1737, 0
    %1743 = vmatprep.subr.mxu0 0.0
    %1744 = vmatpush1.msra.mxu0 %v352
    %1745 = vmatprep.subr.mxu0 0.0
    %1746 = vmatpush1.msra.mxu0 %v353
    %1747 = vmatprep.subr.mxu0 0.0
    %1748 = vmatpush1.msra.mxu0 %v354
    %1749 = vmatprep.subr.mxu0 0.0
    %1750 = vmatpush1.msra.mxu0 %v355
    %1751 = vmatprep.subr.mxu0 0.0
    %1752 = vmatpush1.msra.mxu0 0.0
    %1753 = vmatprep.subr.mxu0 0.0
    %1754 = vmatpush1.msra.mxu0 0.0
    %1755 = vmatprep.subr.mxu0 0.0
    %1756 = vmatpush1.msra.mxu0 0.0
    %1757 = vmatprep.subr.mxu0 0.0
    %1758 = vmatpush1.msra.mxu0 0.0
    %1759 = vmatprep.subr.mxu0 0.0
    %1760 = vmatpush1.msra.mxu0 0.0
    %1761 = vmatprep.subr.mxu0 0.0
    %1762 = vmatpush1.msra.mxu0 0.0
    %1763 = vmatprep.subr.mxu0 0.0
    %1764 = vmatpush1.msra.mxu0 0.0
    %1765 = vmatprep.subr.mxu0 0.0
    %1766 = vmatpush1.msra.mxu0 0.0
    %1767 = vmatprep.subr.mxu0 0.0
    %1768 = vmatpush1.msra.mxu0 0.0
    %1769 = vmatprep.subr.mxu0 0.0
    %1770 = vmatpush1.msra.mxu0 0.0
    %1771 = vmatprep.subr.mxu0 0.0
    %1772 = vmatpush1.msra.mxu0 0.0
    %1773 = vmatprep.subr.mxu0 0.0
    %1774 = vmatpush1.msra.mxu0 0.0
    %1775 = vmatprep.subr.mxu0 0.0
    %1776 = vmatpush1.msra.mxu0 0.0
    %1777 = vmatprep.subr.mxu0 0.0
    %1778 = vmatpush1.msra.mxu0 0.0
    %1779 = vmatprep.subr.mxu0 0.0
    %1780 = vmatpush1.msra.mxu0 0.0
    %1781 = vmatprep.subr.mxu0 0.0
    %1782 = vmatpush1.msra.mxu0 0.0
    %1783 = vmatprep.subr.mxu0 0.0
    %1784 = vmatpush1.msra.mxu0 0.0
    %1785 = vmatprep.subr.mxu0 0.0
    %1786 = vmatpush1.msra.mxu0 0.0
    %1787 = vmatprep.subr.mxu0 0.0
    %1788 = vmatpush1.msra.mxu0 0.0
    %1789 = vmatprep.subr.mxu0 0.0
    %1790 = vmatpush1.msra.mxu0 0.0
    %1791 = vmatprep.subr.mxu0 0.0
    %1792 = vmatpush1.msra.mxu0 0.0
    %1793 = vmatprep.subr.mxu0 0.0
    %1794 = vmatpush1.msra.mxu0 0.0
    %1795 = vmatprep.subr.mxu0 0.0
    %1796 = vmatpush1.msra.mxu0 0.0
    %1797 = vmatprep.subr.mxu0 0.0
    %1798 = vmatpush1.msra.mxu0 0.0
    %1799 = vmatprep.subr.mxu0 0.0
    %1800 = vmatpush1.msra.mxu0 0.0
    %1801 = vmatprep.subr.mxu0 0.0
    %1802 = vmatpush1.msra.mxu0 0.0
    %1803 = vmatprep.subr.mxu0 0.0
    %1804 = vmatpush1.msra.mxu0 0.0
    %1805 = vmatprep.subr.mxu0 0.0
    %1806 = vmatpush1.msra.mxu0 0.0
    %1807 = vmatprep.mubr.f32.mxu0 0.0
    %1808 = vmatmul.mubr.f32.gmra.mrb[0].mxu0 %v1741
    %v1809 = vpop.f32.mrb[0].mxu0
    %v1810 = vadd.f32 0.0, %v1809
    %v1811 = vpop.f32.mrb[0].mxu0
    %1812 = vdwg.mxu0
    %v1813 = vadd.f32 %v1740, %v1810
    %v1814 = vxor.u32 %v1813, 2147483648
    %v1815 = vmul.f32 %v1814, 1.442695
    %v1816 = vpow.pop %v1815
    %v1817 = vadd.f32 %v1816, 1.0
    %v1818 = vrcp.pop %v1817
    %v1819 = vmul.f32 1.0, %v1818
    %v1820 = vadd.f32 %v1810, %v1292
    %1822 = vrot.lane.b32.xlu0 %v1820, 64
    %v1823 = vpop.permute.xlu0 %1822
    %v1825 = vmul.f32 %v1819, %v1823
    %1827 = vrot.lane.b32.xlu0 %v1825, 64
    %v1828 = vpop.permute.xlu0 %1827
    %v1830 = vadd.f32 %v1740, %v1828
    %v1831 = vtanh.pop %v1830
    %v1832 = vsub.f32 1.0, %v1819
    %1834 = vrot.lane.b32.xlu0 %v1831, 96
    %v1835 = vpop.permute.xlu0 %1834
    %v1837 = vmul.f32 %v1832, %v1835
    %v1838 = vmul.f32 %v1819, %v1734
    %v1839 = vadd.f32 %v1837, %v1838
    %1841 = vrot.lane.b32.xlu0 %v1839, 96
    %v1842 = vpop.permute.xlu0 %1841
    %1844 = vst.msk [vmem:[%s1318 + $0x10] sm:$0xff] %vm359, %v1842
    %v1845 = vld [vmem:[#allocation3 + $0x18] sm:$0xff]
    %v1846 = vsel %vm359, %v1842, 0
    %1848 = vmatprep.subr.mxu0 0.0
    %1849 = vmatpush1.msra.mxu0 %v352
    %1850 = vmatprep.subr.mxu0 0.0
    %1851 = vmatpush1.msra.mxu0 %v353
    %1852 = vmatprep.subr.mxu0 0.0
    %1853 = vmatpush1.msra.mxu0 %v354
    %1854 = vmatprep.subr.mxu0 0.0
    %1855 = vmatpush1.msra.mxu0 %v355
    %1856 = vmatprep.subr.mxu0 0.0
    %1857 = vmatpush1.msra.mxu0 0.0
    %1858 = vmatprep.subr.mxu0 0.0
    %1859 = vmatpush1.msra.mxu0 0.0
    %1860 = vmatprep.subr.mxu0 0.0
    %1861 = vmatpush1.msra.mxu0 0.0
    %1862 = vmatprep.subr.mxu0 0.0
    %1863 = vmatpush1.msra.mxu0 0.0
    %1864 = vmatprep.subr.mxu0 0.0
    %1865 = vmatpush1.msra.mxu0 0.0
    %1866 = vmatprep.subr.mxu0 0.0
    %1867 = vmatpush1.msra.mxu0 0.0
    %1868 = vmatprep.subr.mxu0 0.0
    %1869 = vmatpush1.msra.mxu0 0.0
    %1870 = vmatprep.subr.mxu0 0.0
    %1871 = vmatpush1.msra.mxu0 0.0
    %1872 = vmatprep.subr.mxu0 0.0
    %1873 = vmatpush1.msra.mxu0 0.0
    %1874 = vmatprep.subr.mxu0 0.0
    %1875 = vmatpush1.msra.mxu0 0.0
    %1876 = vmatprep.subr.mxu0 0.0
    %1877 = vmatpush1.msra.mxu0 0.0
    %1878 = vmatprep.subr.mxu0 0.0
    %1879 = vmatpush1.msra.mxu0 0.0
    %1880 = vmatprep.subr.mxu0 0.0
    %1881 = vmatpush1.msra.mxu0 0.0
    %1882 = vmatprep.subr.mxu0 0.0
    %1883 = vmatpush1.msra.mxu0 0.0
    %1884 = vmatprep.subr.mxu0 0.0
    %1885 = vmatpush1.msra.mxu0 0.0
    %1886 = vmatprep.subr.mxu0 0.0
    %1887 = vmatpush1.msra.mxu0 0.0
    %1888 = vmatprep.subr.mxu0 0.0
    %1889 = vmatpush1.msra.mxu0 0.0
    %1890 = vmatprep.subr.mxu0 0.0
    %1891 = vmatpush1.msra.mxu0 0.0
    %1892 = vmatprep.subr.mxu0 0.0
    %1893 = vmatpush1.msra.mxu0 0.0
    %1894 = vmatprep.subr.mxu0 0.0
    %1895 = vmatpush1.msra.mxu0 0.0
    %1896 = vmatprep.subr.mxu0 0.0
    %1897 = vmatpush1.msra.mxu0 0.0
    %1898 = vmatprep.subr.mxu0 0.0
    %1899 = vmatpush1.msra.mxu0 0.0
    %1900 = vmatprep.subr.mxu0 0.0
    %1901 = vmatpush1.msra.mxu0 0.0
    %1902 = vmatprep.subr.mxu0 0.0
    %1903 = vmatpush1.msra.mxu0 0.0
    %1904 = vmatprep.subr.mxu0 0.0
    %1905 = vmatpush1.msra.mxu0 0.0
    %1906 = vmatprep.subr.mxu0 0.0
    %1907 = vmatpush1.msra.mxu0 0.0
    %1908 = vmatprep.subr.mxu0 0.0
    %1909 = vmatpush1.msra.mxu0 0.0
    %1910 = vmatprep.subr.mxu0 0.0
    %1911 = vmatpush1.msra.mxu0 0.0
    %1912 = vmatprep.mubr.f32.mxu0 0.0
    %1913 = vmatmul.mubr.f32.gmra.mrb[0].mxu0 %v1846
    %v1914 = vpop.f32.mrb[0].mxu0
    %v1915 = vadd.f32 0.0, %v1914
    %v1916 = vpop.f32.mrb[0].mxu0
    %1917 = vdwg.mxu0
    %v1918 = vadd.f32 %v1845, %v1915
    %v1919 = vxor.u32 %v1918, 2147483648
    %v1920 = vmul.f32 %v1919, 1.442695
    %v1921 = vpow.pop %v1920
    %v1922 = vadd.f32 %v1921, 1.0
    %v1923 = vrcp.pop %v1922
    %v1924 = vmul.f32 1.0, %v1923
    %v1925 = vadd.f32 %v1915, %v1292
    %1927 = vrot.lane.b32.xlu0 %v1925, 64
    %v1928 = vpop.permute.xlu0 %1927
    %v1930 = vmul.f32 %v1924, %v1928
    %1932 = vrot.lane.b32.xlu0 %v1930, 64
    %v1933 = vpop.permute.xlu0 %1932
    %v1935 = vadd.f32 %v1845, %v1933
    %v1936 = vtanh.pop %v1935
    %v1937 = vsub.f32 1.0, %v1924
    %1939 = vrot.lane.b32.xlu0 %v1936, 96
    %v1940 = vpop.permute.xlu0 %1939
    %v1942 = vmul.f32 %v1937, %v1940
    %v1943 = vmul.f32 %v1924, %v1839
    %v1944 = vadd.f32 %v1942, %v1943
    %1946 = vrot.lane.b32.xlu0 %v1944, 96
    %v1947 = vpop.permute.xlu0 %1946
    %1949 = vst.msk [vmem:[%s1318 + $0x8] sm:$0xff] %vm359, %v1947
    %v1950 = vld [vmem:[#allocation3 + $0x8] sm:$0xff]
    %v1951 = vsel %vm359, %v1947, 0
    %1953 = vmatprep.subr.mxu0 0.0
    %1954 = vmatpush1.msra.mxu0 %v352
    %1955 = vmatprep.subr.mxu0 0.0
    %1956 = vmatpush1.msra.mxu0 %v353
    %1957 = vmatprep.subr.mxu0 0.0
    %1958 = vmatpush1.msra.mxu0 %v354
    %1959 = vmatprep.subr.mxu0 0.0
    %1960 = vmatpush1.msra.mxu0 %v355
    %1961 = vmatprep.subr.mxu0 0.0
    %1962 = vmatpush1.msra.mxu0 0.0
    %1963 = vmatprep.subr.mxu0 0.0
    %1964 = vmatpush1.msra.mxu0 0.0
    %1965 = vmatprep.subr.mxu0 0.0
    %1966 = vmatpush1.msra.mxu0 0.0
    %1967 = vmatprep.subr.mxu0 0.0
    %1968 = vmatpush1.msra.mxu0 0.0
    %1969 = vmatprep.subr.mxu0 0.0
    %1970 = vmatpush1.msra.mxu0 0.0
    %1971 = vmatprep.subr.mxu0 0.0
    %1972 = vmatpush1.msra.mxu0 0.0
    %1973 = vmatprep.subr.mxu0 0.0
    %1974 = vmatpush1.msra.mxu0 0.0
    %1975 = vmatprep.subr.mxu0 0.0
    %1976 = vmatpush1.msra.mxu0 0.0
    %1977 = vmatprep.subr.mxu0 0.0
    %1978 = vmatpush1.msra.mxu0 0.0
    %1979 = vmatprep.subr.mxu0 0.0
    %1980 = vmatpush1.msra.mxu0 0.0
    %1981 = vmatprep.subr.mxu0 0.0
    %1982 = vmatpush1.msra.mxu0 0.0
    %1983 = vmatprep.subr.mxu0 0.0
    %1984 = vmatpush1.msra.mxu0 0.0
    %1985 = vmatprep.subr.mxu0 0.0
    %1986 = vmatpush1.msra.mxu0 0.0
    %1987 = vmatprep.subr.mxu0 0.0
    %1988 = vmatpush1.msra.mxu0 0.0
    %1989 = vmatprep.subr.mxu0 0.0
    %1990 = vmatpush1.msra.mxu0 0.0
    %1991 = vmatprep.subr.mxu0 0.0
    %1992 = vmatpush1.msra.mxu0 0.0
    %1993 = vmatprep.subr.mxu0 0.0
    %1994 = vmatpush1.msra.mxu0 0.0
    %1995 = vmatprep.subr.mxu0 0.0
    %1996 = vmatpush1.msra.mxu0 0.0
    %1997 = vmatprep.subr.mxu0 0.0
    %1998 = vmatpush1.msra.mxu0 0.0
    %1999 = vmatprep.subr.mxu0 0.0
    %2000 = vmatpush1.msra.mxu0 0.0
    %2001 = vmatprep.subr.mxu0 0.0
    %2002 = vmatpush1.msra.mxu0 0.0
    %2003 = vmatprep.subr.mxu0 0.0
    %2004 = vmatpush1.msra.mxu0 0.0
    %2005 = vmatprep.subr.mxu0 0.0
    %2006 = vmatpush1.msra.mxu0 0.0
    %2007 = vmatprep.subr.mxu0 0.0
    %2008 = vmatpush1.msra.mxu0 0.0
    %2009 = vmatprep.subr.mxu0 0.0
    %2010 = vmatpush1.msra.mxu0 0.0
    %2011 = vmatprep.subr.mxu0 0.0
    %2012 = vmatpush1.msra.mxu0 0.0
    %2013 = vmatprep.subr.mxu0 0.0
    %2014 = vmatpush1.msra.mxu0 0.0
    %2015 = vmatprep.subr.mxu0 0.0
    %2016 = vmatpush1.msra.mxu0 0.0
    %2017 = vmatprep.mubr.f32.mxu0 0.0
    %2018 = vmatmul.mubr.f32.gmra.mrb[0].mxu0 %v1951
    %v2019 = vpop.f32.mrb[0].mxu0
    %v2020 = vadd.f32 0.0, %v2019
    %v2021 = vpop.f32.mrb[0].mxu0
    %2022 = vdwg.mxu0
    %v2023 = vadd.f32 %v1950, %v2020
    %v2024 = vxor.u32 %v2023, 2147483648
    %v2025 = vmul.f32 %v2024, 1.442695
    %v2026 = vpow.pop %v2025
    %v2027 = vadd.f32 %v2026, 1.0
    %v2028 = vrcp.pop %v2027
    %v2029 = vmul.f32 1.0, %v2028
    %v2030 = vadd.f32 %v2020, %v1292
    %2032 = vrot.lane.b32.xlu0 %v2030, 64
    %v2033 = vpop.permute.xlu0 %2032
    %v2035 = vmul.f32 %v2029, %v2033
    %2037 = vrot.lane.b32.xlu0 %v2035, 64
    %v2038 = vpop.permute.xlu0 %2037
    %v2040 = vadd.f32 %v1950, %v2038
    %v2041 = vtanh.pop %v2040
    %v2042 = vsub.f32 1.0, %v2029
    %2044 = vrot.lane.b32.xlu0 %v2041, 96
    %v2045 = vpop.permute.xlu0 %2044
    %v2047 = vmul.f32 %v2042, %v2045
    %v2048 = vmul.f32 %v2029, %v1944
    %v2049 = vadd.f32 %v2047, %v2048
    %2051 = vrot.lane.b32.xlu0 %v2049, 96
    %v2052 = vpop.permute.xlu0 %2051
    %2054 = vst.msk [vmem:[%s1318] sm:$0xff] %vm359, %v2052
    %v2055 = vld [vmem:[#allocation4] sm:$0xff]
    %v2056 = vld [vmem:[#allocation4 + $0x8] sm:$0xff]
    %v2057 = vld [vmem:[#allocation4 + $0x10] sm:$0xff]
    %v2058 = vld [vmem:[#allocation4 + $0x18] sm:$0xff]
    %v2059 = vld [vmem:[#allocation4 + $0x20] sm:$0xff]
    %v2060 = vld [vmem:[#allocation4 + $0x28] sm:$0xff]
    %v2061 = vld [vmem:[#allocation4 + $0x30] sm:$0xff]
    %v2062 = vld [vmem:[#allocation4 + $0x38] sm:$0xff]
    %v2063 = vld [vmem:[%s1318] sm:$0xff]
    %v2064 = vld [vmem:[%s1318 + $0x8] sm:$0xff]
    %v2065 = vld [vmem:[%s1318 + $0x10] sm:$0xff]
    %v2066 = vld [vmem:[%s1318 + $0x18] sm:$0xff]
    %v2067 = vld [vmem:[%s1318 + $0x20] sm:$0xff]
    %v2068 = vld [vmem:[%s1318 + $0x28] sm:$0xff]
    %v2069 = vld [vmem:[%s1318 + $0x30] sm:$0xff]
    %v2070 = vld [vmem:[%s1318 + $0x38] sm:$0xff]
    %v2071 = vtanh.pop %v2055
    %v2072 = vtanh.pop %v2056
    %v2073 = vtanh.pop %v2057
    %v2074 = vtanh.pop %v2058
    %v2075 = vtanh.pop %v2059
    %v2076 = vtanh.pop %v2060
    %v2077 = vtanh.pop %v2061
    %v2078 = vtanh.pop %v2062
    %v2079 = vld [vmem:[%s8] sm:$0x1]
    %v2081 = vlaneseq
    %v2082 = vshrl.u32 %v2081, 7
    %v2083 = vsub.s32 0, %v2082
    %v2084 = vrot.slane %v2079, %v2083
    %v2086 = vmul.f32 %v2071, %v2084
    %v2087 = vmul.f32 %v2072, %v2084
    %v2088 = vmul.f32 %v2073, %v2084
    %v2089 = vmul.f32 %v2074, %v2084
    %v2090 = vmul.f32 %v2075, %v2084
    %v2091 = vmul.f32 %v2076, %v2084
    %v2092 = vmul.f32 %v2077, %v2084
    %v2093 = vmul.f32 %v2078, %v2084
    %v2094 = vsel %vm359, %v2086, 0.0
    %2095 = vadd.xlane.f32.xlu0 %v2094
    %v2096 = vpop.xlane.xlu0 %2095
    %v2097 = vsel %vm359, %v2087, 0.0
    %2098 = vadd.xlane.f32.xlu0 %v2097
    %v2099 = vpop.xlane.xlu0 %2098
    %v2100 = vsel %vm359, %v2088, 0.0
    %2101 = vadd.xlane.f32.xlu0 %v2100
    %v2102 = vpop.xlane.xlu0 %2101
    %v2103 = vsel %vm359, %v2089, 0.0
    %2104 = vadd.xlane.f32.xlu0 %v2103
    %v2105 = vpop.xlane.xlu0 %2104
    %v2106 = vsel %vm359, %v2090, 0.0
    %2107 = vadd.xlane.f32.xlu0 %v2106
    %v2108 = vpop.xlane.xlu0 %2107
    %v2109 = vsel %vm359, %v2091, 0.0
    %2110 = vadd.xlane.f32.xlu0 %v2109
    %v2111 = vpop.xlane.xlu0 %2110
    %v2112 = vsel %vm359, %v2092, 0.0
    %2113 = vadd.xlane.f32.xlu0 %v2112
    %v2114 = vpop.xlane.xlu0 %2113
    %v2115 = vsel %vm359, %v2093, 0.0
    %2116 = vadd.xlane.f32.xlu0 %v2115
    %v2117 = vpop.xlane.xlu0 %2116
    %v2118 = vtanh.pop %v2063
    %v2119 = vtanh.pop %v2064
    %v2120 = vtanh.pop %v2065
    %v2121 = vtanh.pop %v2066
    %v2122 = vtanh.pop %v2067
    %v2123 = vtanh.pop %v2068
    %v2124 = vtanh.pop %v2069
    %v2125 = vtanh.pop %v2070
    %v2126 = vld [vmem:[%s9] sm:$0x1]
    %v2128 = vlaneseq
    %v2129 = vshrl.u32 %v2128, 7
    %v2130 = vsub.s32 0, %v2129
    %v2131 = vrot.slane %v2126, %v2130
    %v2133 = vmul.f32 %v2118, %v2131
    %v2134 = vmul.f32 %v2119, %v2131
    %v2135 = vmul.f32 %v2120, %v2131
    %v2136 = vmul.f32 %v2121, %v2131
    %v2137 = vmul.f32 %v2122, %v2131
    %v2138 = vmul.f32 %v2123, %v2131
    %v2139 = vmul.f32 %v2124, %v2131
    %v2140 = vmul.f32 %v2125, %v2131
    %v2141 = vsel %vm359, %v2133, 0.0
    %2142 = vadd.xlane.f32.xlu0 %v2141
    %v2143 = vpop.xlane.xlu0 %2142
    %v2144 = vsel %vm359, %v2134, 0.0
    %2145 = vadd.xlane.f32.xlu0 %v2144
    %v2146 = vpop.xlane.xlu0 %2145
    %v2147 = vsel %vm359, %v2135, 0.0
    %2148 = vadd.xlane.f32.xlu0 %v2147
    %v2149 = vpop.xlane.xlu0 %2148
    %v2150 = vsel %vm359, %v2136, 0.0
    %2151 = vadd.xlane.f32.xlu0 %v2150
    %v2152 = vpop.xlane.xlu0 %2151
    %v2153 = vsel %vm359, %v2137, 0.0
    %2154 = vadd.xlane.f32.xlu0 %v2153
    %v2155 = vpop.xlane.xlu0 %2154
    %v2156 = vsel %vm359, %v2138, 0.0
    %2157 = vadd.xlane.f32.xlu0 %v2156
    %v2158 = vpop.xlane.xlu0 %2157
    %v2159 = vsel %vm359, %v2139, 0.0
    %2160 = vadd.xlane.f32.xlu0 %v2159
    %v2161 = vpop.xlane.xlu0 %2160
    %v2162 = vsel %vm359, %v2140, 0.0
    %2163 = vadd.xlane.f32.xlu0 %v2162
    %v2164 = vpop.xlane.xlu0 %2163
    %v2165 = vadd.f32 %v2096, %v2143
    %v2166 = vadd.f32 %v2099, %v2146
    %v2167 = vadd.f32 %v2102, %v2149
    %v2168 = vadd.f32 %v2105, %v2152
    %v2169 = vadd.f32 %v2108, %v2155
    %v2170 = vadd.f32 %v2111, %v2158
    %v2171 = vadd.f32 %v2114, %v2161
    %v2172 = vadd.f32 %v2117, %v2164
    %v2173 = vmax.f32 %v2165, %v2169
    %v2174 = vmax.f32 %v2166, %v2170
    %v2175 = vmax.f32 %v2167, %v2171
    %v2176 = vmax.f32 %v2168, %v2172
    %v2177 = vmax.f32 %v2173, %v2174
    %v2178 = vmax.f32 %v2175, %v2176
    %v2179 = vmax.f32 %v2177, %v2178
    %v2180 = vsub.f32 %v2165, %v2179
    %v2181 = vsub.f32 %v2166, %v2179
    %v2182 = vsub.f32 %v2167, %v2179
    %v2183 = vsub.f32 %v2168, %v2179
    %v2184 = vsub.f32 %v2169, %v2179
    %v2185 = vsub.f32 %v2170, %v2179
    %v2186 = vsub.f32 %v2171, %v2179
    %v2187 = vsub.f32 %v2172, %v2179
    %v2188 = vmul.f32 %v2180, 1.442695
    %v2189 = vpow.pop %v2188
    %v2190 = vmul.f32 %v2181, 1.442695
    %v2191 = vpow.pop %v2190
    %v2192 = vmul.f32 %v2182, 1.442695
    %v2193 = vpow.pop %v2192
    %v2194 = vmul.f32 %v2183, 1.442695
    %v2195 = vpow.pop %v2194
    %v2196 = vmul.f32 %v2184, 1.442695
    %v2197 = vpow.pop %v2196
    %v2198 = vmul.f32 %v2185, 1.442695
    %v2199 = vpow.pop %v2198
    %v2200 = vmul.f32 %v2186, 1.442695
    %v2201 = vpow.pop %v2200
    %v2202 = vmul.f32 %v2187, 1.442695
    %v2203 = vpow.pop %v2202
    %v2204 = vadd.f32 %v2189, %v2191
    %v2205 = vadd.f32 %v2204, %v2193
    %v2206 = vadd.f32 %v2205, %v2195
    %v2207 = vadd.f32 %v2206, %v2197
    %v2208 = vadd.f32 %v2207, %v2199
    %v2209 = vadd.f32 %v2208, %v2201
    %v2210 = vadd.f32 %v2209, %v2203
    %v2211 = vrcp.pop %v2210
    %v2212 = vmul.f32 %v2189, %v2211
    %v2213 = vmul.f32 %v2191, %v2211
    %v2214 = vmul.f32 %v2193, %v2211
    %v2215 = vmul.f32 %v2195, %v2211
    %v2216 = vmul.f32 %v2197, %v2211
    %v2217 = vmul.f32 %v2199, %v2211
    %v2218 = vmul.f32 %v2201, %v2211
    %v2219 = vmul.f32 %v2203, %v2211
    %v2220 = vld [vmem:[#allocation2] sm:$0xff]
    %v2221 = vld [vmem:[#allocation2 + $0x8] sm:$0xff]
    %v2222 = vld [vmem:[#allocation2 + $0x10] sm:$0xff]
    %v2223 = vld [vmem:[#allocation2 + $0x18] sm:$0xff]
    %v2224 = vld [vmem:[#allocation2 + $0x20] sm:$0xff]
    %v2225 = vld [vmem:[#allocation2 + $0x28] sm:$0xff]
    %v2226 = vld [vmem:[#allocation2 + $0x30] sm:$0xff]
    %v2227 = vld [vmem:[#allocation2 + $0x38] sm:$0xff]
    %v2228 = vmax.f32 %v2220, 0.0
    %v2229 = vmax.f32 %v2221, 0.0
    %v2230 = vmax.f32 %v2222, 0.0
    %v2231 = vmax.f32 %v2223, 0.0
    %v2232 = vmax.f32 %v2224, 0.0
    %v2233 = vmax.f32 %v2225, 0.0
    %v2234 = vmax.f32 %v2226, 0.0
    %v2235 = vmax.f32 %v2227, 0.0
    %v2236 = vmax.f32 %v2228, %v2232
    %v2237 = vmax.f32 %v2229, %v2233
    %v2238 = vmax.f32 %v2230, %v2234
    %v2239 = vmax.f32 %v2231, %v2235
    %v2240 = vmax.f32 %v2236, %v2237
    %v2241 = vmax.f32 %v2238, %v2239
    %v2242 = vmax.f32 %v2240, %v2241
    %v2243 = vmul.f32 %v2055, %v2212
    %v2244 = vmul.f32 %v2056, %v2213
    %v2245 = vmul.f32 %v2057, %v2214
    %v2246 = vmul.f32 %v2058, %v2215
    %v2247 = vmul.f32 %v2059, %v2216
    %v2248 = vmul.f32 %v2060, %v2217
    %v2249 = vmul.f32 %v2061, %v2218
    %v2250 = vmul.f32 %v2062, %v2219
    %v2251 = vmax.f32 %v2243, 0.0
    %v2252 = vmax.f32 %v2244, 0.0
    %v2253 = vmax.f32 %v2245, 0.0
    %v2254 = vmax.f32 %v2246, 0.0
    %v2255 = vmax.f32 %v2247, 0.0
    %v2256 = vmax.f32 %v2248, 0.0
    %v2257 = vmax.f32 %v2249, 0.0
    %v2258 = vmax.f32 %v2250, 0.0
    %v2259 = vsel %vm359, %v2251, -inf
    %v2260 = vsel %vm359, %v2252, -inf
    %v2261 = vsel %vm359, %v2253, -inf
    %v2262 = vsel %vm359, %v2254, -inf
    %v2263 = vsel %vm359, %v2255, -inf
    %v2264 = vmax.f32 %v2259, %v2263
    %v2265 = vsel %vm359, %v2256, -inf
    %v2266 = vmax.f32 %v2260, %v2265
    %v2267 = vsel %vm359, %v2257, -inf
    %v2268 = vmax.f32 %v2261, %v2267
    %v2269 = vsel %vm359, %v2258, -inf
    %v2270 = vmax.f32 %v2262, %v2269
    %v2271 = vmax.f32 %v2264, %v2266
    %v2272 = vmax.f32 %v2268, %v2270
    %v2273 = vmax.f32 %v2271, %v2272
    %v2274 = vmul.f32 %v2063, %v2212
    %v2275 = vmul.f32 %v2064, %v2213
    %v2276 = vmul.f32 %v2065, %v2214
    %v2277 = vmul.f32 %v2066, %v2215
    %v2278 = vmul.f32 %v2067, %v2216
    %v2279 = vmul.f32 %v2068, %v2217
    %v2280 = vmul.f32 %v2069, %v2218
    %v2281 = vmul.f32 %v2070, %v2219
    %v2282 = vmax.f32 %v2274, 0.0
    %v2283 = vmax.f32 %v2275, 0.0
    %v2284 = vmax.f32 %v2276, 0.0
    %v2285 = vmax.f32 %v2277, 0.0
    %v2286 = vmax.f32 %v2278, 0.0
    %v2287 = vmax.f32 %v2279, 0.0
    %v2288 = vmax.f32 %v2280, 0.0
    %v2289 = vmax.f32 %v2281, 0.0
    %v2290 = vsel %vm359, %v2282, -inf
    %v2291 = vsel %vm359, %v2283, -inf
    %v2292 = vsel %vm359, %v2284, -inf
    %v2293 = vsel %vm359, %v2285, -inf
    %v2294 = vsel %vm359, %v2286, -inf
    %v2295 = vmax.f32 %v2290, %v2294
    %v2296 = vsel %vm359, %v2287, -inf
    %v2297 = vmax.f32 %v2291, %v2296
    %v2298 = vsel %vm359, %v2288, -inf
    %v2299 = vmax.f32 %v2292, %v2298
    %v2300 = vsel %vm359, %v2289, -inf
    %v2301 = vmax.f32 %v2293, %v2300
    %v2302 = vmax.f32 %v2295, %v2297
    %v2303 = vmax.f32 %v2299, %v2301
    %v2304 = vmax.f32 %v2302, %v2303
    %2306 = vrot.lane.b32.xlu0 %v2304, 32
    %v2307 = vpop.permute.xlu0 %2306
    %v2309 = vsel %vm359, %v2273, %v2307
    %v2310 = vld [vmem:[%s10] sm:$0xff]
    %v2311 = vld [vmem:[%s10 + $0x8] sm:$0xff]
    %v2312 = vld [vmem:[%s10 + $0x10] sm:$0xff]
    %v2313 = vld [vmem:[%s10 + $0x18] sm:$0xff]
    %v2314 = vld [vmem:[%s10 + $0x20] sm:$0xff]
    %v2315 = vld [vmem:[%s10 + $0x28] sm:$0xff]
    %v2316 = vld [vmem:[%s10 + $0x30] sm:$0xff]
    %v2317 = vld [vmem:[%s10 + $0x38] sm:$0xff]
    %v2318 = vld [vmem:[%s10 + $0x40] sm:$0xff]
    %v2319 = vld [vmem:[%s10 + $0x48] sm:$0xff]
    %v2320 = vld [vmem:[%s10 + $0x50] sm:$0xff]
    %v2321 = vld [vmem:[%s10 + $0x58] sm:$0xff]
    %v2322 = vld [vmem:[%s10 + $0x60] sm:$0xff]
    %v2323 = vld [vmem:[%s10 + $0x68] sm:$0xff]
    %v2324 = vld [vmem:[%s10 + $0x70] sm:$0xff]
    %v2325 = vld [vmem:[%s10 + $0x78] sm:$0xff]
    %v2326 = vld [vmem:[%s10 + $0x80] sm:$0xff]
    %v2327 = vld [vmem:[%s10 + $0x88] sm:$0xff]
    %v2328 = vld [vmem:[%s10 + $0x90] sm:$0xff]
    %v2329 = vld [vmem:[%s10 + $0x98] sm:$0xff]
    %v2330 = vld [vmem:[%s10 + $0xa0] sm:$0xff]
    %v2331 = vld [vmem:[%s10 + $0xa8] sm:$0xff]
    %v2332 = vld [vmem:[%s10 + $0xb0] sm:$0xff]
    %v2333 = vld [vmem:[%s10 + $0xb8] sm:$0xff]
    %v2334 = vld [vmem:[#allocation8] sm:$0x1]
    %v2336 = vlaneseq
    %v2337 = vshrl.u32 %v2336, 7
    %v2338 = vsub.s32 0, %v2337
    %v2339 = vrot.slane %v2334, %v2338
    %vm2341 = vcmask 523264
    %v2343 = vsel %vm2341, %v2309, 0
    %2345 = vmatprep.subr.mxu0 0.0
    %2346 = vmatpush1.msra.mxu0 %v2310
    %2347 = vmatprep.subr.mxu0 0.0
    %2348 = vmatpush1.msra.mxu0 %v2311
    %2349 = vmatprep.subr.mxu0 0.0
    %2350 = vmatpush1.msra.mxu0 %v2312
    %2351 = vmatprep.subr.mxu0 0.0
    %2352 = vmatpush1.msra.mxu0 %v2313
    %2353 = vmatprep.subr.mxu0 0.0
    %2354 = vmatpush1.msra.mxu0 %v2314
    %2355 = vmatprep.subr.mxu0 0.0
    %2356 = vmatpush1.msra.mxu0 %v2315
    %2357 = vmatprep.subr.mxu0 0.0
    %2358 = vmatpush1.msra.mxu0 %v2316
    %2359 = vmatprep.subr.mxu0 0.0
    %2360 = vmatpush1.msra.mxu0 %v2317
    %2361 = vmatprep.subr.mxu0 0.0
    %2362 = vmatpush1.msra.mxu0 %v2318
    %2363 = vmatprep.subr.mxu0 0.0
    %2364 = vmatpush1.msra.mxu0 %v2319
    %2365 = vmatprep.subr.mxu0 0.0
    %2366 = vmatpush1.msra.mxu0 %v2320
    %2367 = vmatprep.subr.mxu0 0.0
    %2368 = vmatpush1.msra.mxu0 %v2321
    %2369 = vmatprep.subr.mxu0 0.0
    %2370 = vmatpush1.msra.mxu0 %v2322
    %2371 = vmatprep.subr.mxu0 0.0
    %2372 = vmatpush1.msra.mxu0 %v2323
    %2373 = vmatprep.subr.mxu0 0.0
    %2374 = vmatpush1.msra.mxu0 %v2324
    %2375 = vmatprep.subr.mxu0 0.0
    %2376 = vmatpush1.msra.mxu0 %v2325
    %2377 = vmatprep.subr.mxu0 0.0
    %2378 = vmatpush1.msra.mxu0 %v2326
    %2379 = vmatprep.subr.mxu0 0.0
    %2380 = vmatpush1.msra.mxu0 %v2327
    %2381 = vmatprep.subr.mxu0 0.0
    %2382 = vmatpush1.msra.mxu0 %v2328
    %2383 = vmatprep.subr.mxu0 0.0
    %2384 = vmatpush1.msra.mxu0 %v2329
    %2385 = vmatprep.subr.mxu0 0.0
    %2386 = vmatpush1.msra.mxu0 %v2330
    %2387 = vmatprep.subr.mxu0 0.0
    %2388 = vmatpush1.msra.mxu0 %v2331
    %2389 = vmatprep.subr.mxu0 0.0
    %2390 = vmatpush1.msra.mxu0 %v2332
    %2391 = vmatprep.subr.mxu0 0.0
    %2392 = vmatpush1.msra.mxu0 %v2333
    %2393 = vmatprep.subr.mxu0 0.0
    %2394 = vmatpush1.msra.mxu0 0.0
    %2395 = vmatprep.subr.mxu0 0.0
    %2396 = vmatpush1.msra.mxu0 0.0
    %2397 = vmatprep.subr.mxu0 0.0
    %2398 = vmatpush1.msra.mxu0 0.0
    %2399 = vmatprep.subr.mxu0 0.0
    %2400 = vmatpush1.msra.mxu0 0.0
    %2401 = vmatprep.subr.mxu0 0.0
    %2402 = vmatpush1.msra.mxu0 0.0
    %2403 = vmatprep.subr.mxu0 0.0
    %2404 = vmatpush1.msra.mxu0 0.0
    %2405 = vmatprep.subr.mxu0 0.0
    %2406 = vmatpush1.msra.mxu0 0.0
    %2407 = vmatprep.subr.mxu0 0.0
    %2408 = vmatpush1.msra.mxu0 0.0
    %2409 = vmatprep.mubr.f32.mxu0 %v2343
    %2410 = vmatmul.mubr.f32.gmra.mrb[0].mxu0 %v2242
    %v2411 = vpop.f32.mrb[0].mxu0
    %v2412 = vadd.f32 %v2339, %v2411
    %v2413 = vpop.f32.mrb[0].mxu0
    %2414 = vdwg.mxu0
    %v2415 = vld [vmem:[%s12] sm:$0xff]
    %v2416 = vld [vmem:[%s12 + $0x8] sm:$0xff]
    %v2417 = vld [vmem:[%s12 + $0x10] sm:$0xff]
    %v2418 = vld [vmem:[%s12 + $0x18] sm:$0xff]
    %v2419 = vld [vmem:[%s12 + $0x20] sm:$0xff]
    %v2420 = vld [vmem:[%s12 + $0x28] sm:$0xff]
    %v2421 = vld [vmem:[%s12 + $0x30] sm:$0xff]
    %v2422 = vld [vmem:[%s12 + $0x38] sm:$0xff]
    %v2423 = vld [vmem:[#allocation10] sm:$0x1]
    %v2425 = vlaneseq
    %v2426 = vshrl.u32 %v2425, 7
    %v2427 = vsub.s32 0, %v2426
    %v2428 = vrot.slane %v2423, %v2427
    %v2431 = vsel %vm2341, %v2412, 0
    %2433 = vmatprep.subr.mxu0 0.0
    %2434 = vmatpush1.msra.mxu0 %v2415
    %2435 = vmatprep.subr.mxu0 0.0
    %2436 = vmatpush1.msra.mxu0 %v2416
    %2437 = vmatprep.subr.mxu0 0.0
    %2438 = vmatpush1.msra.mxu0 %v2417
    %2439 = vmatprep.subr.mxu0 0.0
    %2440 = vmatpush1.msra.mxu0 %v2418
    %2441 = vmatprep.subr.mxu0 0.0
    %2442 = vmatpush1.msra.mxu0 %v2419
    %2443 = vmatprep.subr.mxu0 0.0
    %2444 = vmatpush1.msra.mxu0 %v2420
    %2445 = vmatprep.subr.mxu0 0.0
    %2446 = vmatpush1.msra.mxu0 %v2421
    %2447 = vmatprep.subr.mxu0 0.0
    %2448 = vmatpush1.msra.mxu0 %v2422
    %2449 = vmatprep.subr.mxu0 0.0
    %2450 = vmatpush1.msra.mxu0 0.0
    %2451 = vmatprep.subr.mxu0 0.0
    %2452 = vmatpush1.msra.mxu0 0.0
    %2453 = vmatprep.subr.mxu0 0.0
    %2454 = vmatpush1.msra.mxu0 0.0
    %2455 = vmatprep.subr.mxu0 0.0
    %2456 = vmatpush1.msra.mxu0 0.0
    %2457 = vmatprep.subr.mxu0 0.0
    %2458 = vmatpush1.msra.mxu0 0.0
    %2459 = vmatprep.subr.mxu0 0.0
    %2460 = vmatpush1.msra.mxu0 0.0
    %2461 = vmatprep.subr.mxu0 0.0
    %2462 = vmatpush1.msra.mxu0 0.0
    %2463 = vmatprep.subr.mxu0 0.0
    %2464 = vmatpush1.msra.mxu0 0.0
    %2465 = vmatprep.subr.mxu0 0.0
    %2466 = vmatpush1.msra.mxu0 0.0
    %2467 = vmatprep.subr.mxu0 0.0
    %2468 = vmatpush1.msra.mxu0 0.0
    %2469 = vmatprep.subr.mxu0 0.0
    %2470 = vmatpush1.msra.mxu0 0.0
    %2471 = vmatprep.subr.mxu0 0.0
    %2472 = vmatpush1.msra.mxu0 0.0
    %2473 = vmatprep.subr.mxu0 0.0
    %2474 = vmatpush1.msra.mxu0 0.0
    %2475 = vmatprep.subr.mxu0 0.0
    %2476 = vmatpush1.msra.mxu0 0.0
    %2477 = vmatprep.subr.mxu0 0.0
    %2478 = vmatpush1.msra.mxu0 0.0
    %2479 = vmatprep.subr.mxu0 0.0
    %2480 = vmatpush1.msra.mxu0 0.0
    %2481 = vmatprep.subr.mxu0 0.0
    %2482 = vmatpush1.msra.mxu0 0.0
    %2483 = vmatprep.subr.mxu0 0.0
    %2484 = vmatpush1.msra.mxu0 0.0
    %2485 = vmatprep.subr.mxu0 0.0
    %2486 = vmatpush1.msra.mxu0 0.0
    %2487 = vmatprep.subr.mxu0 0.0
    %2488 = vmatpush1.msra.mxu0 0.0
    %2489 = vmatprep.subr.mxu0 0.0
    %2490 = vmatpush1.msra.mxu0 0.0
    %2491 = vmatprep.subr.mxu0 0.0
    %2492 = vmatpush1.msra.mxu0 0.0
    %2493 = vmatprep.subr.mxu0 0.0
    %2494 = vmatpush1.msra.mxu0 0.0
    %2495 = vmatprep.subr.mxu0 0.0
    %2496 = vmatpush1.msra.mxu0 0.0
    %2497 = vmatprep.mubr.f32.mxu0 0.0
    %2498 = vmatmul.mubr.f32.gmra.mrb[0].mxu0 %v2431
    %v2499 = vpop.f32.mrb[0].mxu0
    %v2500 = vadd.f32 %v2428, %v2499
    %v2501 = vpop.f32.mrb[0].mxu0
    %2502 = vdwg.mxu0
    %2503 = vst [vmem:[%s14] sm:$0xff] %v2500
    // Predicated region
    $region84: #{textrcnn_attn_forward.1} parent=1 // pred_check
      _
    $region85: #{textrcnn_attn_forward.1} parent=1 // pred_check_branch
      %2505 = sbr.rel (0) target = $region87
    $region86: #{textrcnn_attn_forward.1} parent=1 // pred_region
      _
    $region87: #{textrcnn_attn_forward.1} parent=1 // pred_fallthru
      _
    // Predicated region
    $region88: #{textrcnn_attn_forward.1} parent=1 // pred_check
      _
    $region89: #{textrcnn_attn_forward.1} parent=1 // pred_check_branch
      %2507 = sbr.rel (0) target = $region91
    $region90: #{textrcnn_attn_forward.1} parent=1 // pred_region
      _
    $region91: #{textrcnn_attn_forward.1} parent=1 // pred_fallthru
      _
    %2508 = vsyncpa [#allocation9], 1
    %2509 = vsyncpa [#allocation11], 1
  %2510 = vsyncmov [#allocation5]
  %s2511 = vpop.sfrf %2510
  %p2512 = scmp.eq.s32.totalorder %s2511, 0
  %p2513 = pneg %p2512
  %2515 = shalt.err (%p2513)
  %s2516 = scalar_lea.sflag [#allocation5], 1
  %2517 = vsyncmov %s2516
  %s2518 = vpop.sfrf %2517
  %p2519 = scmp.eq.s32.totalorder %s2518, 0
  %p2520 = pneg %p2519
  %2522 = shalt.err (%p2520)
  %s2523 = scalar_lea.sflag [#allocation5], 2
  %2524 = vsyncmov %s2523
  %s2525 = vpop.sfrf %2524
  %p2526 = scmp.eq.s32.totalorder %s2525, 0
  %p2527 = pneg %p2526
  %2529 = shalt.err (%p2527)
  %s2530 = scalar_lea.sflag [#allocation5], 3
  %2531 = vsyncmov %s2530
  %s2532 = vpop.sfrf %2531
  %p2533 = scmp.eq.s32.totalorder %s2532, 0
  %p2534 = pneg %p2533
  %2536 = shalt.err (%p2534)
  %s2537 = scalar_lea.sflag [#allocation5], 4
  %2538 = vsyncmov %s2537
  %s2539 = vpop.sfrf %2538
  %p2540 = scmp.eq.s32.totalorder %s2539, 0
  %p2541 = pneg %p2540
  %2543 = shalt.err (%p2541)
  %s2544 = scalar_lea.sflag [#allocation5], 5
  %2545 = vsyncmov %s2544
  %s2546 = vpop.sfrf %2545
  %p2547 = scmp.eq.s32.totalorder %s2546, 0
  %p2548 = pneg %p2547
  %2550 = shalt.err (%p2548)
  %s2551 = scalar_lea.sflag [#allocation5], 6
  %2552 = vsyncmov %s2551
  %s2553 = vpop.sfrf %2552
  %p2554 = scmp.eq.s32.totalorder %s2553, 0
  %p2555 = pneg %p2554
  %2557 = shalt.err (%p2555)
  %s2558 = scalar_lea.sflag [#allocation5], 7
  %2559 = vsyncmov %s2558
  %s2560 = vpop.sfrf %2559
  %p2561 = scmp.eq.s32.totalorder %s2560, 0
  %p2562 = pneg %p2561
  %2564 = shalt.err (%p2562)

</llo_original>
